<compile_context>
chip_gen: v5e
topology: v5e:2x2
jax: 0.10.0
libtpu: 0.0.40
codegen_flags: <defaults>
</compile_context>

<pallas_src>
import jax
import jax.numpy as jnp
from jax.experimental import pallas as pl
from jax.experimental.pallas import tpu as pltpu

_EPS = 1e-5                       # BatchNorm2d default eps
_MATMUL_DTYPE = jnp.bfloat16      # MXU operand dtype; accumulation stays f32


def _pick_vmem_limit():
    # Leave headroom below physical VMEM; re-derived per chip (v7x: 64 MiB
    # physical -> ~48 MiB budget; v5e/v6e: 128 MiB -> 96 MiB budget).
    try:
        cap = pltpu.get_tpu_info().vmem_capacity_bytes
    except Exception:
        cap = 64 * 1024 * 1024
    return int(min((cap * 3) // 4, 96 * 1024 * 1024))


_VMEM_LIMIT = _pick_vmem_limit()


def _vmem_spec():
    # Whole-array, single-buffered VMEM residency (no grid, no pipeline).
    return pl.BlockSpec(memory_space=pltpu.MemorySpace.VMEM)


# ----------------------------- Pallas kernels ------------------------------

def _conv_bn_relu_kernel(x_ref, w_ref, b_ref, g_ref, beta_ref, o_ref):
    """Fused Conv2d + BatchNorm2d (training-mode stats) + ReLU.

    x_ref:    (T*Cin, M)     im2col tap stack (bf16), M = N*Ho*Wo
    w_ref:    (Cout, T*Cin)  folded weights (bf16)
    b_ref, g_ref, beta_ref: (Cout, 1) f32
    o_ref:    (Cout, M) f32
    """
    acc = jnp.dot(w_ref[...], x_ref[...], preferred_element_type=jnp.float32)
    acc = acc + b_ref[...]
    # BatchNorm2d training mode: biased per-channel stats over all (N,H,W).
    mean = jnp.mean(acc, axis=1, keepdims=True)
    var = jnp.mean(jnp.square(acc - mean), axis=1, keepdims=True)
    scale = g_ref[...] * jax.lax.rsqrt(var + _EPS)
    shift = beta_ref[...] - mean * scale
    o_ref[...] = jnp.maximum(acc * scale + shift, 0.0)


def _conv_transpose_kernel(s_ref, w_ref, b_ref, o_ref):
    """ConvTranspose2d(3, stride=2, p=1, op=1) -- parity-decomposed, one dot.

    s_ref: (4*Cin, M)       the 4 un-dilated input shifts, stacked (bf16)
    w_ref: (4*Cout, 4*Cin)  block (parity p, shift s) = matching tap weight,
                            zero where that (p, s) pair has no tap (bf16)
    b_ref: (4*Cout, 1) f32
    o_ref: (4*Cout, M) f32, parity-major rows
    """
    o_ref[...] = (jnp.dot(w_ref[...], s_ref[...],
                          preferred_element_type=jnp.float32) + b_ref[...])


# ----------------------------- pallas_call glue -----------------------------

def _conv_bn_relu_call(taps_flat, w_flat, bias, gamma, beta):
    k, m = taps_flat.shape
    cout = w_flat.shape[0]
    cost = pl.CostEstimate(
        flops=2 * cout * k * m + 8 * cout * m,
        transcendentals=cout,
        bytes_accessed=(taps_flat.size * taps_flat.dtype.itemsize
                        + w_flat.size * w_flat.dtype.itemsize
                        + 3 * cout * 4 + cout * m * 4))
    return pl.pallas_call(
        _conv_bn_relu_kernel,
        out_shape=jax.ShapeDtypeStruct((cout, m), jnp.float32),
        in_specs=[_vmem_spec() for _ in range(5)],
        out_specs=_vmem_spec(),
        compiler_params=pltpu.CompilerParams(vmem_limit_bytes=_VMEM_LIMIT),
        cost_estimate=cost,
    )(taps_flat, w_flat, bias, gamma, beta)


def _conv_transpose_call(s_flat, w_big, b_big):
    k, m = s_flat.shape
    rows = w_big.shape[0]
    cost = pl.CostEstimate(
        flops=2 * rows * k * m,
        transcendentals=0,
        bytes_accessed=(s_flat.size * s_flat.dtype.itemsize
                        + w_big.size * w_big.dtype.itemsize
                        + rows * 4 + rows * m * 4))
    return pl.pallas_call(
        _conv_transpose_kernel,
        out_shape=jax.ShapeDtypeStruct((rows, m), jnp.float32),
        in_specs=[_vmem_spec() for _ in range(3)],
        out_specs=_vmem_spec(),
        compiler_params=pltpu.CompilerParams(vmem_limit_bytes=_VMEM_LIMIT),
        cost_estimate=cost,
    )(s_flat, w_big, b_big)


# ------------------------------- layer ops ----------------------------------

def _conv_bn_relu(x_cm, w, b, gamma, beta, pad):
    """x_cm: (Cin, N, H, W) f32; w: (Cout, Cin, kh, kw) exactly as torch."""
    cin, n, h, wdt = x_cm.shape
    cout, _, kh, kw = w.shape
    ho, wo = h + 2 * pad - kh + 1, wdt + 2 * pad - kw + 1
    m = n * ho * wo
    # TODO(synk): the kh*kw-replicated im2col tap stack is still materialized
    # by XLA (49x the input for the 7x7 conv1); realizing the kw shifts
    # in-kernel via lane slicing / pltpu.roll would cut that replication, but
    # shifted 4D->2D reshapes are not reliably lowerable by Mosaic today.
    xp = jnp.pad(x_cm.astype(_MATMUL_DTYPE),
                 ((0, 0), (0, 0), (pad, pad), (pad, pad)))
    taps = jnp.stack([xp[:, :, dy:dy + ho, dx:dx + wo]
                      for dy in range(kh) for dx in range(kw)], axis=0)
    taps_flat = taps.reshape(kh * kw * cin, m)                  # (T*Cin, M)
    # Fold taps into the contraction axis: w_flat[co, t*Cin + ci] = w[co,ci,dy,dx]
    w_flat = jnp.transpose(w, (0, 2, 3, 1)).reshape(cout, kh * kw * cin)
    out = _conv_bn_relu_call(taps_flat, w_flat.astype(_MATMUL_DTYPE),
                             b.reshape(cout, 1).astype(jnp.float32),
                             gamma.reshape(cout, 1).astype(jnp.float32),
                             beta.reshape(cout, 1).astype(jnp.float32))
    return out.reshape(cout, n, ho, wo)


# ConvTranspose2d(k=3, stride=2, padding=1, output_padding=1) parity
# decomposition.  Output pixel (2m+ry, 2n+rx) only receives kernel taps of
# matching parity.  Entries: (parity, shift, ky, kx) with parity p = 2*ry+rx,
# shift s = 2*a + b meaning un-dilated input x[m+a, n+b].
_CT_TAPS = (
    (0, 0, 1, 1),
    (1, 0, 1, 2), (1, 1, 1, 0),
    (2, 0, 2, 1), (2, 2, 0, 1),
    (3, 0, 2, 2), (3, 1, 2, 0), (3, 2, 0, 2), (3, 3, 0, 0),
)


def _conv_transpose(x_cm, w, b):
    """ConvTranspose2d(k=3, s=2, p=1, op=1); w: (Cin, Cout, 3, 3) torch layout."""
    cin, n, h, wdt = x_cm.shape
    cout = w.shape[1]
    m = n * h * wdt
    xp = jnp.pad(x_cm.astype(_MATMUL_DTYPE), ((0, 0), (0, 0), (0, 1), (0, 1)))
    shifts = jnp.stack([xp[:, :, a:a + h, c:c + wdt]
                        for (a, c) in ((0, 0), (0, 1), (1, 0), (1, 1))], axis=0)
    s_flat = shifts.reshape(4 * cin, m)                          # (4*Cin, M)
    # Block-structured weight: block (parity p, shift s) = w[:, :, ky, kx].T,
    # zero elsewhere, so all 4 parities come out of a single dot.
    w_big = jnp.zeros((4 * cout, 4 * cin), jnp.float32)
    for (p, s, ky, kx) in _CT_TAPS:
        w_big = w_big.at[p * cout:(p + 1) * cout,
                         s * cin:(s + 1) * cin].set(jnp.transpose(w[:, :, ky, kx]))
    b_big = jnp.tile(b.reshape(1, cout), (4, 1)).reshape(4 * cout, 1)
    out4 = _conv_transpose_call(s_flat, w_big.astype(_MATMUL_DTYPE),
                                b_big.astype(jnp.float32))
    # TODO(synk): the parity interleave is still a post-kernel XLA transpose;
    # in-kernel strided stores into the interleaved (Cout, N, 2H, 2W) layout
    # would save one full-tensor HBM round trip per expand block.
    out4 = out4.reshape(2, 2, cout, n, h, wdt)
    out = jnp.transpose(out4, (2, 3, 4, 0, 5, 1)).reshape(cout, n, 2 * h, 2 * wdt)
    return out


def _maxpool_3x3_s2_p1(x_cm):
    """MaxPool2d(kernel=3, stride=2, padding=1) as a plain-JAX maximum tree."""
    # TODO(synk): fuse into the preceding conv kernel's epilogue to avoid one
    # full-activation HBM round trip per contract block (needs in-kernel
    # strided spatial slicing, which is fragile under Mosaic today).
    c, n, h, w = x_cm.shape
    ho, wo = (h - 1) // 2 + 1, (w - 1) // 2 + 1
    xp = jnp.pad(x_cm, ((0, 0), (0, 0), (1, 1), (1, 1)),
                 constant_values=-jnp.inf)
    out = None
    for dy in range(3):
        for dx in range(3):
            tap = xp[:, :, dy:dy + 2 * ho:2, dx:dx + 2 * wo:2]
            out = tap if out is None else jnp.maximum(out, tap)
    return out


def _contract_block(x, p, pad):
    x = _conv_bn_relu(x, p["w1"], p["b1"], p["g1"], p["be1"], pad)
    x = _conv_bn_relu(x, p["w2"], p["b2"], p["g2"], p["be2"], pad)
    return _maxpool_3x3_s2_p1(x)


def _expand_block(x, p):
    x = _conv_bn_relu(x, p["w1"], p["b1"], p["g1"], p["be1"], 1)
    x = _conv_bn_relu(x, p["w2"], p["b2"], p["g2"], p["be2"], 1)
    return _conv_transpose(x, p["wt"], p["bt"])


def simple_conv_forward(params, x_nchw):
    # TODO(synk): for real image sizes, tile the M = N*H*W lane axis with a
    # grid (partial BN stats + second epilogue phase) so the conv passes
    # pipeline DMA/compute and shard across v7x's two TensorCores; at the toy
    # shapes used here every layer fits VMEM whole.
    x = jnp.transpose(x_nchw, (1, 0, 2, 3))                 # NCHW -> (C, N, H, W)
    c1 = _contract_block(x, params["conv1"], pad=3)
    c2 = _contract_block(c1, params["conv2"], pad=1)
    c3 = _contract_block(c2, params["conv3"], pad=1)
    u3 = _expand_block(c3, params["upconv3"])
    u2 = _expand_block(jnp.concatenate([u3, c2], axis=0), params["upconv2"])
    u1 = _expand_block(jnp.concatenate([u2, c1], axis=0), params["upconv1"])
    return jnp.transpose(u1, (1, 0, 2, 3))                  # (C, N, H, W) -> NCHW


# --------------------------- parameter init --------------------------------

def _init_conv(key, cout, cin, k):
    kw_, kb = jax.random.split(key)
    bound = 1.0 / (cin * k * k) ** 0.5
    w = jax.random.uniform(kw_, (cout, cin, k, k), jnp.float32, -bound, bound)
    b = jax.random.uniform(kb, (cout,), jnp.float32, -bound, bound)
    return w, b


def _init_convT(key, cin, cout, k):
    kw_, kb = jax.random.split(key)
    bound = 1.0 / (cout * k * k) ** 0.5
    w = jax.random.uniform(kw_, (cin, cout, k, k), jnp.float32, -bound, bound)
    b = jax.random.uniform(kb, (cout,), jnp.float32, -bound, bound)
    return w, b


def _init_contract(key, cin, cout, k):
    k1, k2 = jax.random.split(key)
    w1, b1 = _init_conv(k1, cout, cin, k)
    w2, b2 = _init_conv(k2, cout, cout, k)
    ones, zeros = jnp.ones((cout,), jnp.float32), jnp.zeros((cout,), jnp.float32)
    return dict(w1=w1, b1=b1, g1=ones, be1=zeros,
                w2=w2, b2=b2, g2=ones, be2=zeros)


def _init_expand(key, cin, cout, k):
    k1, k2, k3 = jax.random.split(key, 3)
    w1, b1 = _init_conv(k1, cout, cin, k)
    w2, b2 = _init_conv(k2, cout, cout, k)
    wt, bt = _init_convT(k3, cout, cout, 3)
    ones, zeros = jnp.ones((cout,), jnp.float32), jnp.zeros((cout,), jnp.float32)
    return dict(w1=w1, b1=b1, g1=ones, be1=zeros,
                w2=w2, b2=b2, g2=ones, be2=zeros, wt=wt, bt=bt)


if __name__ == "__main__":
    key = jax.random.PRNGKey(0)
    k_x, k1, k2, k3, k4, k5, k6 = jax.random.split(key, 7)
    in_channels, out_channels = 4, 3
    params = {
        "conv1":   _init_contract(k1, in_channels, 8, 7),
        "conv2":   _init_contract(k2, 8, 16, 3),
        "conv3":   _init_contract(k3, 16, 32, 3),
        "upconv3": _init_expand(k4, 32, 16, 3),
        "upconv2": _init_expand(k5, 16 * 2, 8, 3),
        "upconv1": _init_expand(k6, 8 * 2, out_channels, 3),
    }
    x = jax.random.normal(k_x, (2, in_channels, 16, 16), jnp.float32)
    out = jax.jit(simple_conv_forward)(params, x)
    jax.block_until_ready(out)
    assert out.shape == (2, out_channels, 16, 16), out.shape
    assert bool(jnp.all(jnp.isfinite(out)))
    print("KERNEL_OK")
</pallas_src>

<mosaic_0001>
module attributes {stable_mosaic.version = 11 : i64} {
  func.func @_conv_bn_relu_kernel(%arg0: memref<196x512xbf16, #tpu.memory_space<vmem>>, %arg1: memref<8x196xbf16, #tpu.memory_space<vmem>>, %arg2: memref<8x1xf32, #tpu.memory_space<vmem>>, %arg3: memref<8x1xf32, #tpu.memory_space<vmem>>, %arg4: memref<8x1xf32, #tpu.memory_space<vmem>>, %arg5: memref<8x512xf32, #tpu.memory_space<vmem>>) attributes {dimension_semantics = [], scalar_prefetch = 0 : i64, scratch_operands = 0 : i64, tpu.core_type = #tpu.core_type<tc>} {
    %c0 = arith.constant 0 : index
    %c0_0 = arith.constant 0 : index
    %0 = vector.load %arg1[%c0, %c0_0] : memref<8x196xbf16, #tpu.memory_space<vmem>>, vector<8x196xbf16>
    %c0_1 = arith.constant 0 : index
    %c0_2 = arith.constant 0 : index
    %1 = vector.load %arg0[%c0_1, %c0_2] : memref<196x512xbf16, #tpu.memory_space<vmem>>, vector<196x512xbf16>
    %cst = arith.constant dense<0.000000e+00> : vector<8x512xf32>
    %2 = tpu.matmul %0, %1, %cst {dimension_numbers = #tpu.dot_dimension_numbers<[1], [0], [0], [1], [0, 0, 1, 1], [], []>} : vector<8x196xbf16>, vector<196x512xbf16>, vector<8x512xf32> -> vector<8x512xf32>
    %c0_3 = arith.constant 0 : index
    %c0_4 = arith.constant 0 : index
    %3 = vector.load %arg2[%c0_3, %c0_4] : memref<8x1xf32, #tpu.memory_space<vmem>>, vector<8x1xf32>
    %4 = vector.broadcast %3 : vector<8x1xf32> to vector<8x512xf32>
    %5 = arith.addf %2, %4 : vector<8x512xf32>
    %cst_5 = arith.constant dense<0.000000e+00> : vector<8xf32>
    %6 = vector.multi_reduction <add>, %5, %cst_5 [1] : vector<8x512xf32> to vector<8xf32>
    %7 = vector.shape_cast %6 : vector<8xf32> to vector<8x1xf32>
    %cst_6 = arith.constant 5.120000e+02 : f32
    %8 = vector.broadcast %cst_6 : f32 to vector<8x1xf32>
    %9 = arith.divf %7, %8 : vector<8x1xf32>
    %10 = vector.broadcast %9 : vector<8x1xf32> to vector<8x512xf32>
    %11 = arith.subf %5, %10 : vector<8x512xf32>
    %12 = arith.mulf %11, %11 : vector<8x512xf32>
    %cst_7 = arith.constant dense<0.000000e+00> : vector<8xf32>
    %13 = vector.multi_reduction <add>, %12, %cst_7 [1] : vector<8x512xf32> to vector<8xf32>
    %14 = vector.shape_cast %13 : vector<8xf32> to vector<8x1xf32>
    %cst_8 = arith.constant 5.120000e+02 : f32
    %15 = vector.broadcast %cst_8 : f32 to vector<8x1xf32>
    %16 = arith.divf %14, %15 : vector<8x1xf32>
    %c0_9 = arith.constant 0 : index
    %c0_10 = arith.constant 0 : index
    %17 = vector.load %arg3[%c0_9, %c0_10] : memref<8x1xf32, #tpu.memory_space<vmem>>, vector<8x1xf32>
    %cst_11 = arith.constant 9.99999974E-6 : f32
    %18 = vector.broadcast %cst_11 : f32 to vector<8x1xf32>
    %19 = arith.addf %16, %18 : vector<8x1xf32>
    %20 = math.rsqrt %19 : vector<8x1xf32>
    %21 = arith.mulf %17, %20 : vector<8x1xf32>
    %c0_12 = arith.constant 0 : index
    %c0_13 = arith.constant 0 : index
    %22 = vector.load %arg4[%c0_12, %c0_13] : memref<8x1xf32, #tpu.memory_space<vmem>>, vector<8x1xf32>
    %23 = arith.mulf %9, %21 : vector<8x1xf32>
    %24 = arith.subf %22, %23 : vector<8x1xf32>
    %25 = vector.broadcast %21 : vector<8x1xf32> to vector<8x512xf32>
    %26 = arith.mulf %5, %25 : vector<8x512xf32>
    %27 = vector.broadcast %24 : vector<8x1xf32> to vector<8x512xf32>
    %28 = arith.addf %26, %27 : vector<8x512xf32>
    %cst_14 = arith.constant 0.000000e+00 : f32
    %29 = vector.broadcast %cst_14 : f32 to vector<8x512xf32>
    %30 = arith.maximumf %28, %29 : vector<8x512xf32>
    %c0_15 = arith.constant 0 : index
    %c0_16 = arith.constant 0 : index
    %31 = vector.load %arg5[%c0_15, %c0_16] : memref<8x512xf32, #tpu.memory_space<vmem>>, vector<8x512xf32>
    tpu.vector_store %arg5[%c0_15, %c0_16], %30 {strides = array<i32>} : memref<8x512xf32, #tpu.memory_space<vmem>>, vector<8x512xf32>,
    return
  }
}

module attributes {stable_mosaic.version = 11 : i64} {
  func.func @_conv_bn_relu_kernel(%arg0: memref<392x512xbf16, #tpu.memory_space<vmem>>, %arg1: memref<8x392xbf16, #tpu.memory_space<vmem>>, %arg2: memref<8x1xf32, #tpu.memory_space<vmem>>, %arg3: memref<8x1xf32, #tpu.memory_space<vmem>>, %arg4: memref<8x1xf32, #tpu.memory_space<vmem>>, %arg5: memref<8x512xf32, #tpu.memory_space<vmem>>) attributes {dimension_semantics = [], scalar_prefetch = 0 : i64, scratch_operands = 0 : i64, tpu.core_type = #tpu.core_type<tc>} {
    %c0 = arith.constant 0 : index
    %c0_0 = arith.constant 0 : index
    %0 = vector.load %arg1[%c0, %c0_0] : memref<8x392xbf16, #tpu.memory_space<vmem>>, vector<8x392xbf16>
    %c0_1 = arith.constant 0 : index
    %c0_2 = arith.constant 0 : index
    %1 = vector.load %arg0[%c0_1, %c0_2] : memref<392x512xbf16, #tpu.memory_space<vmem>>, vector<392x512xbf16>
    %cst = arith.constant dense<0.000000e+00> : vector<8x512xf32>
    %2 = tpu.matmul %0, %1, %cst {dimension_numbers = #tpu.dot_dimension_numbers<[1], [0], [0], [1], [0, 0, 1, 1], [], []>} : vector<8x392xbf16>, vector<392x512xbf16>, vector<8x512xf32> -> vector<8x512xf32>
    %c0_3 = arith.constant 0 : index
    %c0_4 = arith.constant 0 : index
    %3 = vector.load %arg2[%c0_3, %c0_4] : memref<8x1xf32, #tpu.memory_space<vmem>>, vector<8x1xf32>
    %4 = vector.broadcast %3 : vector<8x1xf32> to vector<8x512xf32>
    %5 = arith.addf %2, %4 : vector<8x512xf32>
    %cst_5 = arith.constant dense<0.000000e+00> : vector<8xf32>
    %6 = vector.multi_reduction <add>, %5, %cst_5 [1] : vector<8x512xf32> to vector<8xf32>
    %7 = vector.shape_cast %6 : vector<8xf32> to vector<8x1xf32>
    %cst_6 = arith.constant 5.120000e+02 : f32
    %8 = vector.broadcast %cst_6 : f32 to vector<8x1xf32>
    %9 = arith.divf %7, %8 : vector<8x1xf32>
    %10 = vector.broadcast %9 : vector<8x1xf32> to vector<8x512xf32>
    %11 = arith.subf %5, %10 : vector<8x512xf32>
    %12 = arith.mulf %11, %11 : vector<8x512xf32>
    %cst_7 = arith.constant dense<0.000000e+00> : vector<8xf32>
    %13 = vector.multi_reduction <add>, %12, %cst_7 [1] : vector<8x512xf32> to vector<8xf32>
    %14 = vector.shape_cast %13 : vector<8xf32> to vector<8x1xf32>
    %cst_8 = arith.constant 5.120000e+02 : f32
    %15 = vector.broadcast %cst_8 : f32 to vector<8x1xf32>
    %16 = arith.divf %14, %15 : vector<8x1xf32>
    %c0_9 = arith.constant 0 : index
    %c0_10 = arith.constant 0 : index
    %17 = vector.load %arg3[%c0_9, %c0_10] : memref<8x1xf32, #tpu.memory_space<vmem>>, vector<8x1xf32>
    %cst_11 = arith.constant 9.99999974E-6 : f32
    %18 = vector.broadcast %cst_11 : f32 to vector<8x1xf32>
    %19 = arith.addf %16, %18 : vector<8x1xf32>
    %20 = math.rsqrt %19 : vector<8x1xf32>
    %21 = arith.mulf %17, %20 : vector<8x1xf32>
    %c0_12 = arith.constant 0 : index
    %c0_13 = arith.constant 0 : index
    %22 = vector.load %arg4[%c0_12, %c0_13] : memref<8x1xf32, #tpu.memory_space<vmem>>, vector<8x1xf32>
    %23 = arith.mulf %9, %21 : vector<8x1xf32>
    %24 = arith.subf %22, %23 : vector<8x1xf32>
    %25 = vector.broadcast %21 : vector<8x1xf32> to vector<8x512xf32>
    %26 = arith.mulf %5, %25 : vector<8x512xf32>
    %27 = vector.broadcast %24 : vector<8x1xf32> to vector<8x512xf32>
    %28 = arith.addf %26, %27 : vector<8x512xf32>
    %cst_14 = arith.constant 0.000000e+00 : f32
    %29 = vector.broadcast %cst_14 : f32 to vector<8x512xf32>
    %30 = arith.maximumf %28, %29 : vector<8x512xf32>
    %c0_15 = arith.constant 0 : index
    %c0_16 = arith.constant 0 : index
    %31 = vector.load %arg5[%c0_15, %c0_16] : memref<8x512xf32, #tpu.memory_space<vmem>>, vector<8x512xf32>
    tpu.vector_store %arg5[%c0_15, %c0_16], %30 {strides = array<i32>} : memref<8x512xf32, #tpu.memory_space<vmem>>, vector<8x512xf32>,
    return
  }
}

module attributes {stable_mosaic.version = 11 : i64} {
  func.func @_conv_bn_relu_kernel(%arg0: memref<72x128xbf16, #tpu.memory_space<vmem>>, %arg1: memref<16x72xbf16, #tpu.memory_space<vmem>>, %arg2: memref<16x1xf32, #tpu.memory_space<vmem>>, %arg3: memref<16x1xf32, #tpu.memory_space<vmem>>, %arg4: memref<16x1xf32, #tpu.memory_space<vmem>>, %arg5: memref<16x128xf32, #tpu.memory_space<vmem>>) attributes {dimension_semantics = [], scalar_prefetch = 0 : i64, scratch_operands = 0 : i64, tpu.core_type = #tpu.core_type<tc>} {
    %c0 = arith.constant 0 : index
    %c0_0 = arith.constant 0 : index
    %0 = vector.load %arg1[%c0, %c0_0] : memref<16x72xbf16, #tpu.memory_space<vmem>>, vector<16x72xbf16>
    %c0_1 = arith.constant 0 : index
    %c0_2 = arith.constant 0 : index
    %1 = vector.load %arg0[%c0_1, %c0_2] : memref<72x128xbf16, #tpu.memory_space<vmem>>, vector<72x128xbf16>
    %cst = arith.constant dense<0.000000e+00> : vector<16x128xf32>
    %2 = tpu.matmul %0, %1, %cst {dimension_numbers = #tpu.dot_dimension_numbers<[1], [0], [0], [1], [0, 0, 1, 1], [], []>} : vector<16x72xbf16>, vector<72x128xbf16>, vector<16x128xf32> -> vector<16x128xf32>
    %c0_3 = arith.constant 0 : index
    %c0_4 = arith.constant 0 : index
    %3 = vector.load %arg2[%c0_3, %c0_4] : memref<16x1xf32, #tpu.memory_space<vmem>>, vector<16x1xf32>
    %4 = vector.broadcast %3 : vector<16x1xf32> to vector<16x128xf32>
    %5 = arith.addf %2, %4 : vector<16x128xf32>
    %cst_5 = arith.constant dense<0.000000e+00> : vector<16xf32>
    %6 = vector.multi_reduction <add>, %5, %cst_5 [1] : vector<16x128xf32> to vector<16xf32>
    %7 = vector.shape_cast %6 : vector<16xf32> to vector<16x1xf32>
    %cst_6 = arith.constant 1.280000e+02 : f32
    %8 = vector.broadcast %cst_6 : f32 to vector<16x1xf32>
    %9 = arith.divf %7, %8 : vector<16x1xf32>
    %10 = vector.broadcast %9 : vector<16x1xf32> to vector<16x128xf32>
    %11 = arith.subf %5, %10 : vector<16x128xf32>
    %12 = arith.mulf %11, %11 : vector<16x128xf32>
    %cst_7 = arith.constant dense<0.000000e+00> : vector<16xf32>
    %13 = vector.multi_reduction <add>, %12, %cst_7 [1] : vector<16x128xf32> to vector<16xf32>
    %14 = vector.shape_cast %13 : vector<16xf32> to vector<16x1xf32>
    %cst_8 = arith.constant 1.280000e+02 : f32
    %15 = vector.broadcast %cst_8 : f32 to vector<16x1xf32>
    %16 = arith.divf %14, %15 : vector<16x1xf32>
    %c0_9 = arith.constant 0 : index
    %c0_10 = arith.constant 0 : index
    %17 = vector.load %arg3[%c0_9, %c0_10] : memref<16x1xf32, #tpu.memory_space<vmem>>, vector<16x1xf32>
    %cst_11 = arith.constant 9.99999974E-6 : f32
    %18 = vector.broadcast %cst_11 : f32 to vector<16x1xf32>
    %19 = arith.addf %16, %18 : vector<16x1xf32>
    %20 = math.rsqrt %19 : vector<16x1xf32>
    %21 = arith.mulf %17, %20 : vector<16x1xf32>
    %c0_12 = arith.constant 0 : index
    %c0_13 = arith.constant 0 : index
    %22 = vector.load %arg4[%c0_12, %c0_13] : memref<16x1xf32, #tpu.memory_space<vmem>>, vector<16x1xf32>
    %23 = arith.mulf %9, %21 : vector<16x1xf32>
    %24 = arith.subf %22, %23 : vector<16x1xf32>
    %25 = vector.broadcast %21 : vector<16x1xf32> to vector<16x128xf32>
    %26 = arith.mulf %5, %25 : vector<16x128xf32>
    %27 = vector.broadcast %24 : vector<16x1xf32> to vector<16x128xf32>
    %28 = arith.addf %26, %27 : vector<16x128xf32>
    %cst_14 = arith.constant 0.000000e+00 : f32
    %29 = vector.broadcast %cst_14 : f32 to vector<16x128xf32>
    %30 = arith.maximumf %28, %29 : vector<16x128xf32>
    %c0_15 = arith.constant 0 : index
    %c0_16 = arith.constant 0 : index
    %31 = vector.load %arg5[%c0_15, %c0_16] : memref<16x128xf32, #tpu.memory_space<vmem>>, vector<16x128xf32>
    tpu.vector_store %arg5[%c0_15, %c0_16], %30 {strides = array<i32>} : memref<16x128xf32, #tpu.memory_space<vmem>>, vector<16x128xf32>,
    return
  }
}

module attributes {stable_mosaic.version = 11 : i64} {
  func.func @_conv_bn_relu_kernel(%arg0: memref<144x128xbf16, #tpu.memory_space<vmem>>, %arg1: memref<16x144xbf16, #tpu.memory_space<vmem>>, %arg2: memref<16x1xf32, #tpu.memory_space<vmem>>, %arg3: memref<16x1xf32, #tpu.memory_space<vmem>>, %arg4: memref<16x1xf32, #tpu.memory_space<vmem>>, %arg5: memref<16x128xf32, #tpu.memory_space<vmem>>) attributes {dimension_semantics = [], scalar_prefetch = 0 : i64, scratch_operands = 0 : i64, tpu.core_type = #tpu.core_type<tc>} {
    %c0 = arith.constant 0 : index
    %c0_0 = arith.constant 0 : index
    %0 = vector.load %arg1[%c0, %c0_0] : memref<16x144xbf16, #tpu.memory_space<vmem>>, vector<16x144xbf16>
    %c0_1 = arith.constant 0 : index
    %c0_2 = arith.constant 0 : index
    %1 = vector.load %arg0[%c0_1, %c0_2] : memref<144x128xbf16, #tpu.memory_space<vmem>>, vector<144x128xbf16>
    %cst = arith.constant dense<0.000000e+00> : vector<16x128xf32>
    %2 = tpu.matmul %0, %1, %cst {dimension_numbers = #tpu.dot_dimension_numbers<[1], [0], [0], [1], [0, 0, 1, 1], [], []>} : vector<16x144xbf16>, vector<144x128xbf16>, vector<16x128xf32> -> vector<16x128xf32>
    %c0_3 = arith.constant 0 : index
    %c0_4 = arith.constant 0 : index
    %3 = vector.load %arg2[%c0_3, %c0_4] : memref<16x1xf32, #tpu.memory_space<vmem>>, vector<16x1xf32>
    %4 = vector.broadcast %3 : vector<16x1xf32> to vector<16x128xf32>
    %5 = arith.addf %2, %4 : vector<16x128xf32>
    %cst_5 = arith.constant dense<0.000000e+00> : vector<16xf32>
    %6 = vector.multi_reduction <add>, %5, %cst_5 [1] : vector<16x128xf32> to vector<16xf32>
    %7 = vector.shape_cast %6 : vector<16xf32> to vector<16x1xf32>
    %cst_6 = arith.constant 1.280000e+02 : f32
    %8 = vector.broadcast %cst_6 : f32 to vector<16x1xf32>
    %9 = arith.divf %7, %8 : vector<16x1xf32>
    %10 = vector.broadcast %9 : vector<16x1xf32> to vector<16x128xf32>
    %11 = arith.subf %5, %10 : vector<16x128xf32>
    %12 = arith.mulf %11, %11 : vector<16x128xf32>
    %cst_7 = arith.constant dense<0.000000e+00> : vector<16xf32>
    %13 = vector.multi_reduction <add>, %12, %cst_7 [1] : vector<16x128xf32> to vector<16xf32>
    %14 = vector.shape_cast %13 : vector<16xf32> to vector<16x1xf32>
    %cst_8 = arith.constant 1.280000e+02 : f32
    %15 = vector.broadcast %cst_8 : f32 to vector<16x1xf32>
    %16 = arith.divf %14, %15 : vector<16x1xf32>
    %c0_9 = arith.constant 0 : index
    %c0_10 = arith.constant 0 : index
    %17 = vector.load %arg3[%c0_9, %c0_10] : memref<16x1xf32, #tpu.memory_space<vmem>>, vector<16x1xf32>
    %cst_11 = arith.constant 9.99999974E-6 : f32
    %18 = vector.broadcast %cst_11 : f32 to vector<16x1xf32>
    %19 = arith.addf %16, %18 : vector<16x1xf32>
    %20 = math.rsqrt %19 : vector<16x1xf32>
    %21 = arith.mulf %17, %20 : vector<16x1xf32>
    %c0_12 = arith.constant 0 : index
    %c0_13 = arith.constant 0 : index
    %22 = vector.load %arg4[%c0_12, %c0_13] : memref<16x1xf32, #tpu.memory_space<vmem>>, vector<16x1xf32>
    %23 = arith.mulf %9, %21 : vector<16x1xf32>
    %24 = arith.subf %22, %23 : vector<16x1xf32>
    %25 = vector.broadcast %21 : vector<16x1xf32> to vector<16x128xf32>
    %26 = arith.mulf %5, %25 : vector<16x128xf32>
    %27 = vector.broadcast %24 : vector<16x1xf32> to vector<16x128xf32>
    %28 = arith.addf %26, %27 : vector<16x128xf32>
    %cst_14 = arith.constant 0.000000e+00 : f32
    %29 = vector.broadcast %cst_14 : f32 to vector<16x128xf32>
    %30 = arith.maximumf %28, %29 : vector<16x128xf32>
    %c0_15 = arith.constant 0 : index
    %c0_16 = arith.constant 0 : index
    %31 = vector.load %arg5[%c0_15, %c0_16] : memref<16x128xf32, #tpu.memory_space<vmem>>, vector<16x128xf32>
    tpu.vector_store %arg5[%c0_15, %c0_16], %30 {strides = array<i32>} : memref<16x128xf32, #tpu.memory_space<vmem>>, vector<16x128xf32>,
    return
  }
}

module attributes {stable_mosaic.version = 11 : i64} {
  func.func @_conv_bn_relu_kernel(%arg0: memref<144x32xbf16, #tpu.memory_space<vmem>>, %arg1: memref<32x144xbf16, #tpu.memory_space<vmem>>, %arg2: memref<32x1xf32, #tpu.memory_space<vmem>>, %arg3: memref<32x1xf32, #tpu.memory_space<vmem>>, %arg4: memref<32x1xf32, #tpu.memory_space<vmem>>, %arg5: memref<32x32xf32, #tpu.memory_space<vmem>>) attributes {dimension_semantics = [], scalar_prefetch = 0 : i64, scratch_operands = 0 : i64, tpu.core_type = #tpu.core_type<tc>} {
    %c0 = arith.constant 0 : index
    %c0_0 = arith.constant 0 : index
    %0 = vector.load %arg1[%c0, %c0_0] : memref<32x144xbf16, #tpu.memory_space<vmem>>, vector<32x144xbf16>
    %c0_1 = arith.constant 0 : index
    %c0_2 = arith.constant 0 : index
    %1 = vector.load %arg0[%c0_1, %c0_2] : memref<144x32xbf16, #tpu.memory_space<vmem>>, vector<144x32xbf16>
    %cst = arith.constant dense<0.000000e+00> : vector<32x32xf32>
    %2 = tpu.matmul %0, %1, %cst {dimension_numbers = #tpu.dot_dimension_numbers<[1], [0], [0], [1], [0, 0, 1, 1], [], []>} : vector<32x144xbf16>, vector<144x32xbf16>, vector<32x32xf32> -> vector<32x32xf32>
    %c0_3 = arith.constant 0 : index
    %c0_4 = arith.constant 0 : index
    %3 = vector.load %arg2[%c0_3, %c0_4] : memref<32x1xf32, #tpu.memory_space<vmem>>, vector<32x1xf32>
    %4 = vector.broadcast %3 : vector<32x1xf32> to vector<32x32xf32>
    %5 = arith.addf %2, %4 : vector<32x32xf32>
    %cst_5 = arith.constant dense<0.000000e+00> : vector<32xf32>
    %6 = vector.multi_reduction <add>, %5, %cst_5 [1] : vector<32x32xf32> to vector<32xf32>
    %7 = vector.shape_cast %6 : vector<32xf32> to vector<32x1xf32>
    %cst_6 = arith.constant 3.200000e+01 : f32
    %8 = vector.broadcast %cst_6 : f32 to vector<32x1xf32>
    %9 = arith.divf %7, %8 : vector<32x1xf32>
    %10 = vector.broadcast %9 : vector<32x1xf32> to vector<32x32xf32>
    %11 = arith.subf %5, %10 : vector<32x32xf32>
    %12 = arith.mulf %11, %11 : vector<32x32xf32>
    %cst_7 = arith.constant dense<0.000000e+00> : vector<32xf32>
    %13 = vector.multi_reduction <add>, %12, %cst_7 [1] : vector<32x32xf32> to vector<32xf32>
    %14 = vector.shape_cast %13 : vector<32xf32> to vector<32x1xf32>
    %cst_8 = arith.constant 3.200000e+01 : f32
    %15 = vector.broadcast %cst_8 : f32 to vector<32x1xf32>
    %16 = arith.divf %14, %15 : vector<32x1xf32>
    %c0_9 = arith.constant 0 : index
    %c0_10 = arith.constant 0 : index
    %17 = vector.load %arg3[%c0_9, %c0_10] : memref<32x1xf32, #tpu.memory_space<vmem>>, vector<32x1xf32>
    %cst_11 = arith.constant 9.99999974E-6 : f32
    %18 = vector.broadcast %cst_11 : f32 to vector<32x1xf32>
    %19 = arith.addf %16, %18 : vector<32x1xf32>
    %20 = math.rsqrt %19 : vector<32x1xf32>
    %21 = arith.mulf %17, %20 : vector<32x1xf32>
    %c0_12 = arith.constant 0 : index
    %c0_13 = arith.constant 0 : index
    %22 = vector.load %arg4[%c0_12, %c0_13] : memref<32x1xf32, #tpu.memory_space<vmem>>, vector<32x1xf32>
    %23 = arith.mulf %9, %21 : vector<32x1xf32>
    %24 = arith.subf %22, %23 : vector<32x1xf32>
    %25 = vector.broadcast %21 : vector<32x1xf32> to vector<32x32xf32>
    %26 = arith.mulf %5, %25 : vector<32x32xf32>
    %27 = vector.broadcast %24 : vector<32x1xf32> to vector<32x32xf32>
    %28 = arith.addf %26, %27 : vector<32x32xf32>
    %cst_14 = arith.constant 0.000000e+00 : f32
    %29 = vector.broadcast %cst_14 : f32 to vector<32x32xf32>
    %30 = arith.maximumf %28, %29 : vector<32x32xf32>
    %c0_15 = arith.constant 0 : index
    %c0_16 = arith.constant 0 : index
    %31 = vector.load %arg5[%c0_15, %c0_16] : memref<32x32xf32, #tpu.memory_space<vmem>>, vector<32x32xf32>
    tpu.vector_store %arg5[%c0_15, %c0_16], %30 {strides = array<i32>} : memref<32x32xf32, #tpu.memory_space<vmem>>, vector<32x32xf32>,
    return
  }
}

module attributes {stable_mosaic.version = 11 : i64} {
  func.func @_conv_bn_relu_kernel(%arg0: memref<288x32xbf16, #tpu.memory_space<vmem>>, %arg1: memref<32x288xbf16, #tpu.memory_space<vmem>>, %arg2: memref<32x1xf32, #tpu.memory_space<vmem>>, %arg3: memref<32x1xf32, #tpu.memory_space<vmem>>, %arg4: memref<32x1xf32, #tpu.memory_space<vmem>>, %arg5: memref<32x32xf32, #tpu.memory_space<vmem>>) attributes {dimension_semantics = [], scalar_prefetch = 0 : i64, scratch_operands = 0 : i64, tpu.core_type = #tpu.core_type<tc>} {
    %c0 = arith.constant 0 : index
    %c0_0 = arith.constant 0 : index
    %0 = vector.load %arg1[%c0, %c0_0] : memref<32x288xbf16, #tpu.memory_space<vmem>>, vector<32x288xbf16>
    %c0_1 = arith.constant 0 : index
    %c0_2 = arith.constant 0 : index
    %1 = vector.load %arg0[%c0_1, %c0_2] : memref<288x32xbf16, #tpu.memory_space<vmem>>, vector<288x32xbf16>
    %cst = arith.constant dense<0.000000e+00> : vector<32x32xf32>
    %2 = tpu.matmul %0, %1, %cst {dimension_numbers = #tpu.dot_dimension_numbers<[1], [0], [0], [1], [0, 0, 1, 1], [], []>} : vector<32x288xbf16>, vector<288x32xbf16>, vector<32x32xf32> -> vector<32x32xf32>
    %c0_3 = arith.constant 0 : index
    %c0_4 = arith.constant 0 : index
    %3 = vector.load %arg2[%c0_3, %c0_4] : memref<32x1xf32, #tpu.memory_space<vmem>>, vector<32x1xf32>
    %4 = vector.broadcast %3 : vector<32x1xf32> to vector<32x32xf32>
    %5 = arith.addf %2, %4 : vector<32x32xf32>
    %cst_5 = arith.constant dense<0.000000e+00> : vector<32xf32>
    %6 = vector.multi_reduction <add>, %5, %cst_5 [1] : vector<32x32xf32> to vector<32xf32>
    %7 = vector.shape_cast %6 : vector<32xf32> to vector<32x1xf32>
    %cst_6 = arith.constant 3.200000e+01 : f32
    %8 = vector.broadcast %cst_6 : f32 to vector<32x1xf32>
    %9 = arith.divf %7, %8 : vector<32x1xf32>
    %10 = vector.broadcast %9 : vector<32x1xf32> to vector<32x32xf32>
    %11 = arith.subf %5, %10 : vector<32x32xf32>
    %12 = arith.mulf %11, %11 : vector<32x32xf32>
    %cst_7 = arith.constant dense<0.000000e+00> : vector<32xf32>
    %13 = vector.multi_reduction <add>, %12, %cst_7 [1] : vector<32x32xf32> to vector<32xf32>
    %14 = vector.shape_cast %13 : vector<32xf32> to vector<32x1xf32>
    %cst_8 = arith.constant 3.200000e+01 : f32
    %15 = vector.broadcast %cst_8 : f32 to vector<32x1xf32>
    %16 = arith.divf %14, %15 : vector<32x1xf32>
    %c0_9 = arith.constant 0 : index
    %c0_10 = arith.constant 0 : index
    %17 = vector.load %arg3[%c0_9, %c0_10] : memref<32x1xf32, #tpu.memory_space<vmem>>, vector<32x1xf32>
    %cst_11 = arith.constant 9.99999974E-6 : f32
    %18 = vector.broadcast %cst_11 : f32 to vector<32x1xf32>
    %19 = arith.addf %16, %18 : vector<32x1xf32>
    %20 = math.rsqrt %19 : vector<32x1xf32>
    %21 = arith.mulf %17, %20 : vector<32x1xf32>
    %c0_12 = arith.constant 0 : index
    %c0_13 = arith.constant 0 : index
    %22 = vector.load %arg4[%c0_12, %c0_13] : memref<32x1xf32, #tpu.memory_space<vmem>>, vector<32x1xf32>
    %23 = arith.mulf %9, %21 : vector<32x1xf32>
    %24 = arith.subf %22, %23 : vector<32x1xf32>
    %25 = vector.broadcast %21 : vector<32x1xf32> to vector<32x32xf32>
    %26 = arith.mulf %5, %25 : vector<32x32xf32>
    %27 = vector.broadcast %24 : vector<32x1xf32> to vector<32x32xf32>
    %28 = arith.addf %26, %27 : vector<32x32xf32>
    %cst_14 = arith.constant 0.000000e+00 : f32
    %29 = vector.broadcast %cst_14 : f32 to vector<32x32xf32>
    %30 = arith.maximumf %28, %29 : vector<32x32xf32>
    %c0_15 = arith.constant 0 : index
    %c0_16 = arith.constant 0 : index
    %31 = vector.load %arg5[%c0_15, %c0_16] : memref<32x32xf32, #tpu.memory_space<vmem>>, vector<32x32xf32>
    tpu.vector_store %arg5[%c0_15, %c0_16], %30 {strides = array<i32>} : memref<32x32xf32, #tpu.memory_space<vmem>>, vector<32x32xf32>,
    return
  }
}

module attributes {stable_mosaic.version = 11 : i64} {
  func.func @_conv_bn_relu_kernel(%arg0: memref<288x8xbf16, #tpu.memory_space<vmem>>, %arg1: memref<16x288xbf16, #tpu.memory_space<vmem>>, %arg2: memref<16x1xf32, #tpu.memory_space<vmem>>, %arg3: memref<16x1xf32, #tpu.memory_space<vmem>>, %arg4: memref<16x1xf32, #tpu.memory_space<vmem>>, %arg5: memref<16x8xf32, #tpu.memory_space<vmem>>) attributes {dimension_semantics = [], scalar_prefetch = 0 : i64, scratch_operands = 0 : i64, tpu.core_type = #tpu.core_type<tc>} {
    %c0 = arith.constant 0 : index
    %c0_0 = arith.constant 0 : index
    %0 = vector.load %arg1[%c0, %c0_0] : memref<16x288xbf16, #tpu.memory_space<vmem>>, vector<16x288xbf16>
    %c0_1 = arith.constant 0 : index
    %c0_2 = arith.constant 0 : index
    %1 = vector.load %arg0[%c0_1, %c0_2] : memref<288x8xbf16, #tpu.memory_space<vmem>>, vector<288x8xbf16>
    %cst = arith.constant dense<0.000000e+00> : vector<16x8xf32>
    %2 = tpu.matmul %0, %1, %cst {dimension_numbers = #tpu.dot_dimension_numbers<[1], [0], [0], [1], [0, 0, 1, 1], [], []>} : vector<16x288xbf16>, vector<288x8xbf16>, vector<16x8xf32> -> vector<16x8xf32>
    %c0_3 = arith.constant 0 : index
    %c0_4 = arith.constant 0 : index
    %3 = vector.load %arg2[%c0_3, %c0_4] : memref<16x1xf32, #tpu.memory_space<vmem>>, vector<16x1xf32>
    %4 = vector.broadcast %3 : vector<16x1xf32> to vector<16x8xf32>
    %5 = arith.addf %2, %4 : vector<16x8xf32>
    %cst_5 = arith.constant dense<0.000000e+00> : vector<16xf32>
    %6 = vector.multi_reduction <add>, %5, %cst_5 [1] : vector<16x8xf32> to vector<16xf32>
    %7 = vector.shape_cast %6 : vector<16xf32> to vector<16x1xf32>
    %cst_6 = arith.constant 8.000000e+00 : f32
    %8 = vector.broadcast %cst_6 : f32 to vector<16x1xf32>
    %9 = arith.divf %7, %8 : vector<16x1xf32>
    %10 = vector.broadcast %9 : vector<16x1xf32> to vector<16x8xf32>
    %11 = arith.subf %5, %10 : vector<16x8xf32>
    %12 = arith.mulf %11, %11 : vector<16x8xf32>
    %cst_7 = arith.constant dense<0.000000e+00> : vector<16xf32>
    %13 = vector.multi_reduction <add>, %12, %cst_7 [1] : vector<16x8xf32> to vector<16xf32>
    %14 = vector.shape_cast %13 : vector<16xf32> to vector<16x1xf32>
    %cst_8 = arith.constant 8.000000e+00 : f32
    %15 = vector.broadcast %cst_8 : f32 to vector<16x1xf32>
    %16 = arith.divf %14, %15 : vector<16x1xf32>
    %c0_9 = arith.constant 0 : index
    %c0_10 = arith.constant 0 : index
    %17 = vector.load %arg3[%c0_9, %c0_10] : memref<16x1xf32, #tpu.memory_space<vmem>>, vector<16x1xf32>
    %cst_11 = arith.constant 9.99999974E-6 : f32
    %18 = vector.broadcast %cst_11 : f32 to vector<16x1xf32>
    %19 = arith.addf %16, %18 : vector<16x1xf32>
    %20 = math.rsqrt %19 : vector<16x1xf32>
    %21 = arith.mulf %17, %20 : vector<16x1xf32>
    %c0_12 = arith.constant 0 : index
    %c0_13 = arith.constant 0 : index
    %22 = vector.load %arg4[%c0_12, %c0_13] : memref<16x1xf32, #tpu.memory_space<vmem>>, vector<16x1xf32>
    %23 = arith.mulf %9, %21 : vector<16x1xf32>
    %24 = arith.subf %22, %23 : vector<16x1xf32>
    %25 = vector.broadcast %21 : vector<16x1xf32> to vector<16x8xf32>
    %26 = arith.mulf %5, %25 : vector<16x8xf32>
    %27 = vector.broadcast %24 : vector<16x1xf32> to vector<16x8xf32>
    %28 = arith.addf %26, %27 : vector<16x8xf32>
    %cst_14 = arith.constant 0.000000e+00 : f32
    %29 = vector.broadcast %cst_14 : f32 to vector<16x8xf32>
    %30 = arith.maximumf %28, %29 : vector<16x8xf32>
    %c0_15 = arith.constant 0 : index
    %c0_16 = arith.constant 0 : index
    %31 = vector.load %arg5[%c0_15, %c0_16] : memref<16x8xf32, #tpu.memory_space<vmem>>, vector<16x8xf32>
    tpu.vector_store %arg5[%c0_15, %c0_16], %30 {strides = array<i32>} : memref<16x8xf32, #tpu.memory_space<vmem>>, vector<16x8xf32>,
    return
  }
}

module attributes {stable_mosaic.version = 11 : i64} {
  func.func @_conv_bn_relu_kernel(%arg0: memref<144x8xbf16, #tpu.memory_space<vmem>>, %arg1: memref<16x144xbf16, #tpu.memory_space<vmem>>, %arg2: memref<16x1xf32, #tpu.memory_space<vmem>>, %arg3: memref<16x1xf32, #tpu.memory_space<vmem>>, %arg4: memref<16x1xf32, #tpu.memory_space<vmem>>, %arg5: memref<16x8xf32, #tpu.memory_space<vmem>>) attributes {dimension_semantics = [], scalar_prefetch = 0 : i64, scratch_operands = 0 : i64, tpu.core_type = #tpu.core_type<tc>} {
    %c0 = arith.constant 0 : index
    %c0_0 = arith.constant 0 : index
    %0 = vector.load %arg1[%c0, %c0_0] : memref<16x144xbf16, #tpu.memory_space<vmem>>, vector<16x144xbf16>
    %c0_1 = arith.constant 0 : index
    %c0_2 = arith.constant 0 : index
    %1 = vector.load %arg0[%c0_1, %c0_2] : memref<144x8xbf16, #tpu.memory_space<vmem>>, vector<144x8xbf16>
    %cst = arith.constant dense<0.000000e+00> : vector<16x8xf32>
    %2 = tpu.matmul %0, %1, %cst {dimension_numbers = #tpu.dot_dimension_numbers<[1], [0], [0], [1], [0, 0, 1, 1], [], []>} : vector<16x144xbf16>, vector<144x8xbf16>, vector<16x8xf32> -> vector<16x8xf32>
    %c0_3 = arith.constant 0 : index
    %c0_4 = arith.constant 0 : index
    %3 = vector.load %arg2[%c0_3, %c0_4] : memref<16x1xf32, #tpu.memory_space<vmem>>, vector<16x1xf32>
    %4 = vector.broadcast %3 : vector<16x1xf32> to vector<16x8xf32>
    %5 = arith.addf %2, %4 : vector<16x8xf32>
    %cst_5 = arith.constant dense<0.000000e+00> : vector<16xf32>
    %6 = vector.multi_reduction <add>, %5, %cst_5 [1] : vector<16x8xf32> to vector<16xf32>
    %7 = vector.shape_cast %6 : vector<16xf32> to vector<16x1xf32>
    %cst_6 = arith.constant 8.000000e+00 : f32
    %8 = vector.broadcast %cst_6 : f32 to vector<16x1xf32>
    %9 = arith.divf %7, %8 : vector<16x1xf32>
    %10 = vector.broadcast %9 : vector<16x1xf32> to vector<16x8xf32>
    %11 = arith.subf %5, %10 : vector<16x8xf32>
    %12 = arith.mulf %11, %11 : vector<16x8xf32>
    %cst_7 = arith.constant dense<0.000000e+00> : vector<16xf32>
    %13 = vector.multi_reduction <add>, %12, %cst_7 [1] : vector<16x8xf32> to vector<16xf32>
    %14 = vector.shape_cast %13 : vector<16xf32> to vector<16x1xf32>
    %cst_8 = arith.constant 8.000000e+00 : f32
    %15 = vector.broadcast %cst_8 : f32 to vector<16x1xf32>
    %16 = arith.divf %14, %15 : vector<16x1xf32>
    %c0_9 = arith.constant 0 : index
    %c0_10 = arith.constant 0 : index
    %17 = vector.load %arg3[%c0_9, %c0_10] : memref<16x1xf32, #tpu.memory_space<vmem>>, vector<16x1xf32>
    %cst_11 = arith.constant 9.99999974E-6 : f32
    %18 = vector.broadcast %cst_11 : f32 to vector<16x1xf32>
    %19 = arith.addf %16, %18 : vector<16x1xf32>
    %20 = math.rsqrt %19 : vector<16x1xf32>
    %21 = arith.mulf %17, %20 : vector<16x1xf32>
    %c0_12 = arith.constant 0 : index
    %c0_13 = arith.constant 0 : index
    %22 = vector.load %arg4[%c0_12, %c0_13] : memref<16x1xf32, #tpu.memory_space<vmem>>, vector<16x1xf32>
    %23 = arith.mulf %9, %21 : vector<16x1xf32>
    %24 = arith.subf %22, %23 : vector<16x1xf32>
    %25 = vector.broadcast %21 : vector<16x1xf32> to vector<16x8xf32>
    %26 = arith.mulf %5, %25 : vector<16x8xf32>
    %27 = vector.broadcast %24 : vector<16x1xf32> to vector<16x8xf32>
    %28 = arith.addf %26, %27 : vector<16x8xf32>
    %cst_14 = arith.constant 0.000000e+00 : f32
    %29 = vector.broadcast %cst_14 : f32 to vector<16x8xf32>
    %30 = arith.maximumf %28, %29 : vector<16x8xf32>
    %c0_15 = arith.constant 0 : index
    %c0_16 = arith.constant 0 : index
    %31 = vector.load %arg5[%c0_15, %c0_16] : memref<16x8xf32, #tpu.memory_space<vmem>>, vector<16x8xf32>
    tpu.vector_store %arg5[%c0_15, %c0_16], %30 {strides = array<i32>} : memref<16x8xf32, #tpu.memory_space<vmem>>, vector<16x8xf32>,
    return
  }
}

module attributes {stable_mosaic.version = 11 : i64} {
  func.func @_conv_transpose_kernel(%arg0: memref<64x8xbf16, #tpu.memory_space<vmem>>, %arg1: memref<64x64xbf16, #tpu.memory_space<vmem>>, %arg2: memref<64x1xf32, #tpu.memory_space<vmem>>, %arg3: memref<64x8xf32, #tpu.memory_space<vmem>>) attributes {dimension_semantics = [], scalar_prefetch = 0 : i64, scratch_operands = 0 : i64, tpu.core_type = #tpu.core_type<tc>} {
    %c0 = arith.constant 0 : index
    %c0_0 = arith.constant 0 : index
    %0 = vector.load %arg1[%c0, %c0_0] : memref<64x64xbf16, #tpu.memory_space<vmem>>, vector<64x64xbf16>
    %c0_1 = arith.constant 0 : index
    %c0_2 = arith.constant 0 : index
    %1 = vector.load %arg0[%c0_1, %c0_2] : memref<64x8xbf16, #tpu.memory_space<vmem>>, vector<64x8xbf16>
    %cst = arith.constant dense<0.000000e+00> : vector<64x8xf32>
    %2 = tpu.matmul %0, %1, %cst {dimension_numbers = #tpu.dot_dimension_numbers<[1], [0], [0], [1], [0, 0, 1, 1], [], []>} : vector<64x64xbf16>, vector<64x8xbf16>, vector<64x8xf32> -> vector<64x8xf32>
    %c0_3 = arith.constant 0 : index
    %c0_4 = arith.constant 0 : index
    %3 = vector.load %arg2[%c0_3, %c0_4] : memref<64x1xf32, #tpu.memory_space<vmem>>, vector<64x1xf32>
    %4 = vector.broadcast %3 : vector<64x1xf32> to vector<64x8xf32>
    %5 = arith.addf %2, %4 : vector<64x8xf32>
    %c0_5 = arith.constant 0 : index
    %c0_6 = arith.constant 0 : index
    %6 = vector.load %arg3[%c0_5, %c0_6] : memref<64x8xf32, #tpu.memory_space<vmem>>, vector<64x8xf32>
    tpu.vector_store %arg3[%c0_5, %c0_6], %5 {strides = array<i32>} : memref<64x8xf32, #tpu.memory_space<vmem>>, vector<64x8xf32>,
    return
  }
}

module attributes {stable_mosaic.version = 11 : i64} {
  func.func @_conv_bn_relu_kernel(%arg0: memref<288x32xbf16, #tpu.memory_space<vmem>>, %arg1: memref<8x288xbf16, #tpu.memory_space<vmem>>, %arg2: memref<8x1xf32, #tpu.memory_space<vmem>>, %arg3: memref<8x1xf32, #tpu.memory_space<vmem>>, %arg4: memref<8x1xf32, #tpu.memory_space<vmem>>, %arg5: memref<8x32xf32, #tpu.memory_space<vmem>>) attributes {dimension_semantics = [], scalar_prefetch = 0 : i64, scratch_operands = 0 : i64, tpu.core_type = #tpu.core_type<tc>} {
    %c0 = arith.constant 0 : index
    %c0_0 = arith.constant 0 : index
    %0 = vector.load %arg1[%c0, %c0_0] : memref<8x288xbf16, #tpu.memory_space<vmem>>, vector<8x288xbf16>
    %c0_1 = arith.constant 0 : index
    %c0_2 = arith.constant 0 : index
    %1 = vector.load %arg0[%c0_1, %c0_2] : memref<288x32xbf16, #tpu.memory_space<vmem>>, vector<288x32xbf16>
    %cst = arith.constant dense<0.000000e+00> : vector<8x32xf32>
    %2 = tpu.matmul %0, %1, %cst {dimension_numbers = #tpu.dot_dimension_numbers<[1], [0], [0], [1], [0, 0, 1, 1], [], []>} : vector<8x288xbf16>, vector<288x32xbf16>, vector<8x32xf32> -> vector<8x32xf32>
    %c0_3 = arith.constant 0 : index
    %c0_4 = arith.constant 0 : index
    %3 = vector.load %arg2[%c0_3, %c0_4] : memref<8x1xf32, #tpu.memory_space<vmem>>, vector<8x1xf32>
    %4 = vector.broadcast %3 : vector<8x1xf32> to vector<8x32xf32>
    %5 = arith.addf %2, %4 : vector<8x32xf32>
    %cst_5 = arith.constant dense<0.000000e+00> : vector<8xf32>
    %6 = vector.multi_reduction <add>, %5, %cst_5 [1] : vector<8x32xf32> to vector<8xf32>
    %7 = vector.shape_cast %6 : vector<8xf32> to vector<8x1xf32>
    %cst_6 = arith.constant 3.200000e+01 : f32
    %8 = vector.broadcast %cst_6 : f32 to vector<8x1xf32>
    %9 = arith.divf %7, %8 : vector<8x1xf32>
    %10 = vector.broadcast %9 : vector<8x1xf32> to vector<8x32xf32>
    %11 = arith.subf %5, %10 : vector<8x32xf32>
    %12 = arith.mulf %11, %11 : vector<8x32xf32>
    %cst_7 = arith.constant dense<0.000000e+00> : vector<8xf32>
    %13 = vector.multi_reduction <add>, %12, %cst_7 [1] : vector<8x32xf32> to vector<8xf32>
    %14 = vector.shape_cast %13 : vector<8xf32> to vector<8x1xf32>
    %cst_8 = arith.constant 3.200000e+01 : f32
    %15 = vector.broadcast %cst_8 : f32 to vector<8x1xf32>
    %16 = arith.divf %14, %15 : vector<8x1xf32>
    %c0_9 = arith.constant 0 : index
    %c0_10 = arith.constant 0 : index
    %17 = vector.load %arg3[%c0_9, %c0_10] : memref<8x1xf32, #tpu.memory_space<vmem>>, vector<8x1xf32>
    %cst_11 = arith.constant 9.99999974E-6 : f32
    %18 = vector.broadcast %cst_11 : f32 to vector<8x1xf32>
    %19 = arith.addf %16, %18 : vector<8x1xf32>
    %20 = math.rsqrt %19 : vector<8x1xf32>
    %21 = arith.mulf %17, %20 : vector<8x1xf32>
    %c0_12 = arith.constant 0 : index
    %c0_13 = arith.constant 0 : index
    %22 = vector.load %arg4[%c0_12, %c0_13] : memref<8x1xf32, #tpu.memory_space<vmem>>, vector<8x1xf32>
    %23 = arith.mulf %9, %21 : vector<8x1xf32>
    %24 = arith.subf %22, %23 : vector<8x1xf32>
    %25 = vector.broadcast %21 : vector<8x1xf32> to vector<8x32xf32>
    %26 = arith.mulf %5, %25 : vector<8x32xf32>
    %27 = vector.broadcast %24 : vector<8x1xf32> to vector<8x32xf32>
    %28 = arith.addf %26, %27 : vector<8x32xf32>
    %cst_14 = arith.constant 0.000000e+00 : f32
    %29 = vector.broadcast %cst_14 : f32 to vector<8x32xf32>
    %30 = arith.maximumf %28, %29 : vector<8x32xf32>
    %c0_15 = arith.constant 0 : index
    %c0_16 = arith.constant 0 : index
    %31 = vector.load %arg5[%c0_15, %c0_16] : memref<8x32xf32, #tpu.memory_space<vmem>>, vector<8x32xf32>
    tpu.vector_store %arg5[%c0_15, %c0_16], %30 {strides = array<i32>} : memref<8x32xf32, #tpu.memory_space<vmem>>, vector<8x32xf32>,
    return
  }
}

module attributes {stable_mosaic.version = 11 : i64} {
  func.func @_conv_bn_relu_kernel(%arg0: memref<72x32xbf16, #tpu.memory_space<vmem>>, %arg1: memref<8x72xbf16, #tpu.memory_space<vmem>>, %arg2: memref<8x1xf32, #tpu.memory_space<vmem>>, %arg3: memref<8x1xf32, #tpu.memory_space<vmem>>, %arg4: memref<8x1xf32, #tpu.memory_space<vmem>>, %arg5: memref<8x32xf32, #tpu.memory_space<vmem>>) attributes {dimension_semantics = [], scalar_prefetch = 0 : i64, scratch_operands = 0 : i64, tpu.core_type = #tpu.core_type<tc>} {
    %c0 = arith.constant 0 : index
    %c0_0 = arith.constant 0 : index
    %0 = vector.load %arg1[%c0, %c0_0] : memref<8x72xbf16, #tpu.memory_space<vmem>>, vector<8x72xbf16>
    %c0_1 = arith.constant 0 : index
    %c0_2 = arith.constant 0 : index
    %1 = vector.load %arg0[%c0_1, %c0_2] : memref<72x32xbf16, #tpu.memory_space<vmem>>, vector<72x32xbf16>
    %cst = arith.constant dense<0.000000e+00> : vector<8x32xf32>
    %2 = tpu.matmul %0, %1, %cst {dimension_numbers = #tpu.dot_dimension_numbers<[1], [0], [0], [1], [0, 0, 1, 1], [], []>} : vector<8x72xbf16>, vector<72x32xbf16>, vector<8x32xf32> -> vector<8x32xf32>
    %c0_3 = arith.constant 0 : index
    %c0_4 = arith.constant 0 : index
    %3 = vector.load %arg2[%c0_3, %c0_4] : memref<8x1xf32, #tpu.memory_space<vmem>>, vector<8x1xf32>
    %4 = vector.broadcast %3 : vector<8x1xf32> to vector<8x32xf32>
    %5 = arith.addf %2, %4 : vector<8x32xf32>
    %cst_5 = arith.constant dense<0.000000e+00> : vector<8xf32>
    %6 = vector.multi_reduction <add>, %5, %cst_5 [1] : vector<8x32xf32> to vector<8xf32>
    %7 = vector.shape_cast %6 : vector<8xf32> to vector<8x1xf32>
    %cst_6 = arith.constant 3.200000e+01 : f32
    %8 = vector.broadcast %cst_6 : f32 to vector<8x1xf32>
    %9 = arith.divf %7, %8 : vector<8x1xf32>
    %10 = vector.broadcast %9 : vector<8x1xf32> to vector<8x32xf32>
    %11 = arith.subf %5, %10 : vector<8x32xf32>
    %12 = arith.mulf %11, %11 : vector<8x32xf32>
    %cst_7 = arith.constant dense<0.000000e+00> : vector<8xf32>
    %13 = vector.multi_reduction <add>, %12, %cst_7 [1] : vector<8x32xf32> to vector<8xf32>
    %14 = vector.shape_cast %13 : vector<8xf32> to vector<8x1xf32>
    %cst_8 = arith.constant 3.200000e+01 : f32
    %15 = vector.broadcast %cst_8 : f32 to vector<8x1xf32>
    %16 = arith.divf %14, %15 : vector<8x1xf32>
    %c0_9 = arith.constant 0 : index
    %c0_10 = arith.constant 0 : index
    %17 = vector.load %arg3[%c0_9, %c0_10] : memref<8x1xf32, #tpu.memory_space<vmem>>, vector<8x1xf32>
    %cst_11 = arith.constant 9.99999974E-6 : f32
    %18 = vector.broadcast %cst_11 : f32 to vector<8x1xf32>
    %19 = arith.addf %16, %18 : vector<8x1xf32>
    %20 = math.rsqrt %19 : vector<8x1xf32>
    %21 = arith.mulf %17, %20 : vector<8x1xf32>
    %c0_12 = arith.constant 0 : index
    %c0_13 = arith.constant 0 : index
    %22 = vector.load %arg4[%c0_12, %c0_13] : memref<8x1xf32, #tpu.memory_space<vmem>>, vector<8x1xf32>
    %23 = arith.mulf %9, %21 : vector<8x1xf32>
    %24 = arith.subf %22, %23 : vector<8x1xf32>
    %25 = vector.broadcast %21 : vector<8x1xf32> to vector<8x32xf32>
    %26 = arith.mulf %5, %25 : vector<8x32xf32>
    %27 = vector.broadcast %24 : vector<8x1xf32> to vector<8x32xf32>
    %28 = arith.addf %26, %27 : vector<8x32xf32>
    %cst_14 = arith.constant 0.000000e+00 : f32
    %29 = vector.broadcast %cst_14 : f32 to vector<8x32xf32>
    %30 = arith.maximumf %28, %29 : vector<8x32xf32>
    %c0_15 = arith.constant 0 : index
    %c0_16 = arith.constant 0 : index
    %31 = vector.load %arg5[%c0_15, %c0_16] : memref<8x32xf32, #tpu.memory_space<vmem>>, vector<8x32xf32>
    tpu.vector_store %arg5[%c0_15, %c0_16], %30 {strides = array<i32>} : memref<8x32xf32, #tpu.memory_space<vmem>>, vector<8x32xf32>,
    return
  }
}

module attributes {stable_mosaic.version = 11 : i64} {
  func.func @_conv_transpose_kernel(%arg0: memref<32x32xbf16, #tpu.memory_space<vmem>>, %arg1: memref<32x32xbf16, #tpu.memory_space<vmem>>, %arg2: memref<32x1xf32, #tpu.memory_space<vmem>>, %arg3: memref<32x32xf32, #tpu.memory_space<vmem>>) attributes {dimension_semantics = [], scalar_prefetch = 0 : i64, scratch_operands = 0 : i64, tpu.core_type = #tpu.core_type<tc>} {
    %c0 = arith.constant 0 : index
    %c0_0 = arith.constant 0 : index
    %0 = vector.load %arg1[%c0, %c0_0] : memref<32x32xbf16, #tpu.memory_space<vmem>>, vector<32x32xbf16>
    %c0_1 = arith.constant 0 : index
    %c0_2 = arith.constant 0 : index
    %1 = vector.load %arg0[%c0_1, %c0_2] : memref<32x32xbf16, #tpu.memory_space<vmem>>, vector<32x32xbf16>
    %cst = arith.constant dense<0.000000e+00> : vector<32x32xf32>
    %2 = tpu.matmul %0, %1, %cst {dimension_numbers = #tpu.dot_dimension_numbers<[1], [0], [0], [1], [0, 0, 1, 1], [], []>} : vector<32x32xbf16>, vector<32x32xbf16>, vector<32x32xf32> -> vector<32x32xf32>
    %c0_3 = arith.constant 0 : index
    %c0_4 = arith.constant 0 : index
    %3 = vector.load %arg2[%c0_3, %c0_4] : memref<32x1xf32, #tpu.memory_space<vmem>>, vector<32x1xf32>
    %4 = vector.broadcast %3 : vector<32x1xf32> to vector<32x32xf32>
    %5 = arith.addf %2, %4 : vector<32x32xf32>
    %c0_5 = arith.constant 0 : index
    %c0_6 = arith.constant 0 : index
    %6 = vector.load %arg3[%c0_5, %c0_6] : memref<32x32xf32, #tpu.memory_space<vmem>>, vector<32x32xf32>
    tpu.vector_store %arg3[%c0_5, %c0_6], %5 {strides = array<i32>} : memref<32x32xf32, #tpu.memory_space<vmem>>, vector<32x32xf32>,
    return
  }
}

module attributes {stable_mosaic.version = 11 : i64} {
  func.func @_conv_bn_relu_kernel(%arg0: memref<144x128xbf16, #tpu.memory_space<vmem>>, %arg1: memref<3x144xbf16, #tpu.memory_space<vmem>>, %arg2: memref<3x1xf32, #tpu.memory_space<vmem>>, %arg3: memref<3x1xf32, #tpu.memory_space<vmem>>, %arg4: memref<3x1xf32, #tpu.memory_space<vmem>>, %arg5: memref<3x128xf32, #tpu.memory_space<vmem>>) attributes {dimension_semantics = [], scalar_prefetch = 0 : i64, scratch_operands = 0 : i64, tpu.core_type = #tpu.core_type<tc>} {
    %c0 = arith.constant 0 : index
    %c0_0 = arith.constant 0 : index
    %0 = vector.load %arg1[%c0, %c0_0] : memref<3x144xbf16, #tpu.memory_space<vmem>>, vector<3x144xbf16>
    %c0_1 = arith.constant 0 : index
    %c0_2 = arith.constant 0 : index
    %1 = vector.load %arg0[%c0_1, %c0_2] : memref<144x128xbf16, #tpu.memory_space<vmem>>, vector<144x128xbf16>
    %cst = arith.constant dense<0.000000e+00> : vector<3x128xf32>
    %2 = tpu.matmul %0, %1, %cst {dimension_numbers = #tpu.dot_dimension_numbers<[1], [0], [0], [1], [0, 0, 1, 1], [], []>} : vector<3x144xbf16>, vector<144x128xbf16>, vector<3x128xf32> -> vector<3x128xf32>
    %c0_3 = arith.constant 0 : index
    %c0_4 = arith.constant 0 : index
    %3 = vector.load %arg2[%c0_3, %c0_4] : memref<3x1xf32, #tpu.memory_space<vmem>>, vector<3x1xf32>
    %4 = vector.broadcast %3 : vector<3x1xf32> to vector<3x128xf32>
    %5 = arith.addf %2, %4 : vector<3x128xf32>
    %cst_5 = arith.constant dense<0.000000e+00> : vector<3xf32>
    %6 = vector.multi_reduction <add>, %5, %cst_5 [1] : vector<3x128xf32> to vector<3xf32>
    %7 = vector.shape_cast %6 : vector<3xf32> to vector<3x1xf32>
    %cst_6 = arith.constant 1.280000e+02 : f32
    %8 = vector.broadcast %cst_6 : f32 to vector<3x1xf32>
    %9 = arith.divf %7, %8 : vector<3x1xf32>
    %10 = vector.broadcast %9 : vector<3x1xf32> to vector<3x128xf32>
    %11 = arith.subf %5, %10 : vector<3x128xf32>
    %12 = arith.mulf %11, %11 : vector<3x128xf32>
    %cst_7 = arith.constant dense<0.000000e+00> : vector<3xf32>
    %13 = vector.multi_reduction <add>, %12, %cst_7 [1] : vector<3x128xf32> to vector<3xf32>
    %14 = vector.shape_cast %13 : vector<3xf32> to vector<3x1xf32>
    %cst_8 = arith.constant 1.280000e+02 : f32
    %15 = vector.broadcast %cst_8 : f32 to vector<3x1xf32>
    %16 = arith.divf %14, %15 : vector<3x1xf32>
    %c0_9 = arith.constant 0 : index
    %c0_10 = arith.constant 0 : index
    %17 = vector.load %arg3[%c0_9, %c0_10] : memref<3x1xf32, #tpu.memory_space<vmem>>, vector<3x1xf32>
    %cst_11 = arith.constant 9.99999974E-6 : f32
    %18 = vector.broadcast %cst_11 : f32 to vector<3x1xf32>
    %19 = arith.addf %16, %18 : vector<3x1xf32>
    %20 = math.rsqrt %19 : vector<3x1xf32>
    %21 = arith.mulf %17, %20 : vector<3x1xf32>
    %c0_12 = arith.constant 0 : index
    %c0_13 = arith.constant 0 : index
    %22 = vector.load %arg4[%c0_12, %c0_13] : memref<3x1xf32, #tpu.memory_space<vmem>>, vector<3x1xf32>
    %23 = arith.mulf %9, %21 : vector<3x1xf32>
    %24 = arith.subf %22, %23 : vector<3x1xf32>
    %25 = vector.broadcast %21 : vector<3x1xf32> to vector<3x128xf32>
    %26 = arith.mulf %5, %25 : vector<3x128xf32>
    %27 = vector.broadcast %24 : vector<3x1xf32> to vector<3x128xf32>
    %28 = arith.addf %26, %27 : vector<3x128xf32>
    %cst_14 = arith.constant 0.000000e+00 : f32
    %29 = vector.broadcast %cst_14 : f32 to vector<3x128xf32>
    %30 = arith.maximumf %28, %29 : vector<3x128xf32>
    %c0_15 = arith.constant 0 : index
    %c0_16 = arith.constant 0 : index
    %31 = vector.load %arg5[%c0_15, %c0_16] : memref<3x128xf32, #tpu.memory_space<vmem>>, vector<3x128xf32>
    tpu.vector_store %arg5[%c0_15, %c0_16], %30 {strides = array<i32>} : memref<3x128xf32, #tpu.memory_space<vmem>>, vector<3x128xf32>,
    return
  }
}

module attributes {stable_mosaic.version = 11 : i64} {
  func.func @_conv_bn_relu_kernel(%arg0: memref<27x128xbf16, #tpu.memory_space<vmem>>, %arg1: memref<3x27xbf16, #tpu.memory_space<vmem>>, %arg2: memref<3x1xf32, #tpu.memory_space<vmem>>, %arg3: memref<3x1xf32, #tpu.memory_space<vmem>>, %arg4: memref<3x1xf32, #tpu.memory_space<vmem>>, %arg5: memref<3x128xf32, #tpu.memory_space<vmem>>) attributes {dimension_semantics = [], scalar_prefetch = 0 : i64, scratch_operands = 0 : i64, tpu.core_type = #tpu.core_type<tc>} {
    %c0 = arith.constant 0 : index
    %c0_0 = arith.constant 0 : index
    %0 = vector.load %arg1[%c0, %c0_0] : memref<3x27xbf16, #tpu.memory_space<vmem>>, vector<3x27xbf16>
    %c0_1 = arith.constant 0 : index
    %c0_2 = arith.constant 0 : index
    %1 = vector.load %arg0[%c0_1, %c0_2] : memref<27x128xbf16, #tpu.memory_space<vmem>>, vector<27x128xbf16>
    %cst = arith.constant dense<0.000000e+00> : vector<3x128xf32>
    %2 = tpu.matmul %0, %1, %cst {dimension_numbers = #tpu.dot_dimension_numbers<[1], [0], [0], [1], [0, 0, 1, 1], [], []>} : vector<3x27xbf16>, vector<27x128xbf16>, vector<3x128xf32> -> vector<3x128xf32>
    %c0_3 = arith.constant 0 : index
    %c0_4 = arith.constant 0 : index
    %3 = vector.load %arg2[%c0_3, %c0_4] : memref<3x1xf32, #tpu.memory_space<vmem>>, vector<3x1xf32>
    %4 = vector.broadcast %3 : vector<3x1xf32> to vector<3x128xf32>
    %5 = arith.addf %2, %4 : vector<3x128xf32>
    %cst_5 = arith.constant dense<0.000000e+00> : vector<3xf32>
    %6 = vector.multi_reduction <add>, %5, %cst_5 [1] : vector<3x128xf32> to vector<3xf32>
    %7 = vector.shape_cast %6 : vector<3xf32> to vector<3x1xf32>
    %cst_6 = arith.constant 1.280000e+02 : f32
    %8 = vector.broadcast %cst_6 : f32 to vector<3x1xf32>
    %9 = arith.divf %7, %8 : vector<3x1xf32>
    %10 = vector.broadcast %9 : vector<3x1xf32> to vector<3x128xf32>
    %11 = arith.subf %5, %10 : vector<3x128xf32>
    %12 = arith.mulf %11, %11 : vector<3x128xf32>
    %cst_7 = arith.constant dense<0.000000e+00> : vector<3xf32>
    %13 = vector.multi_reduction <add>, %12, %cst_7 [1] : vector<3x128xf32> to vector<3xf32>
    %14 = vector.shape_cast %13 : vector<3xf32> to vector<3x1xf32>
    %cst_8 = arith.constant 1.280000e+02 : f32
    %15 = vector.broadcast %cst_8 : f32 to vector<3x1xf32>
    %16 = arith.divf %14, %15 : vector<3x1xf32>
    %c0_9 = arith.constant 0 : index
    %c0_10 = arith.constant 0 : index
    %17 = vector.load %arg3[%c0_9, %c0_10] : memref<3x1xf32, #tpu.memory_space<vmem>>, vector<3x1xf32>
    %cst_11 = arith.constant 9.99999974E-6 : f32
    %18 = vector.broadcast %cst_11 : f32 to vector<3x1xf32>
    %19 = arith.addf %16, %18 : vector<3x1xf32>
    %20 = math.rsqrt %19 : vector<3x1xf32>
    %21 = arith.mulf %17, %20 : vector<3x1xf32>
    %c0_12 = arith.constant 0 : index
    %c0_13 = arith.constant 0 : index
    %22 = vector.load %arg4[%c0_12, %c0_13] : memref<3x1xf32, #tpu.memory_space<vmem>>, vector<3x1xf32>
    %23 = arith.mulf %9, %21 : vector<3x1xf32>
    %24 = arith.subf %22, %23 : vector<3x1xf32>
    %25 = vector.broadcast %21 : vector<3x1xf32> to vector<3x128xf32>
    %26 = arith.mulf %5, %25 : vector<3x128xf32>
    %27 = vector.broadcast %24 : vector<3x1xf32> to vector<3x128xf32>
    %28 = arith.addf %26, %27 : vector<3x128xf32>
    %cst_14 = arith.constant 0.000000e+00 : f32
    %29 = vector.broadcast %cst_14 : f32 to vector<3x128xf32>
    %30 = arith.maximumf %28, %29 : vector<3x128xf32>
    %c0_15 = arith.constant 0 : index
    %c0_16 = arith.constant 0 : index
    %31 = vector.load %arg5[%c0_15, %c0_16] : memref<3x128xf32, #tpu.memory_space<vmem>>, vector<3x128xf32>
    tpu.vector_store %arg5[%c0_15, %c0_16], %30 {strides = array<i32>} : memref<3x128xf32, #tpu.memory_space<vmem>>, vector<3x128xf32>,
    return
  }
}

module attributes {stable_mosaic.version = 11 : i64} {
  func.func @_conv_transpose_kernel(%arg0: memref<12x128xbf16, #tpu.memory_space<vmem>>, %arg1: memref<12x12xbf16, #tpu.memory_space<vmem>>, %arg2: memref<12x1xf32, #tpu.memory_space<vmem>>, %arg3: memref<12x128xf32, #tpu.memory_space<vmem>>) attributes {dimension_semantics = [], scalar_prefetch = 0 : i64, scratch_operands = 0 : i64, tpu.core_type = #tpu.core_type<tc>} {
    %c0 = arith.constant 0 : index
    %c0_0 = arith.constant 0 : index
    %0 = vector.load %arg1[%c0, %c0_0] : memref<12x12xbf16, #tpu.memory_space<vmem>>, vector<12x12xbf16>
    %c0_1 = arith.constant 0 : index
    %c0_2 = arith.constant 0 : index
    %1 = vector.load %arg0[%c0_1, %c0_2] : memref<12x128xbf16, #tpu.memory_space<vmem>>, vector<12x128xbf16>
    %cst = arith.constant dense<0.000000e+00> : vector<12x128xf32>
    %2 = tpu.matmul %0, %1, %cst {dimension_numbers = #tpu.dot_dimension_numbers<[1], [0], [0], [1], [0, 0, 1, 1], [], []>} : vector<12x12xbf16>, vector<12x128xbf16>, vector<12x128xf32> -> vector<12x128xf32>
    %c0_3 = arith.constant 0 : index
    %c0_4 = arith.constant 0 : index
    %3 = vector.load %arg2[%c0_3, %c0_4] : memref<12x1xf32, #tpu.memory_space<vmem>>, vector<12x1xf32>
    %4 = vector.broadcast %3 : vector<12x1xf32> to vector<12x128xf32>
    %5 = arith.addf %2, %4 : vector<12x128xf32>
    %c0_5 = arith.constant 0 : index
    %c0_6 = arith.constant 0 : index
    %6 = vector.load %arg3[%c0_5, %c0_6] : memref<12x128xf32, #tpu.memory_space<vmem>>, vector<12x128xf32>
    tpu.vector_store %arg3[%c0_5, %c0_6], %5 {strides = array<i32>} : memref<12x128xf32, #tpu.memory_space<vmem>>, vector<12x128xf32>,
    return
  }
}

</mosaic_0001>

<llo_original>
// kernel: simple_conv_forward.15
$region0: #{simple_conv_forward.15}
  #allocation0 [shape = 'u32[]', space=smem, size = 0x4, offset = 0x4, fixed_abs, tag = 'smem constant byte address 0x4 - core index']
  #allocation1 [shape = 'u32[72,128]{1,0:T(1,128)}', space=vmem, size = 0x9000, scoped, tag = 'internal scratch']
  %s0 = inlined_call_operand.vmem [shape: bf16[196,512], index: 0, kind: input, shape index: {}]
  %s1 = inlined_call_operand.vmem [shape: bf16[8,196], index: 1, kind: input, shape index: {}]
  %s2 = inlined_call_operand.vmem [shape: f32[8,1], index: 2, kind: input, shape index: {}]
  %s3 = inlined_call_operand.vmem [shape: f32[8,1], index: 3, kind: input, shape index: {}]
  %s4 = inlined_call_operand.vmem [shape: f32[8,1], index: 4, kind: input, shape index: {}]
  %s5 = inlined_call_operand.vmem [shape: f32[8,512], index: 5, kind: output, shape index: {}]
  %s6 = sld [smem:[#allocation0]]
  $region30: #{simple_conv_forward.15} parent=0
    _
  %s8 = ssub.s32 1, %s6
  %s9 = scalar_select 0, %s8, %s6
  // Predicated region
  $region2: #{simple_conv_forward.15} parent=0 // pred_check
    _
  $region3: #{simple_conv_forward.15} parent=0 // pred_check_branch
    %11 = sbr.rel (0) target = $region5
  $region4: #{simple_conv_forward.15} parent=0 // pred_region
    _
  $region5: #{simple_conv_forward.15} parent=0 // pred_fallthru
    _
  // Predicated region
  $region6: #{simple_conv_forward.15} parent=0 // pred_check
    _
  $region7: #{simple_conv_forward.15} parent=0 // pred_check_branch
    %13 = sbr.rel (0) target = $region9
  $region8: #{simple_conv_forward.15} parent=0 // pred_region
    _
  $region9: #{simple_conv_forward.15} parent=0 // pred_fallthru
    _
  // Predicated region
  $region10: #{simple_conv_forward.15} parent=0 // pred_check
    _
  $region11: #{simple_conv_forward.15} parent=0 // pred_check_branch
    %15 = sbr.rel (0) target = $region13
  $region12: #{simple_conv_forward.15} parent=0 // pred_region
    _
  $region13: #{simple_conv_forward.15} parent=0 // pred_fallthru
    _
  // Predicated region
  $region14: #{simple_conv_forward.15} parent=0 // pred_check
    _
  $region15: #{simple_conv_forward.15} parent=0 // pred_check_branch
    %17 = sbr.rel (0) target = $region17
  $region16: #{simple_conv_forward.15} parent=0 // pred_region
    _
  $region17: #{simple_conv_forward.15} parent=0 // pred_fallthru
    _
  // Predicated region
  $region18: #{simple_conv_forward.15} parent=0 // pred_check
    _
  $region19: #{simple_conv_forward.15} parent=0 // pred_check_branch
    %19 = sbr.rel (0) target = $region21
  $region20: #{simple_conv_forward.15} parent=0 // pred_region
    _
  $region21: #{simple_conv_forward.15} parent=0 // pred_fallthru
    _
  %v21 = vld [vmem:[%s1] sm:$0xff]
  %v22 = vld [vmem:[%s0] sm:$0xff]
  %v23 = vld [vmem:[%s0 + $0x8] sm:$0xff]
  %v24 = vld [vmem:[%s0 + $0x10] sm:$0xff]
  %v25 = vld [vmem:[%s0 + $0x18] sm:$0xff]
  %v26 = vld [vmem:[%s0 + $0x20] sm:$0xff]
  %v27 = vld [vmem:[%s0 + $0x28] sm:$0xff]
  %v28 = vld [vmem:[%s0 + $0x30] sm:$0xff]
  %v29 = vld [vmem:[%s0 + $0x38] sm:$0xff]
  %v30 = vld [vmem:[%s0 + $0x40] sm:$0xff]
  %v31 = vld [vmem:[%s0 + $0x48] sm:$0xff]
  %v32 = vld [vmem:[%s0 + $0x50] sm:$0xff]
  %v33 = vld [vmem:[%s0 + $0x58] sm:$0xff]
  %v34 = vld [vmem:[%s0 + $0x60] sm:$0xff]
  %v35 = vld [vmem:[%s0 + $0x68] sm:$0xff]
  %v36 = vld [vmem:[%s0 + $0x70] sm:$0xff]
  %v37 = vld [vmem:[%s0 + $0x78] sm:$0xff]
  %v38 = vld [vmem:[%s0 + $0x80] sm:$0xff]
  %v39 = vld [vmem:[%s0 + $0x88] sm:$0xff]
  %v40 = vld [vmem:[%s0 + $0x90] sm:$0xff]
  %v41 = vld [vmem:[%s0 + $0x98] sm:$0xff]
  %v42 = vld [vmem:[%s0 + $0xa0] sm:$0xff]
  %v43 = vld [vmem:[%s0 + $0xa8] sm:$0xff]
  %v44 = vld [vmem:[%s0 + $0xb0] sm:$0xff]
  %v45 = vld [vmem:[%s0 + $0xb8] sm:$0xff]
  %v46 = vld [vmem:[%s0 + $0xc0] sm:$0xff]
  %v47 = vld [vmem:[%s0 + $0xc8] sm:$0xff]
  %v48 = vld [vmem:[%s0 + $0xd0] sm:$0xff]
  %v49 = vld [vmem:[%s0 + $0xd8] sm:$0xff]
  %v50 = vld [vmem:[%s0 + $0xe0] sm:$0xff]
  %v51 = vld [vmem:[%s0 + $0xe8] sm:$0xff]
  %v52 = vld [vmem:[%s0 + $0xf0] sm:$0xff]
  %v53 = vld [vmem:[%s0 + $0xf8] sm:$0xff]
  %v54 = vld [vmem:[%s0 + $0x100] sm:$0xff]
  %v55 = vld [vmem:[%s0 + $0x108] sm:$0xff]
  %v56 = vld [vmem:[%s0 + $0x110] sm:$0xff]
  %v57 = vld [vmem:[%s0 + $0x118] sm:$0xff]
  %v58 = vld [vmem:[%s0 + $0x120] sm:$0xff]
  %v59 = vld [vmem:[%s0 + $0x128] sm:$0xff]
  %v60 = vld [vmem:[%s0 + $0x130] sm:$0xff]
  %v61 = vld [vmem:[%s0 + $0x138] sm:$0xff]
  %v62 = vld [vmem:[%s0 + $0x140] sm:$0xff]
  %v63 = vld [vmem:[%s0 + $0x148] sm:$0xff]
  %v64 = vld [vmem:[%s0 + $0x150] sm:$0xff]
  %v65 = vld [vmem:[%s0 + $0x158] sm:$0xff]
  %v66 = vld [vmem:[%s0 + $0x160] sm:$0xff]
  %v67 = vld [vmem:[%s0 + $0x168] sm:$0xff]
  %v68 = vld [vmem:[%s0 + $0x170] sm:$0xff]
  %v69 = vld [vmem:[%s0 + $0x178] sm:$0xff]
  %v70 = vld [vmem:[%s0 + $0x180] sm:$0x33]
  %v71 = vld [vmem:[%s0 + $0x188] sm:$0x33]
  %v72 = vld [vmem:[%s2] sm:$0xff]
  %74 = vset.pattern.permute.xlu0 0
  %75 = vperm.xlu0 %74, %v72
  %v76 = vpop.permute.xlu0 %75
  %v79 = vunpack.c.l.b16 %v21
  %v80 = vunpack.c.h.b16 %v21
  %v81 = vpack.c.b16 %v79, %v79
  %v82 = vpack.c.b16 %v80, %v80
  %v134 = vunpack.c.l.b16 %v22
  %v135 = vunpack.c.h.b16 %v22
  %v136 = vunpack.c.l.b16 %v23
  %v137 = vunpack.c.h.b16 %v23
  %v138 = vunpack.c.l.b16 %v24
  %v139 = vunpack.c.h.b16 %v24
  %v140 = vunpack.c.l.b16 %v25
  %v141 = vunpack.c.h.b16 %v25
  %v142 = vunpack.c.l.b16 %v26
  %v143 = vunpack.c.h.b16 %v26
  %v144 = vunpack.c.l.b16 %v27
  %v145 = vunpack.c.h.b16 %v27
  %v146 = vunpack.c.l.b16 %v28
  %v147 = vunpack.c.h.b16 %v28
  %v148 = vunpack.c.l.b16 %v29
  %v149 = vunpack.c.h.b16 %v29
  %v150 = vunpack.c.l.b16 %v30
  %v151 = vunpack.c.h.b16 %v30
  %v152 = vunpack.c.l.b16 %v31
  %v153 = vunpack.c.h.b16 %v31
  %v154 = vunpack.c.l.b16 %v32
  %v155 = vunpack.c.h.b16 %v32
  %v156 = vunpack.c.l.b16 %v33
  %v157 = vunpack.c.h.b16 %v33
  %v158 = vunpack.c.l.b16 %v34
  %v159 = vunpack.c.h.b16 %v34
  %v160 = vunpack.c.l.b16 %v35
  %v161 = vunpack.c.h.b16 %v35
  %v162 = vunpack.c.l.b16 %v36
  %v163 = vunpack.c.h.b16 %v36
  %v164 = vunpack.c.l.b16 %v37
  %v165 = vunpack.c.h.b16 %v37
  %v166 = vunpack.c.l.b16 %v38
  %v167 = vunpack.c.h.b16 %v38
  %v168 = vunpack.c.l.b16 %v39
  %v169 = vunpack.c.h.b16 %v39
  %v170 = vunpack.c.l.b16 %v40
  %v171 = vunpack.c.h.b16 %v40
  %v172 = vunpack.c.l.b16 %v41
  %v173 = vunpack.c.h.b16 %v41
  %v174 = vunpack.c.l.b16 %v42
  %v175 = vunpack.c.h.b16 %v42
  %v176 = vunpack.c.l.b16 %v43
  %v177 = vunpack.c.h.b16 %v43
  %v178 = vunpack.c.l.b16 %v44
  %v179 = vunpack.c.h.b16 %v44
  %v180 = vunpack.c.l.b16 %v45
  %v181 = vunpack.c.h.b16 %v45
  %v182 = vunpack.c.l.b16 %v46
  %v183 = vunpack.c.h.b16 %v46
  %v184 = vunpack.c.l.b16 %v47
  %v185 = vunpack.c.h.b16 %v47
  %v186 = vunpack.c.l.b16 %v48
  %v187 = vunpack.c.h.b16 %v48
  %v188 = vunpack.c.l.b16 %v49
  %v189 = vunpack.c.h.b16 %v49
  %v190 = vunpack.c.l.b16 %v50
  %v191 = vunpack.c.h.b16 %v50
  %v192 = vunpack.c.l.b16 %v51
  %v193 = vunpack.c.h.b16 %v51
  %v194 = vunpack.c.l.b16 %v52
  %v195 = vunpack.c.h.b16 %v52
  %v196 = vunpack.c.l.b16 %v53
  %v197 = vunpack.c.h.b16 %v53
  %v198 = vunpack.c.l.b16 %v54
  %v199 = vunpack.c.h.b16 %v54
  %v200 = vunpack.c.l.b16 %v55
  %v201 = vunpack.c.h.b16 %v55
  %v202 = vunpack.c.l.b16 %v56
  %v203 = vunpack.c.h.b16 %v56
  %v204 = vunpack.c.l.b16 %v57
  %v205 = vunpack.c.h.b16 %v57
  %v206 = vunpack.c.l.b16 %v58
  %v207 = vunpack.c.h.b16 %v58
  %v208 = vunpack.c.l.b16 %v59
  %v209 = vunpack.c.h.b16 %v59
  %v210 = vunpack.c.l.b16 %v60
  %v211 = vunpack.c.h.b16 %v60
  %v212 = vunpack.c.l.b16 %v61
  %v213 = vunpack.c.h.b16 %v61
  %v214 = vunpack.c.l.b16 %v62
  %v215 = vunpack.c.h.b16 %v62
  %v216 = vunpack.c.l.b16 %v63
  %v217 = vunpack.c.h.b16 %v63
  %v218 = vunpack.c.l.b16 %v64
  %v219 = vunpack.c.h.b16 %v64
  %v220 = vunpack.c.l.b16 %v65
  %v221 = vunpack.c.h.b16 %v65
  %v222 = vunpack.c.l.b16 %v66
  %v223 = vunpack.c.h.b16 %v66
  %v224 = vunpack.c.l.b16 %v67
  %v225 = vunpack.c.h.b16 %v67
  %v226 = vunpack.c.l.b16 %v68
  %v227 = vunpack.c.h.b16 %v68
  %v228 = vunpack.c.l.b16 %v69
  %v229 = vunpack.c.h.b16 %v69
  %v230 = vunpack.c.l.b16 %v70
  %v231 = vunpack.c.h.b16 %v70
  %v232 = vunpack.c.l.b16 %v71
  %v233 = vunpack.c.h.b16 %v71
  %v234 = vpack.c.b16 %v138, %v134
  %v235 = vpack.c.b16 %v139, %v135
  %v236 = vpack.c.b16 %v140, %v136
  %v237 = vpack.c.b16 %v141, %v137
  %v238 = vpack.c.b16 %v146, %v142
  %v239 = vpack.c.b16 %v147, %v143
  %v240 = vpack.c.b16 %v148, %v144
  %v241 = vpack.c.b16 %v149, %v145
  %v242 = vpack.c.b16 %v154, %v150
  %v243 = vpack.c.b16 %v155, %v151
  %v244 = vpack.c.b16 %v156, %v152
  %v245 = vpack.c.b16 %v157, %v153
  %v246 = vpack.c.b16 %v162, %v158
  %v247 = vpack.c.b16 %v163, %v159
  %v248 = vpack.c.b16 %v164, %v160
  %v249 = vpack.c.b16 %v165, %v161
  %v250 = vpack.c.b16 %v170, %v166
  %v251 = vpack.c.b16 %v171, %v167
  %v252 = vpack.c.b16 %v172, %v168
  %v253 = vpack.c.b16 %v173, %v169
  %v254 = vpack.c.b16 %v178, %v174
  %v255 = vpack.c.b16 %v179, %v175
  %v256 = vpack.c.b16 %v180, %v176
  %v257 = vpack.c.b16 %v181, %v177
  %v258 = vpack.c.b16 %v186, %v182
  %v259 = vpack.c.b16 %v187, %v183
  %v260 = vpack.c.b16 %v188, %v184
  %v261 = vpack.c.b16 %v189, %v185
  %v262 = vpack.c.b16 %v194, %v190
  %v263 = vpack.c.b16 %v195, %v191
  %v264 = vpack.c.b16 %v196, %v192
  %v265 = vpack.c.b16 %v197, %v193
  %v266 = vpack.c.b16 %v202, %v198
  %v267 = vpack.c.b16 %v203, %v199
  %v268 = vpack.c.b16 %v204, %v200
  %v269 = vpack.c.b16 %v205, %v201
  %v270 = vpack.c.b16 %v210, %v206
  %v271 = vpack.c.b16 %v211, %v207
  %v272 = vpack.c.b16 %v212, %v208
  %v273 = vpack.c.b16 %v213, %v209
  %v274 = vpack.c.b16 %v218, %v214
  %v275 = vpack.c.b16 %v219, %v215
  %v276 = vpack.c.b16 %v220, %v216
  %v277 = vpack.c.b16 %v221, %v217
  %v278 = vpack.c.b16 %v226, %v222
  %v279 = vpack.c.b16 %v227, %v223
  %v280 = vpack.c.b16 %v228, %v224
  %v281 = vpack.c.b16 %v229, %v225
  %v282 = vpack.c.b16 %v230, %v230
  %v283 = vpack.c.b16 %v231, %v231
  %v284 = vpack.c.b16 %v232, %v232
  %v285 = vpack.c.b16 %v233, %v233
  %vm334 = vcmask 556032
  %v336 = vsel %vm334, %v82, 0
  %vm338 = vcmask 1041408
  %v340 = vsel %vm338, %v282, 0
  %v343 = vsel %vm338, %v283, 0
  %v346 = vsel %vm338, %v284, 0
  %v349 = vsel %vm338, %v285, 0
  %351 = vmatpush.bf16.msra.mxu0 %v262
  %352 = vmatpush.bf16.msra.mxu0 %v258
  %353 = vmatpush.bf16.msra.mxu0 %v254
  %354 = vmatpush.bf16.msra.mxu0 %v250
  %355 = vmatpush.bf16.msra.mxu0 %v246
  %356 = vmatpush.bf16.msra.mxu0 %v242
  %357 = vmatpush.bf16.msra.mxu0 %v238
  %358 = vmatpush.bf16.msra.mxu0 %v234
  %359 = vmatmul.bf16.gmra.mxu0 %v81
  %v360 = vpop.f32.mrf.mxu0
  %v361 = vadd.f32 %v76, %v360
  %v362 = vpop.f32.mrf.mxu0
  %363 = vdwg.mxu0
  %364 = vmatpush.bf16.msra.mxu0 0
  %365 = vmatpush.bf16.msra.mxu0 0
  %366 = vmatpush.bf16.msra.mxu0 0
  %367 = vmatpush.bf16.msra.mxu0 %v340
  %368 = vmatpush.bf16.msra.mxu0 %v278
  %369 = vmatpush.bf16.msra.mxu0 %v274
  %370 = vmatpush.bf16.msra.mxu0 %v270
  %371 = vmatpush.bf16.msra.mxu0 %v266
  %372 = vmatmul.bf16.gmra.mxu0 %v336
  %v373 = vpop.f32.mrf.mxu0
  %v374 = vadd.f32 %v361, %v373
  %v375 = vpop.f32.mrf.mxu0
  %376 = vdwg.mxu0
  %377 = vmatpush.bf16.msra.mxu0 %v263
  %378 = vmatpush.bf16.msra.mxu0 %v259
  %379 = vmatpush.bf16.msra.mxu0 %v255
  %380 = vmatpush.bf16.msra.mxu0 %v251
  %381 = vmatpush.bf16.msra.mxu0 %v247
  %382 = vmatpush.bf16.msra.mxu0 %v243
  %383 = vmatpush.bf16.msra.mxu0 %v239
  %384 = vmatpush.bf16.msra.mxu0 %v235
  %385 = vmatmul.bf16.gmra.mxu0 %v81
  %v386 = vpop.f32.mrf.mxu0
  %v387 = vadd.f32 %v76, %v386
  %v388 = vpop.f32.mrf.mxu0
  %389 = vdwg.mxu0
  %390 = vmatpush.bf16.msra.mxu0 0
  %391 = vmatpush.bf16.msra.mxu0 0
  %392 = vmatpush.bf16.msra.mxu0 0
  %393 = vmatpush.bf16.msra.mxu0 %v343
  %394 = vmatpush.bf16.msra.mxu0 %v279
  %395 = vmatpush.bf16.msra.mxu0 %v275
  %396 = vmatpush.bf16.msra.mxu0 %v271
  %397 = vmatpush.bf16.msra.mxu0 %v267
  %398 = vmatmul.bf16.gmra.mxu0 %v336
  %v399 = vpop.f32.mrf.mxu0
  %v400 = vadd.f32 %v387, %v399
  %v401 = vpop.f32.mrf.mxu0
  %402 = vdwg.mxu0
  %403 = vmatpush.bf16.msra.mxu0 %v264
  %404 = vmatpush.bf16.msra.mxu0 %v260
  %405 = vmatpush.bf16.msra.mxu0 %v256
  %406 = vmatpush.bf16.msra.mxu0 %v252
  %407 = vmatpush.bf16.msra.mxu0 %v248
  %408 = vmatpush.bf16.msra.mxu0 %v244
  %409 = vmatpush.bf16.msra.mxu0 %v240
  %410 = vmatpush.bf16.msra.mxu0 %v236
  %411 = vmatmul.bf16.gmra.mxu0 %v81
  %v412 = vpop.f32.mrf.mxu0
  %v413 = vadd.f32 %v76, %v412
  %v414 = vpop.f32.mrf.mxu0
  %415 = vdwg.mxu0
  %416 = vmatpush.bf16.msra.mxu0 0
  %417 = vmatpush.bf16.msra.mxu0 0
  %418 = vmatpush.bf16.msra.mxu0 0
  %419 = vmatpush.bf16.msra.mxu0 %v346
  %420 = vmatpush.bf16.msra.mxu0 %v280
  %421 = vmatpush.bf16.msra.mxu0 %v276
  %422 = vmatpush.bf16.msra.mxu0 %v272
  %423 = vmatpush.bf16.msra.mxu0 %v268
  %424 = vmatmul.bf16.gmra.mxu0 %v336
  %v425 = vpop.f32.mrf.mxu0
  %v426 = vadd.f32 %v413, %v425
  %v427 = vpop.f32.mrf.mxu0
  %428 = vdwg.mxu0
  %429 = vmatpush.bf16.msra.mxu0 %v265
  %430 = vmatpush.bf16.msra.mxu0 %v261
  %431 = vmatpush.bf16.msra.mxu0 %v257
  %432 = vmatpush.bf16.msra.mxu0 %v253
  %433 = vmatpush.bf16.msra.mxu0 %v249
  %434 = vmatpush.bf16.msra.mxu0 %v245
  %435 = vmatpush.bf16.msra.mxu0 %v241
  %436 = vmatpush.bf16.msra.mxu0 %v237
  %437 = vmatmul.bf16.gmra.mxu0 %v81
  %v438 = vpop.f32.mrf.mxu0
  %v439 = vadd.f32 %v76, %v438
  %v440 = vpop.f32.mrf.mxu0
  %441 = vdwg.mxu0
  %442 = vmatpush.bf16.msra.mxu0 0
  %443 = vmatpush.bf16.msra.mxu0 0
  %444 = vmatpush.bf16.msra.mxu0 0
  %445 = vmatpush.bf16.msra.mxu0 %v349
  %446 = vmatpush.bf16.msra.mxu0 %v281
  %447 = vmatpush.bf16.msra.mxu0 %v277
  %448 = vmatpush.bf16.msra.mxu0 %v273
  %449 = vmatpush.bf16.msra.mxu0 %v269
  %450 = vmatmul.bf16.gmra.mxu0 %v336
  %v451 = vpop.f32.mrf.mxu0
  %v452 = vadd.f32 %v439, %v451
  %v453 = vpop.f32.mrf.mxu0
  %454 = vdwg.mxu0
  %v455 = vadd.f32 %v374, %v400
  %v456 = vadd.f32 %v455, %v426
  %v457 = vadd.f32 %v456, %v452
  %458 = vadd.xlane.f32.xlu0 %v457
  %v459 = vpop.xlane.xlu0 %458
  %v460 = vrcp.pop 512.0
  %v461 = vmul.f32 512.0, %v460
  %v462 = vsub.f32 1.0, %v461
  %v463 = vmul.f32 %v460, %v462
  %v464 = vadd.f32 %v460, %v463
  %vm465 = vweird.f32 %v460
  %v466 = vsel %vm465, %v460, %v464
  %v467 = vmul.f32 %v459, %v466
  %v468 = vsub.f32 %v374, %v467
  %v469 = vsub.f32 %v400, %v467
  %v470 = vsub.f32 %v426, %v467
  %v471 = vsub.f32 %v452, %v467
  %v472 = vmul.f32 %v468, %v468
  %v473 = vmul.f32 %v469, %v469
  %v474 = vmul.f32 %v470, %v470
  %v475 = vmul.f32 %v471, %v471
  %v476 = vadd.f32 %v472, %v473
  %v477 = vadd.f32 %v476, %v474
  %v478 = vadd.f32 %v477, %v475
  %479 = vadd.xlane.f32.xlu0 %v478
  %v480 = vpop.xlane.xlu0 %479
  %v481 = vmul.f32 %v480, %v466
  %v482 = vld [vmem:[%s3] sm:$0xff]
  %v483 = vadd.f32 %v481, 1e-05
  %v484 = vrsqrt.pop %v483
  %v485 = vmul.f32 %v484, %v483
  %v486 = vmul.f32 %v485, %v484
  %v487 = vmul.f32 0.5, %v486
  %v488 = vsub.f32 1.5, %v487
  %v489 = vmul.f32 %v484, %v488
  %vm490 = vweird.f32 %v483
  %vm491 = vweird.f32 %v484
  %vm492 = vmor %vm490, %vm491
  %v493 = vsel %vm492, %v484, %v489
  %v494 = vmul.f32 %v482, %v493
  %v495 = vld [vmem:[%s4] sm:$0xff]
  %v496 = vmul.f32 %v467, %v494
  %v497 = vsub.f32 %v495, %v496
  %499 = vset.pattern.permute.xlu0 0
  %500 = vperm.xlu0 %499, %v494
  %v501 = vpop.permute.xlu0 %500
  %v503 = vmul.f32 %v374, %v501
  %v504 = vmul.f32 %v400, %v501
  %v505 = vmul.f32 %v426, %v501
  %v506 = vmul.f32 %v452, %v501
  %508 = vset.pattern.permute.xlu0 0
  %509 = vperm.xlu0 %508, %v497
  %v510 = vpop.permute.xlu0 %509
  %v512 = vadd.f32 %v503, %v510
  %v513 = vadd.f32 %v504, %v510
  %v514 = vadd.f32 %v505, %v510
  %v515 = vadd.f32 %v506, %v510
  %v516 = vmax.f32 %v512, 0.0
  %v517 = vmax.f32 %v513, 0.0
  %v518 = vmax.f32 %v514, 0.0
  %v519 = vmax.f32 %v515, 0.0
  %520 = vst [vmem:[%s5] sm:$0xff] %v516
  %521 = vst [vmem:[%s5 + $0x8] sm:$0xff] %v517
  %522 = vst [vmem:[%s5 + $0x10] sm:$0xff] %v518
  %523 = vst [vmem:[%s5 + $0x18] sm:$0xff] %v519
  // Predicated region
  $region22: #{simple_conv_forward.15} parent=0 // pred_check
    _
  $region23: #{simple_conv_forward.15} parent=0 // pred_check_branch
    %525 = sbr.rel (0) target = $region25
  $region24: #{simple_conv_forward.15} parent=0 // pred_region
    _
  $region25: #{simple_conv_forward.15} parent=0 // pred_fallthru
    _
  // Predicated region
  $region26: #{simple_conv_forward.15} parent=0 // pred_check
    _
  $region27: #{simple_conv_forward.15} parent=0 // pred_check_branch
    %527 = sbr.rel (0) target = $region29
  $region28: #{simple_conv_forward.15} parent=0 // pred_region
    _
  $region29: #{simple_conv_forward.15} parent=0 // pred_fallthru
    _

// kernel: simple_conv_forward.16
$region0: #{simple_conv_forward.16}
  #allocation0 [shape = 'u32[]', space=smem, size = 0x4, offset = 0x4, fixed_abs, tag = 'smem constant byte address 0x4 - core index']
  #allocation1 [shape = 'u32[72,128]{1,0:T(1,128)}', space=vmem, size = 0x9000, scoped, tag = 'internal scratch']
  %s0 = inlined_call_operand.vmem [shape: bf16[392,512], index: 0, kind: input, shape index: {}]
  %s1 = inlined_call_operand.vmem [shape: bf16[8,392], index: 1, kind: input, shape index: {}]
  %s2 = inlined_call_operand.vmem [shape: f32[8,1], index: 2, kind: input, shape index: {}]
  %s3 = inlined_call_operand.vmem [shape: f32[8,1], index: 3, kind: input, shape index: {}]
  %s4 = inlined_call_operand.vmem [shape: f32[8,1], index: 4, kind: input, shape index: {}]
  %s5 = inlined_call_operand.vmem [shape: f32[8,512], index: 5, kind: output, shape index: {}]
  %s6 = sld [smem:[#allocation0]]
  $region30: #{simple_conv_forward.16} parent=0
    _
  %s8 = ssub.s32 1, %s6
  %s9 = scalar_select 0, %s8, %s6
  // Predicated region
  $region2: #{simple_conv_forward.16} parent=0 // pred_check
    _
  $region3: #{simple_conv_forward.16} parent=0 // pred_check_branch
    %11 = sbr.rel (0) target = $region5
  $region4: #{simple_conv_forward.16} parent=0 // pred_region
    _
  $region5: #{simple_conv_forward.16} parent=0 // pred_fallthru
    _
  // Predicated region
  $region6: #{simple_conv_forward.16} parent=0 // pred_check
    _
  $region7: #{simple_conv_forward.16} parent=0 // pred_check_branch
    %13 = sbr.rel (0) target = $region9
  $region8: #{simple_conv_forward.16} parent=0 // pred_region
    _
  $region9: #{simple_conv_forward.16} parent=0 // pred_fallthru
    _
  // Predicated region
  $region10: #{simple_conv_forward.16} parent=0 // pred_check
    _
  $region11: #{simple_conv_forward.16} parent=0 // pred_check_branch
    %15 = sbr.rel (0) target = $region13
  $region12: #{simple_conv_forward.16} parent=0 // pred_region
    _
  $region13: #{simple_conv_forward.16} parent=0 // pred_fallthru
    _
  // Predicated region
  $region14: #{simple_conv_forward.16} parent=0 // pred_check
    _
  $region15: #{simple_conv_forward.16} parent=0 // pred_check_branch
    %17 = sbr.rel (0) target = $region17
  $region16: #{simple_conv_forward.16} parent=0 // pred_region
    _
  $region17: #{simple_conv_forward.16} parent=0 // pred_fallthru
    _
  // Predicated region
  $region18: #{simple_conv_forward.16} parent=0 // pred_check
    _
  $region19: #{simple_conv_forward.16} parent=0 // pred_check_branch
    %19 = sbr.rel (0) target = $region21
  $region20: #{simple_conv_forward.16} parent=0 // pred_region
    _
  $region21: #{simple_conv_forward.16} parent=0 // pred_fallthru
    _
  %v21 = vld [vmem:[%s1] sm:$0xff]
  %v22 = vld [vmem:[%s1 + $0x8] sm:$0xff]
  %v23 = vld [vmem:[%s0] sm:$0xff]
  %v24 = vld [vmem:[%s0 + $0x8] sm:$0xff]
  %v25 = vld [vmem:[%s0 + $0x10] sm:$0xff]
  %v26 = vld [vmem:[%s0 + $0x18] sm:$0xff]
  %v27 = vld [vmem:[%s0 + $0x20] sm:$0xff]
  %v28 = vld [vmem:[%s0 + $0x28] sm:$0xff]
  %v29 = vld [vmem:[%s0 + $0x30] sm:$0xff]
  %v30 = vld [vmem:[%s0 + $0x38] sm:$0xff]
  %v31 = vld [vmem:[%s0 + $0x40] sm:$0xff]
  %v32 = vld [vmem:[%s0 + $0x48] sm:$0xff]
  %v33 = vld [vmem:[%s0 + $0x50] sm:$0xff]
  %v34 = vld [vmem:[%s0 + $0x58] sm:$0xff]
  %v35 = vld [vmem:[%s0 + $0x60] sm:$0xff]
  %v36 = vld [vmem:[%s0 + $0x68] sm:$0xff]
  %v37 = vld [vmem:[%s0 + $0x70] sm:$0xff]
  %v38 = vld [vmem:[%s0 + $0x78] sm:$0xff]
  %v39 = vld [vmem:[%s0 + $0x80] sm:$0xff]
  %v40 = vld [vmem:[%s0 + $0x88] sm:$0xff]
  %v41 = vld [vmem:[%s0 + $0x90] sm:$0xff]
  %v42 = vld [vmem:[%s0 + $0x98] sm:$0xff]
  %v43 = vld [vmem:[%s0 + $0xa0] sm:$0xff]
  %v44 = vld [vmem:[%s0 + $0xa8] sm:$0xff]
  %v45 = vld [vmem:[%s0 + $0xb0] sm:$0xff]
  %v46 = vld [vmem:[%s0 + $0xb8] sm:$0xff]
  %v47 = vld [vmem:[%s0 + $0xc0] sm:$0xff]
  %v48 = vld [vmem:[%s0 + $0xc8] sm:$0xff]
  %v49 = vld [vmem:[%s0 + $0xd0] sm:$0xff]
  %v50 = vld [vmem:[%s0 + $0xd8] sm:$0xff]
  %v51 = vld [vmem:[%s0 + $0xe0] sm:$0xff]
  %v52 = vld [vmem:[%s0 + $0xe8] sm:$0xff]
  %v53 = vld [vmem:[%s0 + $0xf0] sm:$0xff]
  %v54 = vld [vmem:[%s0 + $0xf8] sm:$0xff]
  %v55 = vld [vmem:[%s0 + $0x100] sm:$0xff]
  %v56 = vld [vmem:[%s0 + $0x108] sm:$0xff]
  %v57 = vld [vmem:[%s0 + $0x110] sm:$0xff]
  %v58 = vld [vmem:[%s0 + $0x118] sm:$0xff]
  %v59 = vld [vmem:[%s0 + $0x120] sm:$0xff]
  %v60 = vld [vmem:[%s0 + $0x128] sm:$0xff]
  %v61 = vld [vmem:[%s0 + $0x130] sm:$0xff]
  %v62 = vld [vmem:[%s0 + $0x138] sm:$0xff]
  %v63 = vld [vmem:[%s0 + $0x140] sm:$0xff]
  %v64 = vld [vmem:[%s0 + $0x148] sm:$0xff]
  %v65 = vld [vmem:[%s0 + $0x150] sm:$0xff]
  %v66 = vld [vmem:[%s0 + $0x158] sm:$0xff]
  %v67 = vld [vmem:[%s0 + $0x160] sm:$0xff]
  %v68 = vld [vmem:[%s0 + $0x168] sm:$0xff]
  %v69 = vld [vmem:[%s0 + $0x170] sm:$0xff]
  %v70 = vld [vmem:[%s0 + $0x178] sm:$0xff]
  %v71 = vld [vmem:[%s0 + $0x180] sm:$0xff]
  %v72 = vld [vmem:[%s0 + $0x188] sm:$0xff]
  %v73 = vld [vmem:[%s0 + $0x190] sm:$0xff]
  %v74 = vld [vmem:[%s0 + $0x198] sm:$0xff]
  %v75 = vld [vmem:[%s0 + $0x1a0] sm:$0xff]
  %v76 = vld [vmem:[%s0 + $0x1a8] sm:$0xff]
  %v77 = vld [vmem:[%s0 + $0x1b0] sm:$0xff]
  %v78 = vld [vmem:[%s0 + $0x1b8] sm:$0xff]
  %v79 = vld [vmem:[%s0 + $0x1c0] sm:$0xff]
  %v80 = vld [vmem:[%s0 + $0x1c8] sm:$0xff]
  %v81 = vld [vmem:[%s0 + $0x1d0] sm:$0xff]
  %v82 = vld [vmem:[%s0 + $0x1d8] sm:$0xff]
  %v83 = vld [vmem:[%s0 + $0x1e0] sm:$0xff]
  %v84 = vld [vmem:[%s0 + $0x1e8] sm:$0xff]
  %v85 = vld [vmem:[%s0 + $0x1f0] sm:$0xff]
  %v86 = vld [vmem:[%s0 + $0x1f8] sm:$0xff]
  %v87 = vld [vmem:[%s0 + $0x200] sm:$0xff]
  %v88 = vld [vmem:[%s0 + $0x208] sm:$0xff]
  %v89 = vld [vmem:[%s0 + $0x210] sm:$0xff]
  %v90 = vld [vmem:[%s0 + $0x218] sm:$0xff]
  %v91 = vld [vmem:[%s0 + $0x220] sm:$0xff]
  %v92 = vld [vmem:[%s0 + $0x228] sm:$0xff]
  %v93 = vld [vmem:[%s0 + $0x230] sm:$0xff]
  %v94 = vld [vmem:[%s0 + $0x238] sm:$0xff]
  %v95 = vld [vmem:[%s0 + $0x240] sm:$0xff]
  %v96 = vld [vmem:[%s0 + $0x248] sm:$0xff]
  %v97 = vld [vmem:[%s0 + $0x250] sm:$0xff]
  %v98 = vld [vmem:[%s0 + $0x258] sm:$0xff]
  %v99 = vld [vmem:[%s0 + $0x260] sm:$0xff]
  %v100 = vld [vmem:[%s0 + $0x268] sm:$0xff]
  %v101 = vld [vmem:[%s0 + $0x270] sm:$0xff]
  %v102 = vld [vmem:[%s0 + $0x278] sm:$0xff]
  %v103 = vld [vmem:[%s0 + $0x280] sm:$0xff]
  %v104 = vld [vmem:[%s0 + $0x288] sm:$0xff]
  %v105 = vld [vmem:[%s0 + $0x290] sm:$0xff]
  %v106 = vld [vmem:[%s0 + $0x298] sm:$0xff]
  %v107 = vld [vmem:[%s0 + $0x2a0] sm:$0xff]
  %v108 = vld [vmem:[%s0 + $0x2a8] sm:$0xff]
  %v109 = vld [vmem:[%s0 + $0x2b0] sm:$0xff]
  %v110 = vld [vmem:[%s0 + $0x2b8] sm:$0xff]
  %v111 = vld [vmem:[%s0 + $0x2c0] sm:$0xff]
  %v112 = vld [vmem:[%s0 + $0x2c8] sm:$0xff]
  %v113 = vld [vmem:[%s0 + $0x2d0] sm:$0xff]
  %v114 = vld [vmem:[%s0 + $0x2d8] sm:$0xff]
  %v115 = vld [vmem:[%s0 + $0x2e0] sm:$0xff]
  %v116 = vld [vmem:[%s0 + $0x2e8] sm:$0xff]
  %v117 = vld [vmem:[%s0 + $0x2f0] sm:$0xff]
  %v118 = vld [vmem:[%s0 + $0x2f8] sm:$0xff]
  %v119 = vld [vmem:[%s0 + $0x300] sm:$0xff]
  %v120 = vld [vmem:[%s0 + $0x308] sm:$0xff]
  %v121 = vld [vmem:[%s2] sm:$0xff]
  %123 = vset.pattern.permute.xlu0 0
  %124 = vperm.xlu0 %123, %v121
  %v125 = vpop.permute.xlu0 %124
  %v129 = vunpack.c.l.b16 %v21
  %v130 = vunpack.c.h.b16 %v21
  %v131 = vunpack.c.l.b16 %v22
  %v132 = vunpack.c.h.b16 %v22
  %v133 = vpack.c.b16 %v129, %v129
  %v134 = vpack.c.b16 %v130, %v130
  %v135 = vpack.c.b16 %v131, %v131
  %v136 = vpack.c.b16 %v132, %v132
  %v238 = vunpack.c.l.b16 %v23
  %v239 = vunpack.c.h.b16 %v23
  %v240 = vunpack.c.l.b16 %v24
  %v241 = vunpack.c.h.b16 %v24
  %v242 = vunpack.c.l.b16 %v25
  %v243 = vunpack.c.h.b16 %v25
  %v244 = vunpack.c.l.b16 %v26
  %v245 = vunpack.c.h.b16 %v26
  %v246 = vunpack.c.l.b16 %v27
  %v247 = vunpack.c.h.b16 %v27
  %v248 = vunpack.c.l.b16 %v28
  %v249 = vunpack.c.h.b16 %v28
  %v250 = vunpack.c.l.b16 %v29
  %v251 = vunpack.c.h.b16 %v29
  %v252 = vunpack.c.l.b16 %v30
  %v253 = vunpack.c.h.b16 %v30
  %v254 = vunpack.c.l.b16 %v31
  %v255 = vunpack.c.h.b16 %v31
  %v256 = vunpack.c.l.b16 %v32
  %v257 = vunpack.c.h.b16 %v32
  %v258 = vunpack.c.l.b16 %v33
  %v259 = vunpack.c.h.b16 %v33
  %v260 = vunpack.c.l.b16 %v34
  %v261 = vunpack.c.h.b16 %v34
  %v262 = vunpack.c.l.b16 %v35
  %v263 = vunpack.c.h.b16 %v35
  %v264 = vunpack.c.l.b16 %v36
  %v265 = vunpack.c.h.b16 %v36
  %v266 = vunpack.c.l.b16 %v37
  %v267 = vunpack.c.h.b16 %v37
  %v268 = vunpack.c.l.b16 %v38
  %v269 = vunpack.c.h.b16 %v38
  %v270 = vunpack.c.l.b16 %v39
  %v271 = vunpack.c.h.b16 %v39
  %v272 = vunpack.c.l.b16 %v40
  %v273 = vunpack.c.h.b16 %v40
  %v274 = vunpack.c.l.b16 %v41
  %v275 = vunpack.c.h.b16 %v41
  %v276 = vunpack.c.l.b16 %v42
  %v277 = vunpack.c.h.b16 %v42
  %v278 = vunpack.c.l.b16 %v43
  %v279 = vunpack.c.h.b16 %v43
  %v280 = vunpack.c.l.b16 %v44
  %v281 = vunpack.c.h.b16 %v44
  %v282 = vunpack.c.l.b16 %v45
  %v283 = vunpack.c.h.b16 %v45
  %v284 = vunpack.c.l.b16 %v46
  %v285 = vunpack.c.h.b16 %v46
  %v286 = vunpack.c.l.b16 %v47
  %v287 = vunpack.c.h.b16 %v47
  %v288 = vunpack.c.l.b16 %v48
  %v289 = vunpack.c.h.b16 %v48
  %v290 = vunpack.c.l.b16 %v49
  %v291 = vunpack.c.h.b16 %v49
  %v292 = vunpack.c.l.b16 %v50
  %v293 = vunpack.c.h.b16 %v50
  %v294 = vunpack.c.l.b16 %v51
  %v295 = vunpack.c.h.b16 %v51
  %v296 = vunpack.c.l.b16 %v52
  %v297 = vunpack.c.h.b16 %v52
  %v298 = vunpack.c.l.b16 %v53
  %v299 = vunpack.c.h.b16 %v53
  %v300 = vunpack.c.l.b16 %v54
  %v301 = vunpack.c.h.b16 %v54
  %v302 = vunpack.c.l.b16 %v55
  %v303 = vunpack.c.h.b16 %v55
  %v304 = vunpack.c.l.b16 %v56
  %v305 = vunpack.c.h.b16 %v56
  %v306 = vunpack.c.l.b16 %v57
  %v307 = vunpack.c.h.b16 %v57
  %v308 = vunpack.c.l.b16 %v58
  %v309 = vunpack.c.h.b16 %v58
  %v310 = vunpack.c.l.b16 %v59
  %v311 = vunpack.c.h.b16 %v59
  %v312 = vunpack.c.l.b16 %v60
  %v313 = vunpack.c.h.b16 %v60
  %v314 = vunpack.c.l.b16 %v61
  %v315 = vunpack.c.h.b16 %v61
  %v316 = vunpack.c.l.b16 %v62
  %v317 = vunpack.c.h.b16 %v62
  %v318 = vunpack.c.l.b16 %v63
  %v319 = vunpack.c.h.b16 %v63
  %v320 = vunpack.c.l.b16 %v64
  %v321 = vunpack.c.h.b16 %v64
  %v322 = vunpack.c.l.b16 %v65
  %v323 = vunpack.c.h.b16 %v65
  %v324 = vunpack.c.l.b16 %v66
  %v325 = vunpack.c.h.b16 %v66
  %v326 = vunpack.c.l.b16 %v67
  %v327 = vunpack.c.h.b16 %v67
  %v328 = vunpack.c.l.b16 %v68
  %v329 = vunpack.c.h.b16 %v68
  %v330 = vunpack.c.l.b16 %v69
  %v331 = vunpack.c.h.b16 %v69
  %v332 = vunpack.c.l.b16 %v70
  %v333 = vunpack.c.h.b16 %v70
  %v334 = vunpack.c.l.b16 %v71
  %v335 = vunpack.c.h.b16 %v71
  %v336 = vunpack.c.l.b16 %v72
  %v337 = vunpack.c.h.b16 %v72
  %v338 = vunpack.c.l.b16 %v73
  %v339 = vunpack.c.h.b16 %v73
  %v340 = vunpack.c.l.b16 %v74
  %v341 = vunpack.c.h.b16 %v74
  %v342 = vunpack.c.l.b16 %v75
  %v343 = vunpack.c.h.b16 %v75
  %v344 = vunpack.c.l.b16 %v76
  %v345 = vunpack.c.h.b16 %v76
  %v346 = vunpack.c.l.b16 %v77
  %v347 = vunpack.c.h.b16 %v77
  %v348 = vunpack.c.l.b16 %v78
  %v349 = vunpack.c.h.b16 %v78
  %v350 = vunpack.c.l.b16 %v79
  %v351 = vunpack.c.h.b16 %v79
  %v352 = vunpack.c.l.b16 %v80
  %v353 = vunpack.c.h.b16 %v80
  %v354 = vunpack.c.l.b16 %v81
  %v355 = vunpack.c.h.b16 %v81
  %v356 = vunpack.c.l.b16 %v82
  %v357 = vunpack.c.h.b16 %v82
  %v358 = vunpack.c.l.b16 %v83
  %v359 = vunpack.c.h.b16 %v83
  %v360 = vunpack.c.l.b16 %v84
  %v361 = vunpack.c.h.b16 %v84
  %v362 = vunpack.c.l.b16 %v85
  %v363 = vunpack.c.h.b16 %v85
  %v364 = vunpack.c.l.b16 %v86
  %v365 = vunpack.c.h.b16 %v86
  %v366 = vunpack.c.l.b16 %v87
  %v367 = vunpack.c.h.b16 %v87
  %v368 = vunpack.c.l.b16 %v88
  %v369 = vunpack.c.h.b16 %v88
  %v370 = vunpack.c.l.b16 %v89
  %v371 = vunpack.c.h.b16 %v89
  %v372 = vunpack.c.l.b16 %v90
  %v373 = vunpack.c.h.b16 %v90
  %v374 = vunpack.c.l.b16 %v91
  %v375 = vunpack.c.h.b16 %v91
  %v376 = vunpack.c.l.b16 %v92
  %v377 = vunpack.c.h.b16 %v92
  %v378 = vunpack.c.l.b16 %v93
  %v379 = vunpack.c.h.b16 %v93
  %v380 = vunpack.c.l.b16 %v94
  %v381 = vunpack.c.h.b16 %v94
  %v382 = vunpack.c.l.b16 %v95
  %v383 = vunpack.c.h.b16 %v95
  %v384 = vunpack.c.l.b16 %v96
  %v385 = vunpack.c.h.b16 %v96
  %v386 = vunpack.c.l.b16 %v97
  %v387 = vunpack.c.h.b16 %v97
  %v388 = vunpack.c.l.b16 %v98
  %v389 = vunpack.c.h.b16 %v98
  %v390 = vunpack.c.l.b16 %v99
  %v391 = vunpack.c.h.b16 %v99
  %v392 = vunpack.c.l.b16 %v100
  %v393 = vunpack.c.h.b16 %v100
  %v394 = vunpack.c.l.b16 %v101
  %v395 = vunpack.c.h.b16 %v101
  %v396 = vunpack.c.l.b16 %v102
  %v397 = vunpack.c.h.b16 %v102
  %v398 = vunpack.c.l.b16 %v103
  %v399 = vunpack.c.h.b16 %v103
  %v400 = vunpack.c.l.b16 %v104
  %v401 = vunpack.c.h.b16 %v104
  %v402 = vunpack.c.l.b16 %v105
  %v403 = vunpack.c.h.b16 %v105
  %v404 = vunpack.c.l.b16 %v106
  %v405 = vunpack.c.h.b16 %v106
  %v406 = vunpack.c.l.b16 %v107
  %v407 = vunpack.c.h.b16 %v107
  %v408 = vunpack.c.l.b16 %v108
  %v409 = vunpack.c.h.b16 %v108
  %v410 = vunpack.c.l.b16 %v109
  %v411 = vunpack.c.h.b16 %v109
  %v412 = vunpack.c.l.b16 %v110
  %v413 = vunpack.c.h.b16 %v110
  %v414 = vunpack.c.l.b16 %v111
  %v415 = vunpack.c.h.b16 %v111
  %v416 = vunpack.c.l.b16 %v112
  %v417 = vunpack.c.h.b16 %v112
  %v418 = vunpack.c.l.b16 %v113
  %v419 = vunpack.c.h.b16 %v113
  %v420 = vunpack.c.l.b16 %v114
  %v421 = vunpack.c.h.b16 %v114
  %v422 = vunpack.c.l.b16 %v115
  %v423 = vunpack.c.h.b16 %v115
  %v424 = vunpack.c.l.b16 %v116
  %v425 = vunpack.c.h.b16 %v116
  %v426 = vunpack.c.l.b16 %v117
  %v427 = vunpack.c.h.b16 %v117
  %v428 = vunpack.c.l.b16 %v118
  %v429 = vunpack.c.h.b16 %v118
  %v430 = vunpack.c.l.b16 %v119
  %v431 = vunpack.c.h.b16 %v119
  %v432 = vunpack.c.l.b16 %v120
  %v433 = vunpack.c.h.b16 %v120
  %v434 = vpack.c.b16 %v242, %v238
  %v435 = vpack.c.b16 %v243, %v239
  %v436 = vpack.c.b16 %v244, %v240
  %v437 = vpack.c.b16 %v245, %v241
  %v438 = vpack.c.b16 %v250, %v246
  %v439 = vpack.c.b16 %v251, %v247
  %v440 = vpack.c.b16 %v252, %v248
  %v441 = vpack.c.b16 %v253, %v249
  %v442 = vpack.c.b16 %v258, %v254
  %v443 = vpack.c.b16 %v259, %v255
  %v444 = vpack.c.b16 %v260, %v256
  %v445 = vpack.c.b16 %v261, %v257
  %v446 = vpack.c.b16 %v266, %v262
  %v447 = vpack.c.b16 %v267, %v263
  %v448 = vpack.c.b16 %v268, %v264
  %v449 = vpack.c.b16 %v269, %v265
  %v450 = vpack.c.b16 %v274, %v270
  %v451 = vpack.c.b16 %v275, %v271
  %v452 = vpack.c.b16 %v276, %v272
  %v453 = vpack.c.b16 %v277, %v273
  %v454 = vpack.c.b16 %v282, %v278
  %v455 = vpack.c.b16 %v283, %v279
  %v456 = vpack.c.b16 %v284, %v280
  %v457 = vpack.c.b16 %v285, %v281
  %v458 = vpack.c.b16 %v290, %v286
  %v459 = vpack.c.b16 %v291, %v287
  %v460 = vpack.c.b16 %v292, %v288
  %v461 = vpack.c.b16 %v293, %v289
  %v462 = vpack.c.b16 %v298, %v294
  %v463 = vpack.c.b16 %v299, %v295
  %v464 = vpack.c.b16 %v300, %v296
  %v465 = vpack.c.b16 %v301, %v297
  %v466 = vpack.c.b16 %v306, %v302
  %v467 = vpack.c.b16 %v307, %v303
  %v468 = vpack.c.b16 %v308, %v304
  %v469 = vpack.c.b16 %v309, %v305
  %v470 = vpack.c.b16 %v314, %v310
  %v471 = vpack.c.b16 %v315, %v311
  %v472 = vpack.c.b16 %v316, %v312
  %v473 = vpack.c.b16 %v317, %v313
  %v474 = vpack.c.b16 %v322, %v318
  %v475 = vpack.c.b16 %v323, %v319
  %v476 = vpack.c.b16 %v324, %v320
  %v477 = vpack.c.b16 %v325, %v321
  %v478 = vpack.c.b16 %v330, %v326
  %v479 = vpack.c.b16 %v331, %v327
  %v480 = vpack.c.b16 %v332, %v328
  %v481 = vpack.c.b16 %v333, %v329
  %v482 = vpack.c.b16 %v338, %v334
  %v483 = vpack.c.b16 %v339, %v335
  %v484 = vpack.c.b16 %v340, %v336
  %v485 = vpack.c.b16 %v341, %v337
  %v486 = vpack.c.b16 %v346, %v342
  %v487 = vpack.c.b16 %v347, %v343
  %v488 = vpack.c.b16 %v348, %v344
  %v489 = vpack.c.b16 %v349, %v345
  %v490 = vpack.c.b16 %v354, %v350
  %v491 = vpack.c.b16 %v355, %v351
  %v492 = vpack.c.b16 %v356, %v352
  %v493 = vpack.c.b16 %v357, %v353
  %v494 = vpack.c.b16 %v362, %v358
  %v495 = vpack.c.b16 %v363, %v359
  %v496 = vpack.c.b16 %v364, %v360
  %v497 = vpack.c.b16 %v365, %v361
  %v498 = vpack.c.b16 %v370, %v366
  %v499 = vpack.c.b16 %v371, %v367
  %v500 = vpack.c.b16 %v372, %v368
  %v501 = vpack.c.b16 %v373, %v369
  %v502 = vpack.c.b16 %v378, %v374
  %v503 = vpack.c.b16 %v379, %v375
  %v504 = vpack.c.b16 %v380, %v376
  %v505 = vpack.c.b16 %v381, %v377
  %v506 = vpack.c.b16 %v386, %v382
  %v507 = vpack.c.b16 %v387, %v383
  %v508 = vpack.c.b16 %v388, %v384
  %v509 = vpack.c.b16 %v389, %v385
  %v510 = vpack.c.b16 %v394, %v390
  %v511 = vpack.c.b16 %v395, %v391
  %v512 = vpack.c.b16 %v396, %v392
  %v513 = vpack.c.b16 %v397, %v393
  %v514 = vpack.c.b16 %v402, %v398
  %v515 = vpack.c.b16 %v403, %v399
  %v516 = vpack.c.b16 %v404, %v400
  %v517 = vpack.c.b16 %v405, %v401
  %v518 = vpack.c.b16 %v410, %v406
  %v519 = vpack.c.b16 %v411, %v407
  %v520 = vpack.c.b16 %v412, %v408
  %v521 = vpack.c.b16 %v413, %v409
  %v522 = vpack.c.b16 %v418, %v414
  %v523 = vpack.c.b16 %v419, %v415
  %v524 = vpack.c.b16 %v420, %v416
  %v525 = vpack.c.b16 %v421, %v417
  %v526 = vpack.c.b16 %v426, %v422
  %v527 = vpack.c.b16 %v427, %v423
  %v528 = vpack.c.b16 %v428, %v424
  %v529 = vpack.c.b16 %v429, %v425
  %v530 = vpack.c.b16 %v430, %v430
  %v531 = vpack.c.b16 %v431, %v431
  %v532 = vpack.c.b16 %v432, %v432
  %v533 = vpack.c.b16 %v433, %v433
  %vm630 = vcmask 64512
  %v632 = vsel %vm630, %v136, 0
  %vm634 = vcmask 1043456
  %v636 = vsel %vm634, %v530, 0
  %v639 = vsel %vm634, %v531, 0
  %v642 = vsel %vm634, %v532, 0
  %v645 = vsel %vm634, %v533, 0
  %647 = vmatpush.bf16.msra.mxu0 %v462
  %648 = vmatpush.bf16.msra.mxu0 %v458
  %649 = vmatpush.bf16.msra.mxu0 %v454
  %650 = vmatpush.bf16.msra.mxu0 %v450
  %651 = vmatpush.bf16.msra.mxu0 %v446
  %652 = vmatpush.bf16.msra.mxu0 %v442
  %653 = vmatpush.bf16.msra.mxu0 %v438
  %654 = vmatpush.bf16.msra.mxu0 %v434
  %655 = vmatmul.bf16.gmra.mxu0 %v133
  %v656 = vpop.f32.mrf.mxu0
  %v657 = vadd.f32 %v125, %v656
  %v658 = vpop.f32.mrf.mxu0
  %659 = vdwg.mxu0
  %660 = vmatpush.bf16.msra.mxu0 %v494
  %661 = vmatpush.bf16.msra.mxu0 %v490
  %662 = vmatpush.bf16.msra.mxu0 %v486
  %663 = vmatpush.bf16.msra.mxu0 %v482
  %664 = vmatpush.bf16.msra.mxu0 %v478
  %665 = vmatpush.bf16.msra.mxu0 %v474
  %666 = vmatpush.bf16.msra.mxu0 %v470
  %667 = vmatpush.bf16.msra.mxu0 %v466
  %668 = vmatmul.bf16.gmra.mxu0 %v134
  %v669 = vpop.f32.mrf.mxu0
  %v670 = vadd.f32 %v657, %v669
  %v671 = vpop.f32.mrf.mxu0
  %672 = vdwg.mxu0
  %673 = vmatpush.bf16.msra.mxu0 %v526
  %674 = vmatpush.bf16.msra.mxu0 %v522
  %675 = vmatpush.bf16.msra.mxu0 %v518
  %676 = vmatpush.bf16.msra.mxu0 %v514
  %677 = vmatpush.bf16.msra.mxu0 %v510
  %678 = vmatpush.bf16.msra.mxu0 %v506
  %679 = vmatpush.bf16.msra.mxu0 %v502
  %680 = vmatpush.bf16.msra.mxu0 %v498
  %681 = vmatmul.bf16.gmra.mxu0 %v135
  %v682 = vpop.f32.mrf.mxu0
  %v683 = vadd.f32 %v670, %v682
  %v684 = vpop.f32.mrf.mxu0
  %685 = vdwg.mxu0
  %686 = vmatpush.bf16.msra.mxu0 0
  %687 = vmatpush.bf16.msra.mxu0 0
  %688 = vmatpush.bf16.msra.mxu0 0
  %689 = vmatpush.bf16.msra.mxu0 0
  %690 = vmatpush.bf16.msra.mxu0 0
  %691 = vmatpush.bf16.msra.mxu0 0
  %692 = vmatpush.bf16.msra.mxu0 0
  %693 = vmatpush.bf16.msra.mxu0 %v636
  %694 = vmatmul.bf16.gmra.mxu0 %v632
  %v695 = vpop.f32.mrf.mxu0
  %v696 = vadd.f32 %v683, %v695
  %v697 = vpop.f32.mrf.mxu0
  %698 = vdwg.mxu0
  %699 = vmatpush.bf16.msra.mxu0 %v463
  %700 = vmatpush.bf16.msra.mxu0 %v459
  %701 = vmatpush.bf16.msra.mxu0 %v455
  %702 = vmatpush.bf16.msra.mxu0 %v451
  %703 = vmatpush.bf16.msra.mxu0 %v447
  %704 = vmatpush.bf16.msra.mxu0 %v443
  %705 = vmatpush.bf16.msra.mxu0 %v439
  %706 = vmatpush.bf16.msra.mxu0 %v435
  %707 = vmatmul.bf16.gmra.mxu0 %v133
  %v708 = vpop.f32.mrf.mxu0
  %v709 = vadd.f32 %v125, %v708
  %v710 = vpop.f32.mrf.mxu0
  %711 = vdwg.mxu0
  %712 = vmatpush.bf16.msra.mxu0 %v495
  %713 = vmatpush.bf16.msra.mxu0 %v491
  %714 = vmatpush.bf16.msra.mxu0 %v487
  %715 = vmatpush.bf16.msra.mxu0 %v483
  %716 = vmatpush.bf16.msra.mxu0 %v479
  %717 = vmatpush.bf16.msra.mxu0 %v475
  %718 = vmatpush.bf16.msra.mxu0 %v471
  %719 = vmatpush.bf16.msra.mxu0 %v467
  %720 = vmatmul.bf16.gmra.mxu0 %v134
  %v721 = vpop.f32.mrf.mxu0
  %v722 = vadd.f32 %v709, %v721
  %v723 = vpop.f32.mrf.mxu0
  %724 = vdwg.mxu0
  %725 = vmatpush.bf16.msra.mxu0 %v527
  %726 = vmatpush.bf16.msra.mxu0 %v523
  %727 = vmatpush.bf16.msra.mxu0 %v519
  %728 = vmatpush.bf16.msra.mxu0 %v515
  %729 = vmatpush.bf16.msra.mxu0 %v511
  %730 = vmatpush.bf16.msra.mxu0 %v507
  %731 = vmatpush.bf16.msra.mxu0 %v503
  %732 = vmatpush.bf16.msra.mxu0 %v499
  %733 = vmatmul.bf16.gmra.mxu0 %v135
  %v734 = vpop.f32.mrf.mxu0
  %v735 = vadd.f32 %v722, %v734
  %v736 = vpop.f32.mrf.mxu0
  %737 = vdwg.mxu0
  %738 = vmatpush.bf16.msra.mxu0 0
  %739 = vmatpush.bf16.msra.mxu0 0
  %740 = vmatpush.bf16.msra.mxu0 0
  %741 = vmatpush.bf16.msra.mxu0 0
  %742 = vmatpush.bf16.msra.mxu0 0
  %743 = vmatpush.bf16.msra.mxu0 0
  %744 = vmatpush.bf16.msra.mxu0 0
  %745 = vmatpush.bf16.msra.mxu0 %v639
  %746 = vmatmul.bf16.gmra.mxu0 %v632
  %v747 = vpop.f32.mrf.mxu0
  %v748 = vadd.f32 %v735, %v747
  %v749 = vpop.f32.mrf.mxu0
  %750 = vdwg.mxu0
  %751 = vmatpush.bf16.msra.mxu0 %v464
  %752 = vmatpush.bf16.msra.mxu0 %v460
  %753 = vmatpush.bf16.msra.mxu0 %v456
  %754 = vmatpush.bf16.msra.mxu0 %v452
  %755 = vmatpush.bf16.msra.mxu0 %v448
  %756 = vmatpush.bf16.msra.mxu0 %v444
  %757 = vmatpush.bf16.msra.mxu0 %v440
  %758 = vmatpush.bf16.msra.mxu0 %v436
  %759 = vmatmul.bf16.gmra.mxu0 %v133
  %v760 = vpop.f32.mrf.mxu0
  %v761 = vadd.f32 %v125, %v760
  %v762 = vpop.f32.mrf.mxu0
  %763 = vdwg.mxu0
  %764 = vmatpush.bf16.msra.mxu0 %v496
  %765 = vmatpush.bf16.msra.mxu0 %v492
  %766 = vmatpush.bf16.msra.mxu0 %v488
  %767 = vmatpush.bf16.msra.mxu0 %v484
  %768 = vmatpush.bf16.msra.mxu0 %v480
  %769 = vmatpush.bf16.msra.mxu0 %v476
  %770 = vmatpush.bf16.msra.mxu0 %v472
  %771 = vmatpush.bf16.msra.mxu0 %v468
  %772 = vmatmul.bf16.gmra.mxu0 %v134
  %v773 = vpop.f32.mrf.mxu0
  %v774 = vadd.f32 %v761, %v773
  %v775 = vpop.f32.mrf.mxu0
  %776 = vdwg.mxu0
  %777 = vmatpush.bf16.msra.mxu0 %v528
  %778 = vmatpush.bf16.msra.mxu0 %v524
  %779 = vmatpush.bf16.msra.mxu0 %v520
  %780 = vmatpush.bf16.msra.mxu0 %v516
  %781 = vmatpush.bf16.msra.mxu0 %v512
  %782 = vmatpush.bf16.msra.mxu0 %v508
  %783 = vmatpush.bf16.msra.mxu0 %v504
  %784 = vmatpush.bf16.msra.mxu0 %v500
  %785 = vmatmul.bf16.gmra.mxu0 %v135
  %v786 = vpop.f32.mrf.mxu0
  %v787 = vadd.f32 %v774, %v786
  %v788 = vpop.f32.mrf.mxu0
  %789 = vdwg.mxu0
  %790 = vmatpush.bf16.msra.mxu0 0
  %791 = vmatpush.bf16.msra.mxu0 0
  %792 = vmatpush.bf16.msra.mxu0 0
  %793 = vmatpush.bf16.msra.mxu0 0
  %794 = vmatpush.bf16.msra.mxu0 0
  %795 = vmatpush.bf16.msra.mxu0 0
  %796 = vmatpush.bf16.msra.mxu0 0
  %797 = vmatpush.bf16.msra.mxu0 %v642
  %798 = vmatmul.bf16.gmra.mxu0 %v632
  %v799 = vpop.f32.mrf.mxu0
  %v800 = vadd.f32 %v787, %v799
  %v801 = vpop.f32.mrf.mxu0
  %802 = vdwg.mxu0
  %803 = vmatpush.bf16.msra.mxu0 %v465
  %804 = vmatpush.bf16.msra.mxu0 %v461
  %805 = vmatpush.bf16.msra.mxu0 %v457
  %806 = vmatpush.bf16.msra.mxu0 %v453
  %807 = vmatpush.bf16.msra.mxu0 %v449
  %808 = vmatpush.bf16.msra.mxu0 %v445
  %809 = vmatpush.bf16.msra.mxu0 %v441
  %810 = vmatpush.bf16.msra.mxu0 %v437
  %811 = vmatmul.bf16.gmra.mxu0 %v133
  %v812 = vpop.f32.mrf.mxu0
  %v813 = vadd.f32 %v125, %v812
  %v814 = vpop.f32.mrf.mxu0
  %815 = vdwg.mxu0
  %816 = vmatpush.bf16.msra.mxu0 %v497
  %817 = vmatpush.bf16.msra.mxu0 %v493
  %818 = vmatpush.bf16.msra.mxu0 %v489
  %819 = vmatpush.bf16.msra.mxu0 %v485
  %820 = vmatpush.bf16.msra.mxu0 %v481
  %821 = vmatpush.bf16.msra.mxu0 %v477
  %822 = vmatpush.bf16.msra.mxu0 %v473
  %823 = vmatpush.bf16.msra.mxu0 %v469
  %824 = vmatmul.bf16.gmra.mxu0 %v134
  %v825 = vpop.f32.mrf.mxu0
  %v826 = vadd.f32 %v813, %v825
  %v827 = vpop.f32.mrf.mxu0
  %828 = vdwg.mxu0
  %829 = vmatpush.bf16.msra.mxu0 %v529
  %830 = vmatpush.bf16.msra.mxu0 %v525
  %831 = vmatpush.bf16.msra.mxu0 %v521
  %832 = vmatpush.bf16.msra.mxu0 %v517
  %833 = vmatpush.bf16.msra.mxu0 %v513
  %834 = vmatpush.bf16.msra.mxu0 %v509
  %835 = vmatpush.bf16.msra.mxu0 %v505
  %836 = vmatpush.bf16.msra.mxu0 %v501
  %837 = vmatmul.bf16.gmra.mxu0 %v135
  %v838 = vpop.f32.mrf.mxu0
  %v839 = vadd.f32 %v826, %v838
  %v840 = vpop.f32.mrf.mxu0
  %841 = vdwg.mxu0
  %842 = vmatpush.bf16.msra.mxu0 0
  %843 = vmatpush.bf16.msra.mxu0 0
  %844 = vmatpush.bf16.msra.mxu0 0
  %845 = vmatpush.bf16.msra.mxu0 0
  %846 = vmatpush.bf16.msra.mxu0 0
  %847 = vmatpush.bf16.msra.mxu0 0
  %848 = vmatpush.bf16.msra.mxu0 0
  %849 = vmatpush.bf16.msra.mxu0 %v645
  %850 = vmatmul.bf16.gmra.mxu0 %v632
  %v851 = vpop.f32.mrf.mxu0
  %v852 = vadd.f32 %v839, %v851
  %v853 = vpop.f32.mrf.mxu0
  %854 = vdwg.mxu0
  %v855 = vadd.f32 %v696, %v748
  %v856 = vadd.f32 %v855, %v800
  %v857 = vadd.f32 %v856, %v852
  %858 = vadd.xlane.f32.xlu0 %v857
  %v859 = vpop.xlane.xlu0 %858
  %v860 = vrcp.pop 512.0
  %v861 = vmul.f32 512.0, %v860
  %v862 = vsub.f32 1.0, %v861
  %v863 = vmul.f32 %v860, %v862
  %v864 = vadd.f32 %v860, %v863
  %vm865 = vweird.f32 %v860
  %v866 = vsel %vm865, %v860, %v864
  %v867 = vmul.f32 %v859, %v866
  %v868 = vsub.f32 %v696, %v867
  %v869 = vsub.f32 %v748, %v867
  %v870 = vsub.f32 %v800, %v867
  %v871 = vsub.f32 %v852, %v867
  %v872 = vmul.f32 %v868, %v868
  %v873 = vmul.f32 %v869, %v869
  %v874 = vmul.f32 %v870, %v870
  %v875 = vmul.f32 %v871, %v871
  %v876 = vadd.f32 %v872, %v873
  %v877 = vadd.f32 %v876, %v874
  %v878 = vadd.f32 %v877, %v875
  %879 = vadd.xlane.f32.xlu0 %v878
  %v880 = vpop.xlane.xlu0 %879
  %v881 = vmul.f32 %v880, %v866
  %v882 = vld [vmem:[%s3] sm:$0xff]
  %v883 = vadd.f32 %v881, 1e-05
  %v884 = vrsqrt.pop %v883
  %v885 = vmul.f32 %v884, %v883
  %v886 = vmul.f32 %v885, %v884
  %v887 = vmul.f32 0.5, %v886
  %v888 = vsub.f32 1.5, %v887
  %v889 = vmul.f32 %v884, %v888
  %vm890 = vweird.f32 %v883
  %vm891 = vweird.f32 %v884
  %vm892 = vmor %vm890, %vm891
  %v893 = vsel %vm892, %v884, %v889
  %v894 = vmul.f32 %v882, %v893
  %v895 = vld [vmem:[%s4] sm:$0xff]
  %v896 = vmul.f32 %v867, %v894
  %v897 = vsub.f32 %v895, %v896
  %899 = vset.pattern.permute.xlu0 0
  %900 = vperm.xlu0 %899, %v894
  %v901 = vpop.permute.xlu0 %900
  %v903 = vmul.f32 %v696, %v901
  %v904 = vmul.f32 %v748, %v901
  %v905 = vmul.f32 %v800, %v901
  %v906 = vmul.f32 %v852, %v901
  %908 = vset.pattern.permute.xlu0 0
  %909 = vperm.xlu0 %908, %v897
  %v910 = vpop.permute.xlu0 %909
  %v912 = vadd.f32 %v903, %v910
  %v913 = vadd.f32 %v904, %v910
  %v914 = vadd.f32 %v905, %v910
  %v915 = vadd.f32 %v906, %v910
  %v916 = vmax.f32 %v912, 0.0
  %v917 = vmax.f32 %v913, 0.0
  %v918 = vmax.f32 %v914, 0.0
  %v919 = vmax.f32 %v915, 0.0
  %920 = vst [vmem:[%s5] sm:$0xff] %v916
  %921 = vst [vmem:[%s5 + $0x8] sm:$0xff] %v917
  %922 = vst [vmem:[%s5 + $0x10] sm:$0xff] %v918
  %923 = vst [vmem:[%s5 + $0x18] sm:$0xff] %v919
  // Predicated region
  $region22: #{simple_conv_forward.16} parent=0 // pred_check
    _
  $region23: #{simple_conv_forward.16} parent=0 // pred_check_branch
    %925 = sbr.rel (0) target = $region25
  $region24: #{simple_conv_forward.16} parent=0 // pred_region
    _
  $region25: #{simple_conv_forward.16} parent=0 // pred_fallthru
    _
  // Predicated region
  $region26: #{simple_conv_forward.16} parent=0 // pred_check
    _
  $region27: #{simple_conv_forward.16} parent=0 // pred_check_branch
    %927 = sbr.rel (0) target = $region29
  $region28: #{simple_conv_forward.16} parent=0 // pred_region
    _
  $region29: #{simple_conv_forward.16} parent=0 // pred_fallthru
    _

// kernel: simple_conv_forward.17
$region0: #{simple_conv_forward.17}
  #allocation0 [shape = 'u32[]', space=smem, size = 0x4, offset = 0x4, fixed_abs, tag = 'smem constant byte address 0x4 - core index']
  #allocation1 [shape = 'u32[72,128]{1,0:T(1,128)}', space=vmem, size = 0x9000, scoped, tag = 'internal scratch']
  %s0 = inlined_call_operand.vmem [shape: bf16[72,128], index: 0, kind: input, shape index: {}]
  %s1 = inlined_call_operand.vmem [shape: bf16[16,72], index: 1, kind: input, shape index: {}]
  %s2 = inlined_call_operand.vmem [shape: f32[16,1], index: 2, kind: input, shape index: {}]
  %s3 = inlined_call_operand.vmem [shape: f32[16,1], index: 3, kind: input, shape index: {}]
  %s4 = inlined_call_operand.vmem [shape: f32[16,1], index: 4, kind: input, shape index: {}]
  %s5 = inlined_call_operand.vmem [shape: f32[16,128], index: 5, kind: output, shape index: {}]
  %s6 = sld [smem:[#allocation0]]
  $region30: #{simple_conv_forward.17} parent=0
    _
  %s8 = ssub.s32 1, %s6
  %s9 = scalar_select 0, %s8, %s6
  // Predicated region
  $region2: #{simple_conv_forward.17} parent=0 // pred_check
    _
  $region3: #{simple_conv_forward.17} parent=0 // pred_check_branch
    %11 = sbr.rel (0) target = $region5
  $region4: #{simple_conv_forward.17} parent=0 // pred_region
    _
  $region5: #{simple_conv_forward.17} parent=0 // pred_fallthru
    _
  // Predicated region
  $region6: #{simple_conv_forward.17} parent=0 // pred_check
    _
  $region7: #{simple_conv_forward.17} parent=0 // pred_check_branch
    %13 = sbr.rel (0) target = $region9
  $region8: #{simple_conv_forward.17} parent=0 // pred_region
    _
  $region9: #{simple_conv_forward.17} parent=0 // pred_fallthru
    _
  // Predicated region
  $region10: #{simple_conv_forward.17} parent=0 // pred_check
    _
  $region11: #{simple_conv_forward.17} parent=0 // pred_check_branch
    %15 = sbr.rel (0) target = $region13
  $region12: #{simple_conv_forward.17} parent=0 // pred_region
    _
  $region13: #{simple_conv_forward.17} parent=0 // pred_fallthru
    _
  // Predicated region
  $region14: #{simple_conv_forward.17} parent=0 // pred_check
    _
  $region15: #{simple_conv_forward.17} parent=0 // pred_check_branch
    %17 = sbr.rel (0) target = $region17
  $region16: #{simple_conv_forward.17} parent=0 // pred_region
    _
  $region17: #{simple_conv_forward.17} parent=0 // pred_fallthru
    _
  // Predicated region
  $region18: #{simple_conv_forward.17} parent=0 // pred_check
    _
  $region19: #{simple_conv_forward.17} parent=0 // pred_check_branch
    %19 = sbr.rel (0) target = $region21
  $region20: #{simple_conv_forward.17} parent=0 // pred_region
    _
  $region21: #{simple_conv_forward.17} parent=0 // pred_fallthru
    _
  %v21 = vld [vmem:[%s1] sm:$0xf]
  %v22 = vld [vmem:[%s1 + $0x4] sm:$0xf]
  %v23 = vld [vmem:[%s0] sm:$0xf]
  %v24 = vld [vmem:[%s0 + $0x4] sm:$0xf]
  %v25 = vld [vmem:[%s0 + $0x8] sm:$0xf]
  %v26 = vld [vmem:[%s0 + $0xc] sm:$0xf]
  %v27 = vld [vmem:[%s0 + $0x10] sm:$0xf]
  %v28 = vld [vmem:[%s0 + $0x14] sm:$0xf]
  %v29 = vld [vmem:[%s0 + $0x18] sm:$0xf]
  %v30 = vld [vmem:[%s0 + $0x1c] sm:$0xf]
  %v31 = vld [vmem:[%s0 + $0x20] sm:$0xf]
  %v32 = vld [vmem:[%s2] sm:$0xff]
  %v33 = vld [vmem:[%s2 + $0x8] sm:$0xff]
  %35 = vset.pattern.permute.xlu0 0
  %36 = vperm.xlu0 %35, %v32
  %v37 = vpop.permute.xlu0 %36
  %40 = vset.pattern.permute.xlu0 0
  %41 = vperm.xlu0 %40, %v33
  %v42 = vpop.permute.xlu0 %41
  %v46 = vunpack.c.l.b16 %v21
  %v47 = vunpack.c.l.b16 %v22
  %v48 = vpack.c.b16 %v47, %v46
  %v58 = vunpack.c.l.b16 %v23
  %v59 = vunpack.c.l.b16 %v24
  %v60 = vunpack.c.l.b16 %v25
  %v61 = vunpack.c.l.b16 %v26
  %v62 = vunpack.c.l.b16 %v27
  %v63 = vunpack.c.l.b16 %v28
  %v64 = vunpack.c.l.b16 %v29
  %v65 = vunpack.c.l.b16 %v30
  %v66 = vunpack.c.l.b16 %v31
  %v67 = vpack.c.b16 %v59, %v58
  %v68 = vpack.c.b16 %v61, %v60
  %v69 = vpack.c.b16 %v63, %v62
  %v70 = vpack.c.b16 %v65, %v64
  %v71 = vpack.c.b16 %v66, %v66
  %vm76 = vcmask 588800
  %v78 = vsel %vm76, %v48, 0
  %vm80 = vcmask 1043456
  %v82 = vsel %vm80, %v71, 0
  %84 = vmatpush.bf16.msra.mxu0 0
  %85 = vmatpush.bf16.msra.mxu0 0
  %86 = vmatpush.bf16.msra.mxu0 0
  %87 = vmatpush.bf16.msra.mxu0 %v82
  %88 = vmatpush.bf16.msra.mxu0 %v70
  %89 = vmatpush.bf16.msra.mxu0 %v69
  %90 = vmatpush.bf16.msra.mxu0 %v68
  %91 = vmatpush.bf16.msra.mxu0 %v67
  %92 = vmatmul.bf16.gmra.mxu0 %v78
  %v93 = vpop.f32.mrf.mxu0
  %v94 = vadd.f32 %v37, %v93
  %v95 = vpop.f32.mrf.mxu0
  %v96 = vadd.f32 %v42, %v95
  %97 = vdwg.mxu0
  %98 = vadd.xlane.f32.xlu0 %v94
  %v99 = vpop.xlane.xlu0 %98
  %100 = vadd.xlane.f32.xlu0 %v96
  %v101 = vpop.xlane.xlu0 %100
  %v102 = vrcp.pop 128.0
  %v103 = vmul.f32 128.0, %v102
  %v104 = vsub.f32 1.0, %v103
  %v105 = vmul.f32 %v102, %v104
  %v106 = vadd.f32 %v102, %v105
  %vm107 = vweird.f32 %v102
  %v108 = vsel %vm107, %v102, %v106
  %v109 = vmul.f32 %v99, %v108
  %v110 = vmul.f32 %v101, %v108
  %v111 = vsub.f32 %v94, %v109
  %v112 = vsub.f32 %v96, %v110
  %v113 = vmul.f32 %v111, %v111
  %v114 = vmul.f32 %v112, %v112
  %115 = vadd.xlane.f32.xlu0 %v113
  %v116 = vpop.xlane.xlu0 %115
  %117 = vadd.xlane.f32.xlu0 %v114
  %v118 = vpop.xlane.xlu0 %117
  %v119 = vmul.f32 %v116, %v108
  %v120 = vmul.f32 %v118, %v108
  %v121 = vld [vmem:[%s3] sm:$0xff]
  %v122 = vld [vmem:[%s3 + $0x8] sm:$0xff]
  %v123 = vadd.f32 %v119, 1e-05
  %v124 = vadd.f32 %v120, 1e-05
  %v125 = vrsqrt.pop %v123
  %v126 = vmul.f32 %v125, %v123
  %v127 = vmul.f32 %v126, %v125
  %v128 = vmul.f32 0.5, %v127
  %v129 = vsub.f32 1.5, %v128
  %v130 = vmul.f32 %v125, %v129
  %vm131 = vweird.f32 %v123
  %vm132 = vweird.f32 %v125
  %vm133 = vmor %vm131, %vm132
  %v134 = vsel %vm133, %v125, %v130
  %v135 = vrsqrt.pop %v124
  %v136 = vmul.f32 %v135, %v124
  %v137 = vmul.f32 %v136, %v135
  %v138 = vmul.f32 0.5, %v137
  %v139 = vsub.f32 1.5, %v138
  %v140 = vmul.f32 %v135, %v139
  %vm141 = vweird.f32 %v124
  %vm142 = vweird.f32 %v135
  %vm143 = vmor %vm141, %vm142
  %v144 = vsel %vm143, %v135, %v140
  %v145 = vmul.f32 %v121, %v134
  %v146 = vmul.f32 %v122, %v144
  %v147 = vld [vmem:[%s4] sm:$0xff]
  %v148 = vld [vmem:[%s4 + $0x8] sm:$0xff]
  %v149 = vmul.f32 %v109, %v145
  %v150 = vmul.f32 %v110, %v146
  %v151 = vsub.f32 %v147, %v149
  %v152 = vsub.f32 %v148, %v150
  %154 = vset.pattern.permute.xlu0 0
  %155 = vperm.xlu0 %154, %v145
  %v156 = vpop.permute.xlu0 %155
  %159 = vset.pattern.permute.xlu0 0
  %160 = vperm.xlu0 %159, %v146
  %v161 = vpop.permute.xlu0 %160
  %v163 = vmul.f32 %v94, %v156
  %v164 = vmul.f32 %v96, %v161
  %166 = vset.pattern.permute.xlu0 0
  %167 = vperm.xlu0 %166, %v151
  %v168 = vpop.permute.xlu0 %167
  %171 = vset.pattern.permute.xlu0 0
  %172 = vperm.xlu0 %171, %v152
  %v173 = vpop.permute.xlu0 %172
  %v175 = vadd.f32 %v163, %v168
  %v176 = vadd.f32 %v164, %v173
  %v177 = vmax.f32 %v175, 0.0
  %v178 = vmax.f32 %v176, 0.0
  %179 = vst [vmem:[%s5] sm:$0xff] %v177
  %180 = vst [vmem:[%s5 + $0x8] sm:$0xff] %v178
  // Predicated region
  $region22: #{simple_conv_forward.17} parent=0 // pred_check
    _
  $region23: #{simple_conv_forward.17} parent=0 // pred_check_branch
    %182 = sbr.rel (0) target = $region25
  $region24: #{simple_conv_forward.17} parent=0 // pred_region
    _
  $region25: #{simple_conv_forward.17} parent=0 // pred_fallthru
    _
  // Predicated region
  $region26: #{simple_conv_forward.17} parent=0 // pred_check
    _
  $region27: #{simple_conv_forward.17} parent=0 // pred_check_branch
    %184 = sbr.rel (0) target = $region29
  $region28: #{simple_conv_forward.17} parent=0 // pred_region
    _
  $region29: #{simple_conv_forward.17} parent=0 // pred_fallthru
    _

// kernel: simple_conv_forward.18
$region0: #{simple_conv_forward.18}
  #allocation0 [shape = 'u32[]', space=smem, size = 0x4, offset = 0x4, fixed_abs, tag = 'smem constant byte address 0x4 - core index']
  #allocation1 [shape = 'u32[72,128]{1,0:T(1,128)}', space=vmem, size = 0x9000, scoped, tag = 'internal scratch']
  %s0 = inlined_call_operand.vmem [shape: bf16[144,128], index: 0, kind: input, shape index: {}]
  %s1 = inlined_call_operand.vmem [shape: bf16[16,144], index: 1, kind: input, shape index: {}]
  %s2 = inlined_call_operand.vmem [shape: f32[16,1], index: 2, kind: input, shape index: {}]
  %s3 = inlined_call_operand.vmem [shape: f32[16,1], index: 3, kind: input, shape index: {}]
  %s4 = inlined_call_operand.vmem [shape: f32[16,1], index: 4, kind: input, shape index: {}]
  %s5 = inlined_call_operand.vmem [shape: f32[16,128], index: 5, kind: output, shape index: {}]
  %s6 = sld [smem:[#allocation0]]
  $region30: #{simple_conv_forward.18} parent=0
    _
  %s8 = ssub.s32 1, %s6
  %s9 = scalar_select 0, %s8, %s6
  // Predicated region
  $region2: #{simple_conv_forward.18} parent=0 // pred_check
    _
  $region3: #{simple_conv_forward.18} parent=0 // pred_check_branch
    %11 = sbr.rel (0) target = $region5
  $region4: #{simple_conv_forward.18} parent=0 // pred_region
    _
  $region5: #{simple_conv_forward.18} parent=0 // pred_fallthru
    _
  // Predicated region
  $region6: #{simple_conv_forward.18} parent=0 // pred_check
    _
  $region7: #{simple_conv_forward.18} parent=0 // pred_check_branch
    %13 = sbr.rel (0) target = $region9
  $region8: #{simple_conv_forward.18} parent=0 // pred_region
    _
  $region9: #{simple_conv_forward.18} parent=0 // pred_fallthru
    _
  // Predicated region
  $region10: #{simple_conv_forward.18} parent=0 // pred_check
    _
  $region11: #{simple_conv_forward.18} parent=0 // pred_check_branch
    %15 = sbr.rel (0) target = $region13
  $region12: #{simple_conv_forward.18} parent=0 // pred_region
    _
  $region13: #{simple_conv_forward.18} parent=0 // pred_fallthru
    _
  // Predicated region
  $region14: #{simple_conv_forward.18} parent=0 // pred_check
    _
  $region15: #{simple_conv_forward.18} parent=0 // pred_check_branch
    %17 = sbr.rel (0) target = $region17
  $region16: #{simple_conv_forward.18} parent=0 // pred_region
    _
  $region17: #{simple_conv_forward.18} parent=0 // pred_fallthru
    _
  // Predicated region
  $region18: #{simple_conv_forward.18} parent=0 // pred_check
    _
  $region19: #{simple_conv_forward.18} parent=0 // pred_check_branch
    %19 = sbr.rel (0) target = $region21
  $region20: #{simple_conv_forward.18} parent=0 // pred_region
    _
  $region21: #{simple_conv_forward.18} parent=0 // pred_fallthru
    _
  %v21 = vld [vmem:[%s1] sm:$0xff]
  %v22 = vld [vmem:[%s1 + $0x8] sm:$0xff]
  %v23 = vld [vmem:[%s0] sm:$0xf]
  %v24 = vld [vmem:[%s0 + $0x4] sm:$0xf]
  %v25 = vld [vmem:[%s0 + $0x8] sm:$0xf]
  %v26 = vld [vmem:[%s0 + $0xc] sm:$0xf]
  %v27 = vld [vmem:[%s0 + $0x10] sm:$0xf]
  %v28 = vld [vmem:[%s0 + $0x14] sm:$0xf]
  %v29 = vld [vmem:[%s0 + $0x18] sm:$0xf]
  %v30 = vld [vmem:[%s0 + $0x1c] sm:$0xf]
  %v31 = vld [vmem:[%s0 + $0x20] sm:$0xf]
  %v32 = vld [vmem:[%s0 + $0x24] sm:$0xf]
  %v33 = vld [vmem:[%s0 + $0x28] sm:$0xf]
  %v34 = vld [vmem:[%s0 + $0x2c] sm:$0xf]
  %v35 = vld [vmem:[%s0 + $0x30] sm:$0xf]
  %v36 = vld [vmem:[%s0 + $0x34] sm:$0xf]
  %v37 = vld [vmem:[%s0 + $0x38] sm:$0xf]
  %v38 = vld [vmem:[%s0 + $0x3c] sm:$0xf]
  %v39 = vld [vmem:[%s0 + $0x40] sm:$0xf]
  %v40 = vld [vmem:[%s0 + $0x44] sm:$0xf]
  %v41 = vld [vmem:[%s2] sm:$0xff]
  %v42 = vld [vmem:[%s2 + $0x8] sm:$0xff]
  %44 = vset.pattern.permute.xlu0 0
  %45 = vperm.xlu0 %44, %v41
  %v46 = vpop.permute.xlu0 %45
  %49 = vset.pattern.permute.xlu0 0
  %50 = vperm.xlu0 %49, %v42
  %v51 = vpop.permute.xlu0 %50
  %v55 = vunpack.c.l.b16 %v21
  %v56 = vunpack.c.h.b16 %v21
  %v57 = vunpack.c.l.b16 %v22
  %v58 = vunpack.c.h.b16 %v22
  %v59 = vpack.c.b16 %v57, %v55
  %v60 = vpack.c.b16 %v58, %v56
  %v80 = vunpack.c.l.b16 %v23
  %v81 = vunpack.c.l.b16 %v24
  %v82 = vunpack.c.l.b16 %v25
  %v83 = vunpack.c.l.b16 %v26
  %v84 = vunpack.c.l.b16 %v27
  %v85 = vunpack.c.l.b16 %v28
  %v86 = vunpack.c.l.b16 %v29
  %v87 = vunpack.c.l.b16 %v30
  %v88 = vunpack.c.l.b16 %v31
  %v89 = vunpack.c.l.b16 %v32
  %v90 = vunpack.c.l.b16 %v33
  %v91 = vunpack.c.l.b16 %v34
  %v92 = vunpack.c.l.b16 %v35
  %v93 = vunpack.c.l.b16 %v36
  %v94 = vunpack.c.l.b16 %v37
  %v95 = vunpack.c.l.b16 %v38
  %v96 = vunpack.c.l.b16 %v39
  %v97 = vunpack.c.l.b16 %v40
  %v98 = vpack.c.b16 %v81, %v80
  %v99 = vpack.c.b16 %v83, %v82
  %v100 = vpack.c.b16 %v85, %v84
  %v101 = vpack.c.b16 %v87, %v86
  %v102 = vpack.c.b16 %v89, %v88
  %v103 = vpack.c.b16 %v91, %v90
  %v104 = vpack.c.b16 %v93, %v92
  %v105 = vpack.c.b16 %v95, %v94
  %v106 = vpack.c.b16 %v97, %v96
  %vm116 = vcmask 130048
  %v118 = vsel %vm116, %v60, 0
  %120 = vmatpush.bf16.msra.mxu0 %v105
  %121 = vmatpush.bf16.msra.mxu0 %v104
  %122 = vmatpush.bf16.msra.mxu0 %v103
  %123 = vmatpush.bf16.msra.mxu0 %v102
  %124 = vmatpush.bf16.msra.mxu0 %v101
  %125 = vmatpush.bf16.msra.mxu0 %v100
  %126 = vmatpush.bf16.msra.mxu0 %v99
  %127 = vmatpush.bf16.msra.mxu0 %v98
  %128 = vmatmul.bf16.gmra.mxu0 %v59
  %v129 = vpop.f32.mrf.mxu0
  %v130 = vadd.f32 %v46, %v129
  %v131 = vpop.f32.mrf.mxu0
  %v132 = vadd.f32 %v51, %v131
  %133 = vdwg.mxu0
  %134 = vmatpush.bf16.msra.mxu0 0
  %135 = vmatpush.bf16.msra.mxu0 0
  %136 = vmatpush.bf16.msra.mxu0 0
  %137 = vmatpush.bf16.msra.mxu0 0
  %138 = vmatpush.bf16.msra.mxu0 0
  %139 = vmatpush.bf16.msra.mxu0 0
  %140 = vmatpush.bf16.msra.mxu0 0
  %141 = vmatpush.bf16.msra.mxu0 %v106
  %142 = vmatmul.bf16.gmra.mxu0 %v118
  %v143 = vpop.f32.mrf.mxu0
  %v144 = vadd.f32 %v130, %v143
  %v145 = vpop.f32.mrf.mxu0
  %v146 = vadd.f32 %v132, %v145
  %147 = vdwg.mxu0
  %148 = vadd.xlane.f32.xlu0 %v144
  %v149 = vpop.xlane.xlu0 %148
  %150 = vadd.xlane.f32.xlu0 %v146
  %v151 = vpop.xlane.xlu0 %150
  %v152 = vrcp.pop 128.0
  %v153 = vmul.f32 128.0, %v152
  %v154 = vsub.f32 1.0, %v153
  %v155 = vmul.f32 %v152, %v154
  %v156 = vadd.f32 %v152, %v155
  %vm157 = vweird.f32 %v152
  %v158 = vsel %vm157, %v152, %v156
  %v159 = vmul.f32 %v149, %v158
  %v160 = vmul.f32 %v151, %v158
  %v161 = vsub.f32 %v144, %v159
  %v162 = vsub.f32 %v146, %v160
  %v163 = vmul.f32 %v161, %v161
  %v164 = vmul.f32 %v162, %v162
  %165 = vadd.xlane.f32.xlu0 %v163
  %v166 = vpop.xlane.xlu0 %165
  %167 = vadd.xlane.f32.xlu0 %v164
  %v168 = vpop.xlane.xlu0 %167
  %v169 = vmul.f32 %v166, %v158
  %v170 = vmul.f32 %v168, %v158
  %v171 = vld [vmem:[%s3] sm:$0xff]
  %v172 = vld [vmem:[%s3 + $0x8] sm:$0xff]
  %v173 = vadd.f32 %v169, 1e-05
  %v174 = vadd.f32 %v170, 1e-05
  %v175 = vrsqrt.pop %v173
  %v176 = vmul.f32 %v175, %v173
  %v177 = vmul.f32 %v176, %v175
  %v178 = vmul.f32 0.5, %v177
  %v179 = vsub.f32 1.5, %v178
  %v180 = vmul.f32 %v175, %v179
  %vm181 = vweird.f32 %v173
  %vm182 = vweird.f32 %v175
  %vm183 = vmor %vm181, %vm182
  %v184 = vsel %vm183, %v175, %v180
  %v185 = vrsqrt.pop %v174
  %v186 = vmul.f32 %v185, %v174
  %v187 = vmul.f32 %v186, %v185
  %v188 = vmul.f32 0.5, %v187
  %v189 = vsub.f32 1.5, %v188
  %v190 = vmul.f32 %v185, %v189
  %vm191 = vweird.f32 %v174
  %vm192 = vweird.f32 %v185
  %vm193 = vmor %vm191, %vm192
  %v194 = vsel %vm193, %v185, %v190
  %v195 = vmul.f32 %v171, %v184
  %v196 = vmul.f32 %v172, %v194
  %v197 = vld [vmem:[%s4] sm:$0xff]
  %v198 = vld [vmem:[%s4 + $0x8] sm:$0xff]
  %v199 = vmul.f32 %v159, %v195
  %v200 = vmul.f32 %v160, %v196
  %v201 = vsub.f32 %v197, %v199
  %v202 = vsub.f32 %v198, %v200
  %204 = vset.pattern.permute.xlu0 0
  %205 = vperm.xlu0 %204, %v195
  %v206 = vpop.permute.xlu0 %205
  %209 = vset.pattern.permute.xlu0 0
  %210 = vperm.xlu0 %209, %v196
  %v211 = vpop.permute.xlu0 %210
  %v213 = vmul.f32 %v144, %v206
  %v214 = vmul.f32 %v146, %v211
  %216 = vset.pattern.permute.xlu0 0
  %217 = vperm.xlu0 %216, %v201
  %v218 = vpop.permute.xlu0 %217
  %221 = vset.pattern.permute.xlu0 0
  %222 = vperm.xlu0 %221, %v202
  %v223 = vpop.permute.xlu0 %222
  %v225 = vadd.f32 %v213, %v218
  %v226 = vadd.f32 %v214, %v223
  %v227 = vmax.f32 %v225, 0.0
  %v228 = vmax.f32 %v226, 0.0
  %229 = vst [vmem:[%s5] sm:$0xff] %v227
  %230 = vst [vmem:[%s5 + $0x8] sm:$0xff] %v228
  // Predicated region
  $region22: #{simple_conv_forward.18} parent=0 // pred_check
    _
  $region23: #{simple_conv_forward.18} parent=0 // pred_check_branch
    %232 = sbr.rel (0) target = $region25
  $region24: #{simple_conv_forward.18} parent=0 // pred_region
    _
  $region25: #{simple_conv_forward.18} parent=0 // pred_fallthru
    _
  // Predicated region
  $region26: #{simple_conv_forward.18} parent=0 // pred_check
    _
  $region27: #{simple_conv_forward.18} parent=0 // pred_check_branch
    %234 = sbr.rel (0) target = $region29
  $region28: #{simple_conv_forward.18} parent=0 // pred_region
    _
  $region29: #{simple_conv_forward.18} parent=0 // pred_fallthru
    _

// kernel: simple_conv_forward.19
$region0: #{simple_conv_forward.19}
  #allocation0 [shape = 'u32[]', space=smem, size = 0x4, offset = 0x4, fixed_abs, tag = 'smem constant byte address 0x4 - core index']
  #allocation1 [shape = 'u32[72,128]{1,0:T(1,128)}', space=vmem, size = 0x9000, scoped, tag = 'internal scratch']
  %s0 = inlined_call_operand.vmem [shape: bf16[144,32], index: 0, kind: input, shape index: {}]
  %s1 = inlined_call_operand.vmem [shape: bf16[32,144], index: 1, kind: input, shape index: {}]
  %s2 = inlined_call_operand.vmem [shape: f32[32,1], index: 2, kind: input, shape index: {}]
  %s3 = inlined_call_operand.vmem [shape: f32[32,1], index: 3, kind: input, shape index: {}]
  %s4 = inlined_call_operand.vmem [shape: f32[32,1], index: 4, kind: input, shape index: {}]
  %s5 = inlined_call_operand.vmem [shape: f32[32,32], index: 5, kind: output, shape index: {}]
  %s6 = sld [smem:[#allocation0]]
  $region30: #{simple_conv_forward.19} parent=0
    _
  %s8 = ssub.s32 1, %s6
  %s9 = scalar_select 0, %s8, %s6
  // Predicated region
  $region2: #{simple_conv_forward.19} parent=0 // pred_check
    _
  $region3: #{simple_conv_forward.19} parent=0 // pred_check_branch
    %11 = sbr.rel (0) target = $region5
  $region4: #{simple_conv_forward.19} parent=0 // pred_region
    _
  $region5: #{simple_conv_forward.19} parent=0 // pred_fallthru
    _
  // Predicated region
  $region6: #{simple_conv_forward.19} parent=0 // pred_check
    _
  $region7: #{simple_conv_forward.19} parent=0 // pred_check_branch
    %13 = sbr.rel (0) target = $region9
  $region8: #{simple_conv_forward.19} parent=0 // pred_region
    _
  $region9: #{simple_conv_forward.19} parent=0 // pred_fallthru
    _
  // Predicated region
  $region10: #{simple_conv_forward.19} parent=0 // pred_check
    _
  $region11: #{simple_conv_forward.19} parent=0 // pred_check_branch
    %15 = sbr.rel (0) target = $region13
  $region12: #{simple_conv_forward.19} parent=0 // pred_region
    _
  $region13: #{simple_conv_forward.19} parent=0 // pred_fallthru
    _
  // Predicated region
  $region14: #{simple_conv_forward.19} parent=0 // pred_check
    _
  $region15: #{simple_conv_forward.19} parent=0 // pred_check_branch
    %17 = sbr.rel (0) target = $region17
  $region16: #{simple_conv_forward.19} parent=0 // pred_region
    _
  $region17: #{simple_conv_forward.19} parent=0 // pred_fallthru
    _
  // Predicated region
  $region18: #{simple_conv_forward.19} parent=0 // pred_check
    _
  $region19: #{simple_conv_forward.19} parent=0 // pred_check_branch
    %19 = sbr.rel (0) target = $region21
  $region20: #{simple_conv_forward.19} parent=0 // pred_region
    _
  $region21: #{simple_conv_forward.19} parent=0 // pred_fallthru
    _
  %v21 = vld [vmem:[%s1] sm:$0xff]
  %v22 = vld [vmem:[%s1 + $0x8] sm:$0xff]
  %v23 = vld [vmem:[%s1 + $0x10] sm:$0xff]
  %v24 = vld [vmem:[%s1 + $0x18] sm:$0xff]
  %v25 = vld [vmem:[%s0] sm:$0xf]
  %v26 = vld [vmem:[%s0 + $0x4] sm:$0xf]
  %v27 = vld [vmem:[%s0 + $0x8] sm:$0xf]
  %v28 = vld [vmem:[%s0 + $0xc] sm:$0xf]
  %v29 = vld [vmem:[%s0 + $0x10] sm:$0xf]
  %v30 = vld [vmem:[%s0 + $0x14] sm:$0xf]
  %v31 = vld [vmem:[%s0 + $0x18] sm:$0xf]
  %v32 = vld [vmem:[%s0 + $0x1c] sm:$0xf]
  %v33 = vld [vmem:[%s0 + $0x20] sm:$0xf]
  %v34 = vld [vmem:[%s0 + $0x24] sm:$0xf]
  %v35 = vld [vmem:[%s0 + $0x28] sm:$0xf]
  %v36 = vld [vmem:[%s0 + $0x2c] sm:$0xf]
  %v37 = vld [vmem:[%s0 + $0x30] sm:$0xf]
  %v38 = vld [vmem:[%s0 + $0x34] sm:$0xf]
  %v39 = vld [vmem:[%s0 + $0x38] sm:$0xf]
  %v40 = vld [vmem:[%s0 + $0x3c] sm:$0xf]
  %v41 = vld [vmem:[%s0 + $0x40] sm:$0xf]
  %v42 = vld [vmem:[%s0 + $0x44] sm:$0xf]
  %v43 = vld [vmem:[%s2] sm:$0xff]
  %v44 = vld [vmem:[%s2 + $0x8] sm:$0xff]
  %v45 = vld [vmem:[%s2 + $0x10] sm:$0xff]
  %v46 = vld [vmem:[%s2 + $0x18] sm:$0xff]
  %48 = vset.pattern.permute.xlu0 0
  %49 = vperm.xlu0 %48, %v43
  %v50 = vpop.permute.xlu0 %49
  %53 = vset.pattern.permute.xlu0 0
  %54 = vperm.xlu0 %53, %v44
  %v55 = vpop.permute.xlu0 %54
  %58 = vset.pattern.permute.xlu0 0
  %59 = vperm.xlu0 %58, %v45
  %v60 = vpop.permute.xlu0 %59
  %63 = vset.pattern.permute.xlu0 0
  %64 = vperm.xlu0 %63, %v46
  %v65 = vpop.permute.xlu0 %64
  %v71 = vunpack.c.l.b16 %v21
  %v72 = vunpack.c.h.b16 %v21
  %v73 = vunpack.c.l.b16 %v22
  %v74 = vunpack.c.h.b16 %v22
  %v75 = vunpack.c.l.b16 %v23
  %v76 = vunpack.c.h.b16 %v23
  %v77 = vunpack.c.l.b16 %v24
  %v78 = vunpack.c.h.b16 %v24
  %v79 = vpack.c.b16 %v73, %v71
  %v80 = vpack.c.b16 %v74, %v72
  %v81 = vpack.c.b16 %v77, %v75
  %v82 = vpack.c.b16 %v78, %v76
  %v103 = vunpack.c.l.b16 %v25
  %v104 = vunpack.c.l.b16 %v26
  %v105 = vunpack.c.l.b16 %v27
  %v106 = vunpack.c.l.b16 %v28
  %v107 = vunpack.c.l.b16 %v29
  %v108 = vunpack.c.l.b16 %v30
  %v109 = vunpack.c.l.b16 %v31
  %v110 = vunpack.c.l.b16 %v32
  %v111 = vunpack.c.l.b16 %v33
  %v112 = vunpack.c.l.b16 %v34
  %v113 = vunpack.c.l.b16 %v35
  %v114 = vunpack.c.l.b16 %v36
  %v115 = vunpack.c.l.b16 %v37
  %v116 = vunpack.c.l.b16 %v38
  %v117 = vunpack.c.l.b16 %v39
  %v118 = vunpack.c.l.b16 %v40
  %v119 = vunpack.c.l.b16 %v41
  %v120 = vunpack.c.l.b16 %v42
  %v121 = vpack.c.b16 %v104, %v103
  %v122 = vpack.c.b16 %v106, %v105
  %v123 = vpack.c.b16 %v108, %v107
  %v124 = vpack.c.b16 %v110, %v109
  %v125 = vpack.c.b16 %v112, %v111
  %v126 = vpack.c.b16 %v114, %v113
  %v127 = vpack.c.b16 %v116, %v115
  %v128 = vpack.c.b16 %v118, %v117
  %v129 = vpack.c.b16 %v120, %v119
  %vm139 = vcmask 130048
  %v141 = vsel %vm139, %v80, 0
  %v144 = vsel %vm139, %v82, 0
  %146 = vmatpush.bf16.msra.mxu0 %v128
  %147 = vmatpush.bf16.msra.mxu0 %v127
  %148 = vmatpush.bf16.msra.mxu0 %v126
  %149 = vmatpush.bf16.msra.mxu0 %v125
  %150 = vmatpush.bf16.msra.mxu0 %v124
  %151 = vmatpush.bf16.msra.mxu0 %v123
  %152 = vmatpush.bf16.msra.mxu0 %v122
  %153 = vmatpush.bf16.msra.mxu0 %v121
  %154 = vmatmul.bf16.gmra.mxu0 %v79
  %v155 = vpop.f32.mrf.mxu0
  %v156 = vadd.f32 %v50, %v155
  %v157 = vpop.f32.mrf.mxu0
  %v158 = vadd.f32 %v55, %v157
  %159 = vmatmul.bf16.gmra.mxu0 %v81
  %v160 = vpop.f32.mrf.mxu0
  %v161 = vadd.f32 %v60, %v160
  %v162 = vpop.f32.mrf.mxu0
  %v163 = vadd.f32 %v65, %v162
  %164 = vdwg.mxu0
  %165 = vmatpush.bf16.msra.mxu0 0
  %166 = vmatpush.bf16.msra.mxu0 0
  %167 = vmatpush.bf16.msra.mxu0 0
  %168 = vmatpush.bf16.msra.mxu0 0
  %169 = vmatpush.bf16.msra.mxu0 0
  %170 = vmatpush.bf16.msra.mxu0 0
  %171 = vmatpush.bf16.msra.mxu0 0
  %172 = vmatpush.bf16.msra.mxu0 %v129
  %173 = vmatmul.bf16.gmra.mxu0 %v141
  %v174 = vpop.f32.mrf.mxu0
  %v175 = vadd.f32 %v156, %v174
  %v176 = vpop.f32.mrf.mxu0
  %v177 = vadd.f32 %v158, %v176
  %178 = vmatmul.bf16.gmra.mxu0 %v144
  %v179 = vpop.f32.mrf.mxu0
  %v180 = vadd.f32 %v161, %v179
  %v181 = vpop.f32.mrf.mxu0
  %v182 = vadd.f32 %v163, %v181
  %183 = vdwg.mxu0
  %vm184 = vcmask 261120
  %v185 = vsel %vm184, %v175, 0.0
  %186 = vadd.xlane.f32.xlu0 %v185
  %v187 = vpop.xlane.xlu0 %186
  %v188 = vsel %vm184, %v177, 0.0
  %189 = vadd.xlane.f32.xlu0 %v188
  %v190 = vpop.xlane.xlu0 %189
  %v191 = vsel %vm184, %v180, 0.0
  %192 = vadd.xlane.f32.xlu0 %v191
  %v193 = vpop.xlane.xlu0 %192
  %v194 = vsel %vm184, %v182, 0.0
  %195 = vadd.xlane.f32.xlu0 %v194
  %v196 = vpop.xlane.xlu0 %195
  %v197 = vrcp.pop 32.0
  %v198 = vmul.f32 32.0, %v197
  %v199 = vsub.f32 1.0, %v198
  %v200 = vmul.f32 %v197, %v199
  %v201 = vadd.f32 %v197, %v200
  %vm202 = vweird.f32 %v197
  %v203 = vsel %vm202, %v197, %v201
  %v204 = vmul.f32 %v187, %v203
  %v205 = vmul.f32 %v190, %v203
  %v206 = vmul.f32 %v193, %v203
  %v207 = vmul.f32 %v196, %v203
  %v208 = vsub.f32 %v175, %v204
  %v209 = vsub.f32 %v177, %v205
  %v210 = vsub.f32 %v180, %v206
  %v211 = vsub.f32 %v182, %v207
  %v212 = vmul.f32 %v208, %v208
  %v213 = vmul.f32 %v209, %v209
  %v214 = vmul.f32 %v210, %v210
  %v215 = vmul.f32 %v211, %v211
  %v216 = vsel %vm184, %v212, 0.0
  %217 = vadd.xlane.f32.xlu0 %v216
  %v218 = vpop.xlane.xlu0 %217
  %v219 = vsel %vm184, %v213, 0.0
  %220 = vadd.xlane.f32.xlu0 %v219
  %v221 = vpop.xlane.xlu0 %220
  %v222 = vsel %vm184, %v214, 0.0
  %223 = vadd.xlane.f32.xlu0 %v222
  %v224 = vpop.xlane.xlu0 %223
  %v225 = vsel %vm184, %v215, 0.0
  %226 = vadd.xlane.f32.xlu0 %v225
  %v227 = vpop.xlane.xlu0 %226
  %v228 = vmul.f32 %v218, %v203
  %v229 = vmul.f32 %v221, %v203
  %v230 = vmul.f32 %v224, %v203
  %v231 = vmul.f32 %v227, %v203
  %v232 = vld [vmem:[%s3] sm:$0xff]
  %v233 = vld [vmem:[%s3 + $0x8] sm:$0xff]
  %v234 = vld [vmem:[%s3 + $0x10] sm:$0xff]
  %v235 = vld [vmem:[%s3 + $0x18] sm:$0xff]
  %v236 = vadd.f32 %v228, 1e-05
  %v237 = vadd.f32 %v229, 1e-05
  %v238 = vadd.f32 %v230, 1e-05
  %v239 = vadd.f32 %v231, 1e-05
  %v240 = vrsqrt.pop %v236
  %v241 = vmul.f32 %v240, %v236
  %v242 = vmul.f32 %v241, %v240
  %v243 = vmul.f32 0.5, %v242
  %v244 = vsub.f32 1.5, %v243
  %v245 = vmul.f32 %v240, %v244
  %vm246 = vweird.f32 %v236
  %vm247 = vweird.f32 %v240
  %vm248 = vmor %vm246, %vm247
  %v249 = vsel %vm248, %v240, %v245
  %v250 = vrsqrt.pop %v237
  %v251 = vmul.f32 %v250, %v237
  %v252 = vmul.f32 %v251, %v250
  %v253 = vmul.f32 0.5, %v252
  %v254 = vsub.f32 1.5, %v253
  %v255 = vmul.f32 %v250, %v254
  %vm256 = vweird.f32 %v237
  %vm257 = vweird.f32 %v250
  %vm258 = vmor %vm256, %vm257
  %v259 = vsel %vm258, %v250, %v255
  %v260 = vrsqrt.pop %v238
  %v261 = vmul.f32 %v260, %v238
  %v262 = vmul.f32 %v261, %v260
  %v263 = vmul.f32 0.5, %v262
  %v264 = vsub.f32 1.5, %v263
  %v265 = vmul.f32 %v260, %v264
  %vm266 = vweird.f32 %v238
  %vm267 = vweird.f32 %v260
  %vm268 = vmor %vm266, %vm267
  %v269 = vsel %vm268, %v260, %v265
  %v270 = vrsqrt.pop %v239
  %v271 = vmul.f32 %v270, %v239
  %v272 = vmul.f32 %v271, %v270
  %v273 = vmul.f32 0.5, %v272
  %v274 = vsub.f32 1.5, %v273
  %v275 = vmul.f32 %v270, %v274
  %vm276 = vweird.f32 %v239
  %vm277 = vweird.f32 %v270
  %vm278 = vmor %vm276, %vm277
  %v279 = vsel %vm278, %v270, %v275
  %v280 = vmul.f32 %v232, %v249
  %v281 = vmul.f32 %v233, %v259
  %v282 = vmul.f32 %v234, %v269
  %v283 = vmul.f32 %v235, %v279
  %v284 = vld [vmem:[%s4] sm:$0xff]
  %v285 = vld [vmem:[%s4 + $0x8] sm:$0xff]
  %v286 = vld [vmem:[%s4 + $0x10] sm:$0xff]
  %v287 = vld [vmem:[%s4 + $0x18] sm:$0xff]
  %v288 = vmul.f32 %v204, %v280
  %v289 = vmul.f32 %v205, %v281
  %v290 = vmul.f32 %v206, %v282
  %v291 = vmul.f32 %v207, %v283
  %v292 = vsub.f32 %v284, %v288
  %v293 = vsub.f32 %v285, %v289
  %v294 = vsub.f32 %v286, %v290
  %v295 = vsub.f32 %v287, %v291
  %297 = vset.pattern.permute.xlu0 0
  %298 = vperm.xlu0 %297, %v280
  %v299 = vpop.permute.xlu0 %298
  %302 = vset.pattern.permute.xlu0 0
  %303 = vperm.xlu0 %302, %v281
  %v304 = vpop.permute.xlu0 %303
  %307 = vset.pattern.permute.xlu0 0
  %308 = vperm.xlu0 %307, %v282
  %v309 = vpop.permute.xlu0 %308
  %312 = vset.pattern.permute.xlu0 0
  %313 = vperm.xlu0 %312, %v283
  %v314 = vpop.permute.xlu0 %313
  %v316 = vmul.f32 %v175, %v299
  %v317 = vmul.f32 %v177, %v304
  %v318 = vmul.f32 %v180, %v309
  %v319 = vmul.f32 %v182, %v314
  %321 = vset.pattern.permute.xlu0 0
  %322 = vperm.xlu0 %321, %v292
  %v323 = vpop.permute.xlu0 %322
  %326 = vset.pattern.permute.xlu0 0
  %327 = vperm.xlu0 %326, %v293
  %v328 = vpop.permute.xlu0 %327
  %331 = vset.pattern.permute.xlu0 0
  %332 = vperm.xlu0 %331, %v294
  %v333 = vpop.permute.xlu0 %332
  %336 = vset.pattern.permute.xlu0 0
  %337 = vperm.xlu0 %336, %v295
  %v338 = vpop.permute.xlu0 %337
  %v340 = vadd.f32 %v316, %v323
  %v341 = vadd.f32 %v317, %v328
  %v342 = vadd.f32 %v318, %v333
  %v343 = vadd.f32 %v319, %v338
  %v344 = vmax.f32 %v340, 0.0
  %v345 = vmax.f32 %v341, 0.0
  %v346 = vmax.f32 %v342, 0.0
  %v347 = vmax.f32 %v343, 0.0
  %348 = vst.msk [vmem:[%s5] sm:$0xff] %vm184, %v344
  %349 = vst.msk [vmem:[%s5 + $0x8] sm:$0xff] %vm184, %v345
  %350 = vst.msk [vmem:[%s5 + $0x10] sm:$0xff] %vm184, %v346
  %351 = vst.msk [vmem:[%s5 + $0x18] sm:$0xff] %vm184, %v347
  // Predicated region
  $region22: #{simple_conv_forward.19} parent=0 // pred_check
    _
  $region23: #{simple_conv_forward.19} parent=0 // pred_check_branch
    %353 = sbr.rel (0) target = $region25
  $region24: #{simple_conv_forward.19} parent=0 // pred_region
    _
  $region25: #{simple_conv_forward.19} parent=0 // pred_fallthru
    _
  // Predicated region
  $region26: #{simple_conv_forward.19} parent=0 // pred_check
    _
  $region27: #{simple_conv_forward.19} parent=0 // pred_check_branch
    %355 = sbr.rel (0) target = $region29
  $region28: #{simple_conv_forward.19} parent=0 // pred_region
    _
  $region29: #{simple_conv_forward.19} parent=0 // pred_fallthru
    _

// kernel: simple_conv_forward.20
$region0: #{simple_conv_forward.20}
  #allocation0 [shape = 'u32[]', space=smem, size = 0x4, offset = 0x4, fixed_abs, tag = 'smem constant byte address 0x4 - core index']
  #allocation1 [shape = 'u32[72,128]{1,0:T(1,128)}', space=vmem, size = 0x9000, scoped, tag = 'internal scratch']
  %s0 = inlined_call_operand.vmem [shape: bf16[288,32], index: 0, kind: input, shape index: {}]
  %s1 = inlined_call_operand.vmem [shape: bf16[32,288], index: 1, kind: input, shape index: {}]
  %s2 = inlined_call_operand.vmem [shape: f32[32,1], index: 2, kind: input, shape index: {}]
  %s3 = inlined_call_operand.vmem [shape: f32[32,1], index: 3, kind: input, shape index: {}]
  %s4 = inlined_call_operand.vmem [shape: f32[32,1], index: 4, kind: input, shape index: {}]
  %s5 = inlined_call_operand.vmem [shape: f32[32,32], index: 5, kind: output, shape index: {}]
  %s6 = sld [smem:[#allocation0]]
  $region30: #{simple_conv_forward.20} parent=0
    _
  %s8 = ssub.s32 1, %s6
  %s9 = scalar_select 0, %s8, %s6
  // Predicated region
  $region2: #{simple_conv_forward.20} parent=0 // pred_check
    _
  $region3: #{simple_conv_forward.20} parent=0 // pred_check_branch
    %11 = sbr.rel (0) target = $region5
  $region4: #{simple_conv_forward.20} parent=0 // pred_region
    _
  $region5: #{simple_conv_forward.20} parent=0 // pred_fallthru
    _
  // Predicated region
  $region6: #{simple_conv_forward.20} parent=0 // pred_check
    _
  $region7: #{simple_conv_forward.20} parent=0 // pred_check_branch
    %13 = sbr.rel (0) target = $region9
  $region8: #{simple_conv_forward.20} parent=0 // pred_region
    _
  $region9: #{simple_conv_forward.20} parent=0 // pred_fallthru
    _
  // Predicated region
  $region10: #{simple_conv_forward.20} parent=0 // pred_check
    _
  $region11: #{simple_conv_forward.20} parent=0 // pred_check_branch
    %15 = sbr.rel (0) target = $region13
  $region12: #{simple_conv_forward.20} parent=0 // pred_region
    _
  $region13: #{simple_conv_forward.20} parent=0 // pred_fallthru
    _
  // Predicated region
  $region14: #{simple_conv_forward.20} parent=0 // pred_check
    _
  $region15: #{simple_conv_forward.20} parent=0 // pred_check_branch
    %17 = sbr.rel (0) target = $region17
  $region16: #{simple_conv_forward.20} parent=0 // pred_region
    _
  $region17: #{simple_conv_forward.20} parent=0 // pred_fallthru
    _
  // Predicated region
  $region18: #{simple_conv_forward.20} parent=0 // pred_check
    _
  $region19: #{simple_conv_forward.20} parent=0 // pred_check_branch
    %19 = sbr.rel (0) target = $region21
  $region20: #{simple_conv_forward.20} parent=0 // pred_region
    _
  $region21: #{simple_conv_forward.20} parent=0 // pred_fallthru
    _
  %v21 = vld [vmem:[%s1] sm:$0xff]
  %v22 = vld [vmem:[%s1 + $0x8] sm:$0xf]
  %v23 = vld [vmem:[%s1 + $0xc] sm:$0xff]
  %v24 = vld [vmem:[%s1 + $0x14] sm:$0xf]
  %v25 = vld [vmem:[%s1 + $0x18] sm:$0xff]
  %v26 = vld [vmem:[%s1 + $0x20] sm:$0xf]
  %v27 = vld [vmem:[%s1 + $0x24] sm:$0xff]
  %v28 = vld [vmem:[%s1 + $0x2c] sm:$0xf]
  %v29 = vld [vmem:[%s0] sm:$0xf]
  %v30 = vld [vmem:[%s0 + $0x4] sm:$0xf]
  %v31 = vld [vmem:[%s0 + $0x8] sm:$0xf]
  %v32 = vld [vmem:[%s0 + $0xc] sm:$0xf]
  %v33 = vld [vmem:[%s0 + $0x10] sm:$0xf]
  %v34 = vld [vmem:[%s0 + $0x14] sm:$0xf]
  %v35 = vld [vmem:[%s0 + $0x18] sm:$0xf]
  %v36 = vld [vmem:[%s0 + $0x1c] sm:$0xf]
  %v37 = vld [vmem:[%s0 + $0x20] sm:$0xf]
  %v38 = vld [vmem:[%s0 + $0x24] sm:$0xf]
  %v39 = vld [vmem:[%s0 + $0x28] sm:$0xf]
  %v40 = vld [vmem:[%s0 + $0x2c] sm:$0xf]
  %v41 = vld [vmem:[%s0 + $0x30] sm:$0xf]
  %v42 = vld [vmem:[%s0 + $0x34] sm:$0xf]
  %v43 = vld [vmem:[%s0 + $0x38] sm:$0xf]
  %v44 = vld [vmem:[%s0 + $0x3c] sm:$0xf]
  %v45 = vld [vmem:[%s0 + $0x40] sm:$0xf]
  %v46 = vld [vmem:[%s0 + $0x44] sm:$0xf]
  %v47 = vld [vmem:[%s0 + $0x48] sm:$0xf]
  %v48 = vld [vmem:[%s0 + $0x4c] sm:$0xf]
  %v49 = vld [vmem:[%s0 + $0x50] sm:$0xf]
  %v50 = vld [vmem:[%s0 + $0x54] sm:$0xf]
  %v51 = vld [vmem:[%s0 + $0x58] sm:$0xf]
  %v52 = vld [vmem:[%s0 + $0x5c] sm:$0xf]
  %v53 = vld [vmem:[%s0 + $0x60] sm:$0xf]
  %v54 = vld [vmem:[%s0 + $0x64] sm:$0xf]
  %v55 = vld [vmem:[%s0 + $0x68] sm:$0xf]
  %v56 = vld [vmem:[%s0 + $0x6c] sm:$0xf]
  %v57 = vld [vmem:[%s0 + $0x70] sm:$0xf]
  %v58 = vld [vmem:[%s0 + $0x74] sm:$0xf]
  %v59 = vld [vmem:[%s0 + $0x78] sm:$0xf]
  %v60 = vld [vmem:[%s0 + $0x7c] sm:$0xf]
  %v61 = vld [vmem:[%s0 + $0x80] sm:$0xf]
  %v62 = vld [vmem:[%s0 + $0x84] sm:$0xf]
  %v63 = vld [vmem:[%s0 + $0x88] sm:$0xf]
  %v64 = vld [vmem:[%s0 + $0x8c] sm:$0xf]
  %v65 = vld [vmem:[%s2] sm:$0xff]
  %v66 = vld [vmem:[%s2 + $0x8] sm:$0xff]
  %v67 = vld [vmem:[%s2 + $0x10] sm:$0xff]
  %v68 = vld [vmem:[%s2 + $0x18] sm:$0xff]
  %70 = vset.pattern.permute.xlu0 0
  %71 = vperm.xlu0 %70, %v65
  %v72 = vpop.permute.xlu0 %71
  %75 = vset.pattern.permute.xlu0 0
  %76 = vperm.xlu0 %75, %v66
  %v77 = vpop.permute.xlu0 %76
  %80 = vset.pattern.permute.xlu0 0
  %81 = vperm.xlu0 %80, %v67
  %v82 = vpop.permute.xlu0 %81
  %85 = vset.pattern.permute.xlu0 0
  %86 = vperm.xlu0 %85, %v68
  %v87 = vpop.permute.xlu0 %86
  %v97 = vunpack.c.l.b16 %v21
  %v98 = vunpack.c.h.b16 %v21
  %v99 = vunpack.c.l.b16 %v22
  %v100 = vunpack.c.l.b16 %v23
  %v101 = vunpack.c.h.b16 %v23
  %v102 = vunpack.c.l.b16 %v24
  %v103 = vunpack.c.l.b16 %v25
  %v104 = vunpack.c.h.b16 %v25
  %v105 = vunpack.c.l.b16 %v26
  %v106 = vunpack.c.l.b16 %v27
  %v107 = vunpack.c.h.b16 %v27
  %v108 = vunpack.c.l.b16 %v28
  %v109 = vpack.c.b16 %v100, %v97
  %v110 = vpack.c.b16 %v101, %v98
  %v111 = vpack.c.b16 %v102, %v99
  %v112 = vpack.c.b16 %v106, %v103
  %v113 = vpack.c.b16 %v107, %v104
  %v114 = vpack.c.b16 %v108, %v105
  %v155 = vunpack.c.l.b16 %v29
  %v156 = vunpack.c.l.b16 %v30
  %v157 = vunpack.c.l.b16 %v31
  %v158 = vunpack.c.l.b16 %v32
  %v159 = vunpack.c.l.b16 %v33
  %v160 = vunpack.c.l.b16 %v34
  %v161 = vunpack.c.l.b16 %v35
  %v162 = vunpack.c.l.b16 %v36
  %v163 = vunpack.c.l.b16 %v37
  %v164 = vunpack.c.l.b16 %v38
  %v165 = vunpack.c.l.b16 %v39
  %v166 = vunpack.c.l.b16 %v40
  %v167 = vunpack.c.l.b16 %v41
  %v168 = vunpack.c.l.b16 %v42
  %v169 = vunpack.c.l.b16 %v43
  %v170 = vunpack.c.l.b16 %v44
  %v171 = vunpack.c.l.b16 %v45
  %v172 = vunpack.c.l.b16 %v46
  %v173 = vunpack.c.l.b16 %v47
  %v174 = vunpack.c.l.b16 %v48
  %v175 = vunpack.c.l.b16 %v49
  %v176 = vunpack.c.l.b16 %v50
  %v177 = vunpack.c.l.b16 %v51
  %v178 = vunpack.c.l.b16 %v52
  %v179 = vunpack.c.l.b16 %v53
  %v180 = vunpack.c.l.b16 %v54
  %v181 = vunpack.c.l.b16 %v55
  %v182 = vunpack.c.l.b16 %v56
  %v183 = vunpack.c.l.b16 %v57
  %v184 = vunpack.c.l.b16 %v58
  %v185 = vunpack.c.l.b16 %v59
  %v186 = vunpack.c.l.b16 %v60
  %v187 = vunpack.c.l.b16 %v61
  %v188 = vunpack.c.l.b16 %v62
  %v189 = vunpack.c.l.b16 %v63
  %v190 = vunpack.c.l.b16 %v64
  %v191 = vpack.c.b16 %v156, %v155
  %v192 = vpack.c.b16 %v158, %v157
  %v193 = vpack.c.b16 %v160, %v159
  %v194 = vpack.c.b16 %v162, %v161
  %v195 = vpack.c.b16 %v164, %v163
  %v196 = vpack.c.b16 %v166, %v165
  %v197 = vpack.c.b16 %v168, %v167
  %v198 = vpack.c.b16 %v170, %v169
  %v199 = vpack.c.b16 %v172, %v171
  %v200 = vpack.c.b16 %v174, %v173
  %v201 = vpack.c.b16 %v176, %v175
  %v202 = vpack.c.b16 %v178, %v177
  %v203 = vpack.c.b16 %v180, %v179
  %v204 = vpack.c.b16 %v182, %v181
  %v205 = vpack.c.b16 %v184, %v183
  %v206 = vpack.c.b16 %v186, %v185
  %v207 = vpack.c.b16 %v188, %v187
  %v208 = vpack.c.b16 %v190, %v189
  %vm227 = vcmask 261120
  %v229 = vsel %vm227, %v111, 0
  %v232 = vsel %vm227, %v114, 0
  %234 = vmatpush.bf16.msra.mxu0 %v198
  %235 = vmatpush.bf16.msra.mxu0 %v197
  %236 = vmatpush.bf16.msra.mxu0 %v196
  %237 = vmatpush.bf16.msra.mxu0 %v195
  %238 = vmatpush.bf16.msra.mxu0 %v194
  %239 = vmatpush.bf16.msra.mxu0 %v193
  %240 = vmatpush.bf16.msra.mxu0 %v192
  %241 = vmatpush.bf16.msra.mxu0 %v191
  %242 = vmatmul.bf16.gmra.mxu0 %v109
  %v243 = vpop.f32.mrf.mxu0
  %v244 = vadd.f32 %v72, %v243
  %v245 = vpop.f32.mrf.mxu0
  %v246 = vadd.f32 %v77, %v245
  %247 = vmatmul.bf16.gmra.mxu0 %v112
  %v248 = vpop.f32.mrf.mxu0
  %v249 = vadd.f32 %v82, %v248
  %v250 = vpop.f32.mrf.mxu0
  %v251 = vadd.f32 %v87, %v250
  %252 = vdwg.mxu0
  %253 = vmatpush.bf16.msra.mxu0 %v206
  %254 = vmatpush.bf16.msra.mxu0 %v205
  %255 = vmatpush.bf16.msra.mxu0 %v204
  %256 = vmatpush.bf16.msra.mxu0 %v203
  %257 = vmatpush.bf16.msra.mxu0 %v202
  %258 = vmatpush.bf16.msra.mxu0 %v201
  %259 = vmatpush.bf16.msra.mxu0 %v200
  %260 = vmatpush.bf16.msra.mxu0 %v199
  %261 = vmatmul.bf16.gmra.mxu0 %v110
  %v262 = vpop.f32.mrf.mxu0
  %v263 = vadd.f32 %v244, %v262
  %v264 = vpop.f32.mrf.mxu0
  %v265 = vadd.f32 %v246, %v264
  %266 = vmatmul.bf16.gmra.mxu0 %v113
  %v267 = vpop.f32.mrf.mxu0
  %v268 = vadd.f32 %v249, %v267
  %v269 = vpop.f32.mrf.mxu0
  %v270 = vadd.f32 %v251, %v269
  %271 = vdwg.mxu0
  %272 = vmatpush.bf16.msra.mxu0 0
  %273 = vmatpush.bf16.msra.mxu0 0
  %274 = vmatpush.bf16.msra.mxu0 0
  %275 = vmatpush.bf16.msra.mxu0 0
  %276 = vmatpush.bf16.msra.mxu0 0
  %277 = vmatpush.bf16.msra.mxu0 0
  %278 = vmatpush.bf16.msra.mxu0 %v208
  %279 = vmatpush.bf16.msra.mxu0 %v207
  %280 = vmatmul.bf16.gmra.mxu0 %v229
  %v281 = vpop.f32.mrf.mxu0
  %v282 = vadd.f32 %v263, %v281
  %v283 = vpop.f32.mrf.mxu0
  %v284 = vadd.f32 %v265, %v283
  %285 = vmatmul.bf16.gmra.mxu0 %v232
  %v286 = vpop.f32.mrf.mxu0
  %v287 = vadd.f32 %v268, %v286
  %v288 = vpop.f32.mrf.mxu0
  %v289 = vadd.f32 %v270, %v288
  %290 = vdwg.mxu0
  %v291 = vsel %vm227, %v282, 0.0
  %292 = vadd.xlane.f32.xlu0 %v291
  %v293 = vpop.xlane.xlu0 %292
  %v294 = vsel %vm227, %v284, 0.0
  %295 = vadd.xlane.f32.xlu0 %v294
  %v296 = vpop.xlane.xlu0 %295
  %v297 = vsel %vm227, %v287, 0.0
  %298 = vadd.xlane.f32.xlu0 %v297
  %v299 = vpop.xlane.xlu0 %298
  %v300 = vsel %vm227, %v289, 0.0
  %301 = vadd.xlane.f32.xlu0 %v300
  %v302 = vpop.xlane.xlu0 %301
  %v303 = vrcp.pop 32.0
  %v304 = vmul.f32 32.0, %v303
  %v305 = vsub.f32 1.0, %v304
  %v306 = vmul.f32 %v303, %v305
  %v307 = vadd.f32 %v303, %v306
  %vm308 = vweird.f32 %v303
  %v309 = vsel %vm308, %v303, %v307
  %v310 = vmul.f32 %v293, %v309
  %v311 = vmul.f32 %v296, %v309
  %v312 = vmul.f32 %v299, %v309
  %v313 = vmul.f32 %v302, %v309
  %v314 = vsub.f32 %v282, %v310
  %v315 = vsub.f32 %v284, %v311
  %v316 = vsub.f32 %v287, %v312
  %v317 = vsub.f32 %v289, %v313
  %v318 = vmul.f32 %v314, %v314
  %v319 = vmul.f32 %v315, %v315
  %v320 = vmul.f32 %v316, %v316
  %v321 = vmul.f32 %v317, %v317
  %v322 = vsel %vm227, %v318, 0.0
  %323 = vadd.xlane.f32.xlu0 %v322
  %v324 = vpop.xlane.xlu0 %323
  %v325 = vsel %vm227, %v319, 0.0
  %326 = vadd.xlane.f32.xlu0 %v325
  %v327 = vpop.xlane.xlu0 %326
  %v328 = vsel %vm227, %v320, 0.0
  %329 = vadd.xlane.f32.xlu0 %v328
  %v330 = vpop.xlane.xlu0 %329
  %v331 = vsel %vm227, %v321, 0.0
  %332 = vadd.xlane.f32.xlu0 %v331
  %v333 = vpop.xlane.xlu0 %332
  %v334 = vmul.f32 %v324, %v309
  %v335 = vmul.f32 %v327, %v309
  %v336 = vmul.f32 %v330, %v309
  %v337 = vmul.f32 %v333, %v309
  %v338 = vld [vmem:[%s3] sm:$0xff]
  %v339 = vld [vmem:[%s3 + $0x8] sm:$0xff]
  %v340 = vld [vmem:[%s3 + $0x10] sm:$0xff]
  %v341 = vld [vmem:[%s3 + $0x18] sm:$0xff]
  %v342 = vadd.f32 %v334, 1e-05
  %v343 = vadd.f32 %v335, 1e-05
  %v344 = vadd.f32 %v336, 1e-05
  %v345 = vadd.f32 %v337, 1e-05
  %v346 = vrsqrt.pop %v342
  %v347 = vmul.f32 %v346, %v342
  %v348 = vmul.f32 %v347, %v346
  %v349 = vmul.f32 0.5, %v348
  %v350 = vsub.f32 1.5, %v349
  %v351 = vmul.f32 %v346, %v350
  %vm352 = vweird.f32 %v342
  %vm353 = vweird.f32 %v346
  %vm354 = vmor %vm352, %vm353
  %v355 = vsel %vm354, %v346, %v351
  %v356 = vrsqrt.pop %v343
  %v357 = vmul.f32 %v356, %v343
  %v358 = vmul.f32 %v357, %v356
  %v359 = vmul.f32 0.5, %v358
  %v360 = vsub.f32 1.5, %v359
  %v361 = vmul.f32 %v356, %v360
  %vm362 = vweird.f32 %v343
  %vm363 = vweird.f32 %v356
  %vm364 = vmor %vm362, %vm363
  %v365 = vsel %vm364, %v356, %v361
  %v366 = vrsqrt.pop %v344
  %v367 = vmul.f32 %v366, %v344
  %v368 = vmul.f32 %v367, %v366
  %v369 = vmul.f32 0.5, %v368
  %v370 = vsub.f32 1.5, %v369
  %v371 = vmul.f32 %v366, %v370
  %vm372 = vweird.f32 %v344
  %vm373 = vweird.f32 %v366
  %vm374 = vmor %vm372, %vm373
  %v375 = vsel %vm374, %v366, %v371
  %v376 = vrsqrt.pop %v345
  %v377 = vmul.f32 %v376, %v345
  %v378 = vmul.f32 %v377, %v376
  %v379 = vmul.f32 0.5, %v378
  %v380 = vsub.f32 1.5, %v379
  %v381 = vmul.f32 %v376, %v380
  %vm382 = vweird.f32 %v345
  %vm383 = vweird.f32 %v376
  %vm384 = vmor %vm382, %vm383
  %v385 = vsel %vm384, %v376, %v381
  %v386 = vmul.f32 %v338, %v355
  %v387 = vmul.f32 %v339, %v365
  %v388 = vmul.f32 %v340, %v375
  %v389 = vmul.f32 %v341, %v385
  %v390 = vld [vmem:[%s4] sm:$0xff]
  %v391 = vld [vmem:[%s4 + $0x8] sm:$0xff]
  %v392 = vld [vmem:[%s4 + $0x10] sm:$0xff]
  %v393 = vld [vmem:[%s4 + $0x18] sm:$0xff]
  %v394 = vmul.f32 %v310, %v386
  %v395 = vmul.f32 %v311, %v387
  %v396 = vmul.f32 %v312, %v388
  %v397 = vmul.f32 %v313, %v389
  %v398 = vsub.f32 %v390, %v394
  %v399 = vsub.f32 %v391, %v395
  %v400 = vsub.f32 %v392, %v396
  %v401 = vsub.f32 %v393, %v397
  %403 = vset.pattern.permute.xlu0 0
  %404 = vperm.xlu0 %403, %v386
  %v405 = vpop.permute.xlu0 %404
  %408 = vset.pattern.permute.xlu0 0
  %409 = vperm.xlu0 %408, %v387
  %v410 = vpop.permute.xlu0 %409
  %413 = vset.pattern.permute.xlu0 0
  %414 = vperm.xlu0 %413, %v388
  %v415 = vpop.permute.xlu0 %414
  %418 = vset.pattern.permute.xlu0 0
  %419 = vperm.xlu0 %418, %v389
  %v420 = vpop.permute.xlu0 %419
  %v422 = vmul.f32 %v282, %v405
  %v423 = vmul.f32 %v284, %v410
  %v424 = vmul.f32 %v287, %v415
  %v425 = vmul.f32 %v289, %v420
  %427 = vset.pattern.permute.xlu0 0
  %428 = vperm.xlu0 %427, %v398
  %v429 = vpop.permute.xlu0 %428
  %432 = vset.pattern.permute.xlu0 0
  %433 = vperm.xlu0 %432, %v399
  %v434 = vpop.permute.xlu0 %433
  %437 = vset.pattern.permute.xlu0 0
  %438 = vperm.xlu0 %437, %v400
  %v439 = vpop.permute.xlu0 %438
  %442 = vset.pattern.permute.xlu0 0
  %443 = vperm.xlu0 %442, %v401
  %v444 = vpop.permute.xlu0 %443
  %v446 = vadd.f32 %v422, %v429
  %v447 = vadd.f32 %v423, %v434
  %v448 = vadd.f32 %v424, %v439
  %v449 = vadd.f32 %v425, %v444
  %v450 = vmax.f32 %v446, 0.0
  %v451 = vmax.f32 %v447, 0.0
  %v452 = vmax.f32 %v448, 0.0
  %v453 = vmax.f32 %v449, 0.0
  %454 = vst.msk [vmem:[%s5] sm:$0xff] %vm227, %v450
  %455 = vst.msk [vmem:[%s5 + $0x8] sm:$0xff] %vm227, %v451
  %456 = vst.msk [vmem:[%s5 + $0x10] sm:$0xff] %vm227, %v452
  %457 = vst.msk [vmem:[%s5 + $0x18] sm:$0xff] %vm227, %v453
  // Predicated region
  $region22: #{simple_conv_forward.20} parent=0 // pred_check
    _
  $region23: #{simple_conv_forward.20} parent=0 // pred_check_branch
    %459 = sbr.rel (0) target = $region25
  $region24: #{simple_conv_forward.20} parent=0 // pred_region
    _
  $region25: #{simple_conv_forward.20} parent=0 // pred_fallthru
    _
  // Predicated region
  $region26: #{simple_conv_forward.20} parent=0 // pred_check
    _
  $region27: #{simple_conv_forward.20} parent=0 // pred_check_branch
    %461 = sbr.rel (0) target = $region29
  $region28: #{simple_conv_forward.20} parent=0 // pred_region
    _
  $region29: #{simple_conv_forward.20} parent=0 // pred_fallthru
    _

// kernel: simple_conv_forward.21
$region0: #{simple_conv_forward.21}
  #allocation0 [shape = 'u32[]', space=smem, size = 0x4, offset = 0x4, fixed_abs, tag = 'smem constant byte address 0x4 - core index']
  #allocation1 [shape = 'u32[72,128]{1,0:T(1,128)}', space=vmem, size = 0x9000, scoped, tag = 'internal scratch']
  %s0 = inlined_call_operand.vmem [shape: bf16[288,8], index: 0, kind: input, shape index: {}]
  %s1 = inlined_call_operand.vmem [shape: bf16[16,288], index: 1, kind: input, shape index: {}]
  %s2 = inlined_call_operand.vmem [shape: f32[16,1], index: 2, kind: input, shape index: {}]
  %s3 = inlined_call_operand.vmem [shape: f32[16,1], index: 3, kind: input, shape index: {}]
  %s4 = inlined_call_operand.vmem [shape: f32[16,1], index: 4, kind: input, shape index: {}]
  %s5 = inlined_call_operand.vmem [shape: f32[16,8], index: 5, kind: output, shape index: {}]
  %s6 = sld [smem:[#allocation0]]
  $region30: #{simple_conv_forward.21} parent=0
    _
  %s8 = ssub.s32 1, %s6
  %s9 = scalar_select 0, %s8, %s6
  // Predicated region
  $region2: #{simple_conv_forward.21} parent=0 // pred_check
    _
  $region3: #{simple_conv_forward.21} parent=0 // pred_check_branch
    %11 = sbr.rel (0) target = $region5
  $region4: #{simple_conv_forward.21} parent=0 // pred_region
    _
  $region5: #{simple_conv_forward.21} parent=0 // pred_fallthru
    _
  // Predicated region
  $region6: #{simple_conv_forward.21} parent=0 // pred_check
    _
  $region7: #{simple_conv_forward.21} parent=0 // pred_check_branch
    %13 = sbr.rel (0) target = $region9
  $region8: #{simple_conv_forward.21} parent=0 // pred_region
    _
  $region9: #{simple_conv_forward.21} parent=0 // pred_fallthru
    _
  // Predicated region
  $region10: #{simple_conv_forward.21} parent=0 // pred_check
    _
  $region11: #{simple_conv_forward.21} parent=0 // pred_check_branch
    %15 = sbr.rel (0) target = $region13
  $region12: #{simple_conv_forward.21} parent=0 // pred_region
    _
  $region13: #{simple_conv_forward.21} parent=0 // pred_fallthru
    _
  // Predicated region
  $region14: #{simple_conv_forward.21} parent=0 // pred_check
    _
  $region15: #{simple_conv_forward.21} parent=0 // pred_check_branch
    %17 = sbr.rel (0) target = $region17
  $region16: #{simple_conv_forward.21} parent=0 // pred_region
    _
  $region17: #{simple_conv_forward.21} parent=0 // pred_fallthru
    _
  // Predicated region
  $region18: #{simple_conv_forward.21} parent=0 // pred_check
    _
  $region19: #{simple_conv_forward.21} parent=0 // pred_check_branch
    %19 = sbr.rel (0) target = $region21
  $region20: #{simple_conv_forward.21} parent=0 // pred_region
    _
  $region21: #{simple_conv_forward.21} parent=0 // pred_fallthru
    _
  %v21 = vld [vmem:[%s1] sm:$0xff]
  %v22 = vld [vmem:[%s1 + $0x8] sm:$0xf]
  %v23 = vld [vmem:[%s1 + $0xc] sm:$0xff]
  %v24 = vld [vmem:[%s1 + $0x14] sm:$0xf]
  %v25 = vld [vmem:[%s0] sm:$0xf]
  %v26 = vld [vmem:[%s0 + $0x4] sm:$0xf]
  %v27 = vld [vmem:[%s0 + $0x8] sm:$0xf]
  %v28 = vld [vmem:[%s0 + $0xc] sm:$0xf]
  %v29 = vld [vmem:[%s0 + $0x10] sm:$0xf]
  %v30 = vld [vmem:[%s0 + $0x14] sm:$0xf]
  %v31 = vld [vmem:[%s0 + $0x18] sm:$0xf]
  %v32 = vld [vmem:[%s0 + $0x1c] sm:$0xf]
  %v33 = vld [vmem:[%s0 + $0x20] sm:$0xf]
  %v34 = vld [vmem:[%s0 + $0x24] sm:$0xf]
  %v35 = vld [vmem:[%s0 + $0x28] sm:$0xf]
  %v36 = vld [vmem:[%s0 + $0x2c] sm:$0xf]
  %v37 = vld [vmem:[%s0 + $0x30] sm:$0xf]
  %v38 = vld [vmem:[%s0 + $0x34] sm:$0xf]
  %v39 = vld [vmem:[%s0 + $0x38] sm:$0xf]
  %v40 = vld [vmem:[%s0 + $0x3c] sm:$0xf]
  %v41 = vld [vmem:[%s0 + $0x40] sm:$0xf]
  %v42 = vld [vmem:[%s0 + $0x44] sm:$0xf]
  %v43 = vld [vmem:[%s0 + $0x48] sm:$0xf]
  %v44 = vld [vmem:[%s0 + $0x4c] sm:$0xf]
  %v45 = vld [vmem:[%s0 + $0x50] sm:$0xf]
  %v46 = vld [vmem:[%s0 + $0x54] sm:$0xf]
  %v47 = vld [vmem:[%s0 + $0x58] sm:$0xf]
  %v48 = vld [vmem:[%s0 + $0x5c] sm:$0xf]
  %v49 = vld [vmem:[%s0 + $0x60] sm:$0xf]
  %v50 = vld [vmem:[%s0 + $0x64] sm:$0xf]
  %v51 = vld [vmem:[%s0 + $0x68] sm:$0xf]
  %v52 = vld [vmem:[%s0 + $0x6c] sm:$0xf]
  %v53 = vld [vmem:[%s0 + $0x70] sm:$0xf]
  %v54 = vld [vmem:[%s0 + $0x74] sm:$0xf]
  %v55 = vld [vmem:[%s0 + $0x78] sm:$0xf]
  %v56 = vld [vmem:[%s0 + $0x7c] sm:$0xf]
  %v57 = vld [vmem:[%s0 + $0x80] sm:$0xf]
  %v58 = vld [vmem:[%s0 + $0x84] sm:$0xf]
  %v59 = vld [vmem:[%s0 + $0x88] sm:$0xf]
  %v60 = vld [vmem:[%s0 + $0x8c] sm:$0xf]
  %v61 = vld [vmem:[%s2] sm:$0xff]
  %v62 = vld [vmem:[%s2 + $0x8] sm:$0xff]
  %64 = vset.pattern.permute.xlu0 0
  %65 = vperm.xlu0 %64, %v61
  %v66 = vpop.permute.xlu0 %65
  %69 = vset.pattern.permute.xlu0 0
  %70 = vperm.xlu0 %69, %v62
  %v71 = vpop.permute.xlu0 %70
  %v77 = vunpack.c.l.b16 %v21
  %v78 = vunpack.c.h.b16 %v21
  %v79 = vunpack.c.l.b16 %v22
  %v80 = vunpack.c.l.b16 %v23
  %v81 = vunpack.c.h.b16 %v23
  %v82 = vunpack.c.l.b16 %v24
  %v83 = vpack.c.b16 %v80, %v77
  %v84 = vpack.c.b16 %v81, %v78
  %v85 = vpack.c.b16 %v82, %v79
  %v124 = vunpack.c.l.b16 %v25
  %v125 = vunpack.c.l.b16 %v26
  %v126 = vunpack.c.l.b16 %v27
  %v127 = vunpack.c.l.b16 %v28
  %v128 = vunpack.c.l.b16 %v29
  %v129 = vunpack.c.l.b16 %v30
  %v130 = vunpack.c.l.b16 %v31
  %v131 = vunpack.c.l.b16 %v32
  %v132 = vunpack.c.l.b16 %v33
  %v133 = vunpack.c.l.b16 %v34
  %v134 = vunpack.c.l.b16 %v35
  %v135 = vunpack.c.l.b16 %v36
  %v136 = vunpack.c.l.b16 %v37
  %v137 = vunpack.c.l.b16 %v38
  %v138 = vunpack.c.l.b16 %v39
  %v139 = vunpack.c.l.b16 %v40
  %v140 = vunpack.c.l.b16 %v41
  %v141 = vunpack.c.l.b16 %v42
  %v142 = vunpack.c.l.b16 %v43
  %v143 = vunpack.c.l.b16 %v44
  %v144 = vunpack.c.l.b16 %v45
  %v145 = vunpack.c.l.b16 %v46
  %v146 = vunpack.c.l.b16 %v47
  %v147 = vunpack.c.l.b16 %v48
  %v148 = vunpack.c.l.b16 %v49
  %v149 = vunpack.c.l.b16 %v50
  %v150 = vunpack.c.l.b16 %v51
  %v151 = vunpack.c.l.b16 %v52
  %v152 = vunpack.c.l.b16 %v53
  %v153 = vunpack.c.l.b16 %v54
  %v154 = vunpack.c.l.b16 %v55
  %v155 = vunpack.c.l.b16 %v56
  %v156 = vunpack.c.l.b16 %v57
  %v157 = vunpack.c.l.b16 %v58
  %v158 = vunpack.c.l.b16 %v59
  %v159 = vunpack.c.l.b16 %v60
  %v160 = vpack.c.b16 %v125, %v124
  %v161 = vpack.c.b16 %v127, %v126
  %v162 = vpack.c.b16 %v129, %v128
  %v163 = vpack.c.b16 %v131, %v130
  %v164 = vpack.c.b16 %v133, %v132
  %v165 = vpack.c.b16 %v135, %v134
  %v166 = vpack.c.b16 %v137, %v136
  %v167 = vpack.c.b16 %v139, %v138
  %v168 = vpack.c.b16 %v141, %v140
  %v169 = vpack.c.b16 %v143, %v142
  %v170 = vpack.c.b16 %v145, %v144
  %v171 = vpack.c.b16 %v147, %v146
  %v172 = vpack.c.b16 %v149, %v148
  %v173 = vpack.c.b16 %v151, %v150
  %v174 = vpack.c.b16 %v153, %v152
  %v175 = vpack.c.b16 %v155, %v154
  %v176 = vpack.c.b16 %v157, %v156
  %v177 = vpack.c.b16 %v159, %v158
  %vm196 = vcmask 261120
  %v198 = vsel %vm196, %v85, 0
  %200 = vmatpush.bf16.msra.mxu0 %v167
  %201 = vmatpush.bf16.msra.mxu0 %v166
  %202 = vmatpush.bf16.msra.mxu0 %v165
  %203 = vmatpush.bf16.msra.mxu0 %v164
  %204 = vmatpush.bf16.msra.mxu0 %v163
  %205 = vmatpush.bf16.msra.mxu0 %v162
  %206 = vmatpush.bf16.msra.mxu0 %v161
  %207 = vmatpush.bf16.msra.mxu0 %v160
  %208 = vmatmul.bf16.gmra.mxu0 %v83
  %v209 = vpop.f32.mrf.mxu0
  %v210 = vadd.f32 %v66, %v209
  %v211 = vpop.f32.mrf.mxu0
  %v212 = vadd.f32 %v71, %v211
  %213 = vdwg.mxu0
  %214 = vmatpush.bf16.msra.mxu0 %v175
  %215 = vmatpush.bf16.msra.mxu0 %v174
  %216 = vmatpush.bf16.msra.mxu0 %v173
  %217 = vmatpush.bf16.msra.mxu0 %v172
  %218 = vmatpush.bf16.msra.mxu0 %v171
  %219 = vmatpush.bf16.msra.mxu0 %v170
  %220 = vmatpush.bf16.msra.mxu0 %v169
  %221 = vmatpush.bf16.msra.mxu0 %v168
  %222 = vmatmul.bf16.gmra.mxu0 %v84
  %v223 = vpop.f32.mrf.mxu0
  %v224 = vadd.f32 %v210, %v223
  %v225 = vpop.f32.mrf.mxu0
  %v226 = vadd.f32 %v212, %v225
  %227 = vdwg.mxu0
  %228 = vmatpush.bf16.msra.mxu0 0
  %229 = vmatpush.bf16.msra.mxu0 0
  %230 = vmatpush.bf16.msra.mxu0 0
  %231 = vmatpush.bf16.msra.mxu0 0
  %232 = vmatpush.bf16.msra.mxu0 0
  %233 = vmatpush.bf16.msra.mxu0 0
  %234 = vmatpush.bf16.msra.mxu0 %v177
  %235 = vmatpush.bf16.msra.mxu0 %v176
  %236 = vmatmul.bf16.gmra.mxu0 %v198
  %v237 = vpop.f32.mrf.mxu0
  %v238 = vadd.f32 %v224, %v237
  %v239 = vpop.f32.mrf.mxu0
  %v240 = vadd.f32 %v226, %v239
  %241 = vdwg.mxu0
  %vm242 = vcmask 64512
  %v243 = vsel %vm242, %v238, 0.0
  %244 = vadd.xlane.f32.xlu0 %v243
  %v245 = vpop.xlane.xlu0 %244
  %v246 = vsel %vm242, %v240, 0.0
  %247 = vadd.xlane.f32.xlu0 %v246
  %v248 = vpop.xlane.xlu0 %247
  %v249 = vrcp.pop 8.0
  %v250 = vmul.f32 8.0, %v249
  %v251 = vsub.f32 1.0, %v250
  %v252 = vmul.f32 %v249, %v251
  %v253 = vadd.f32 %v249, %v252
  %vm254 = vweird.f32 %v249
  %v255 = vsel %vm254, %v249, %v253
  %v256 = vmul.f32 %v245, %v255
  %v257 = vmul.f32 %v248, %v255
  %v258 = vsub.f32 %v238, %v256
  %v259 = vsub.f32 %v240, %v257
  %v260 = vmul.f32 %v258, %v258
  %v261 = vmul.f32 %v259, %v259
  %v262 = vsel %vm242, %v260, 0.0
  %263 = vadd.xlane.f32.xlu0 %v262
  %v264 = vpop.xlane.xlu0 %263
  %v265 = vsel %vm242, %v261, 0.0
  %266 = vadd.xlane.f32.xlu0 %v265
  %v267 = vpop.xlane.xlu0 %266
  %v268 = vmul.f32 %v264, %v255
  %v269 = vmul.f32 %v267, %v255
  %v270 = vld [vmem:[%s3] sm:$0xff]
  %v271 = vld [vmem:[%s3 + $0x8] sm:$0xff]
  %v272 = vadd.f32 %v268, 1e-05
  %v273 = vadd.f32 %v269, 1e-05
  %v274 = vrsqrt.pop %v272
  %v275 = vmul.f32 %v274, %v272
  %v276 = vmul.f32 %v275, %v274
  %v277 = vmul.f32 0.5, %v276
  %v278 = vsub.f32 1.5, %v277
  %v279 = vmul.f32 %v274, %v278
  %vm280 = vweird.f32 %v272
  %vm281 = vweird.f32 %v274
  %vm282 = vmor %vm280, %vm281
  %v283 = vsel %vm282, %v274, %v279
  %v284 = vrsqrt.pop %v273
  %v285 = vmul.f32 %v284, %v273
  %v286 = vmul.f32 %v285, %v284
  %v287 = vmul.f32 0.5, %v286
  %v288 = vsub.f32 1.5, %v287
  %v289 = vmul.f32 %v284, %v288
  %vm290 = vweird.f32 %v273
  %vm291 = vweird.f32 %v284
  %vm292 = vmor %vm290, %vm291
  %v293 = vsel %vm292, %v284, %v289
  %v294 = vmul.f32 %v270, %v283
  %v295 = vmul.f32 %v271, %v293
  %v296 = vld [vmem:[%s4] sm:$0xff]
  %v297 = vld [vmem:[%s4 + $0x8] sm:$0xff]
  %v298 = vmul.f32 %v256, %v294
  %v299 = vmul.f32 %v257, %v295
  %v300 = vsub.f32 %v296, %v298
  %v301 = vsub.f32 %v297, %v299
  %303 = vset.pattern.permute.xlu0 0
  %304 = vperm.xlu0 %303, %v294
  %v305 = vpop.permute.xlu0 %304
  %308 = vset.pattern.permute.xlu0 0
  %309 = vperm.xlu0 %308, %v295
  %v310 = vpop.permute.xlu0 %309
  %v312 = vmul.f32 %v238, %v305
  %v313 = vmul.f32 %v240, %v310
  %315 = vset.pattern.permute.xlu0 0
  %316 = vperm.xlu0 %315, %v300
  %v317 = vpop.permute.xlu0 %316
  %320 = vset.pattern.permute.xlu0 0
  %321 = vperm.xlu0 %320, %v301
  %v322 = vpop.permute.xlu0 %321
  %v324 = vadd.f32 %v312, %v317
  %v325 = vadd.f32 %v313, %v322
  %v326 = vmax.f32 %v324, 0.0
  %v327 = vmax.f32 %v325, 0.0
  %328 = vst.msk [vmem:[%s5] sm:$0xff] %vm242, %v326
  %329 = vst.msk [vmem:[%s5 + $0x8] sm:$0xff] %vm242, %v327
  // Predicated region
  $region22: #{simple_conv_forward.21} parent=0 // pred_check
    _
  $region23: #{simple_conv_forward.21} parent=0 // pred_check_branch
    %331 = sbr.rel (0) target = $region25
  $region24: #{simple_conv_forward.21} parent=0 // pred_region
    _
  $region25: #{simple_conv_forward.21} parent=0 // pred_fallthru
    _
  // Predicated region
  $region26: #{simple_conv_forward.21} parent=0 // pred_check
    _
  $region27: #{simple_conv_forward.21} parent=0 // pred_check_branch
    %333 = sbr.rel (0) target = $region29
  $region28: #{simple_conv_forward.21} parent=0 // pred_region
    _
  $region29: #{simple_conv_forward.21} parent=0 // pred_fallthru
    _

// kernel: simple_conv_forward.22
$region0: #{simple_conv_forward.22}
  #allocation0 [shape = 'u32[]', space=smem, size = 0x4, offset = 0x4, fixed_abs, tag = 'smem constant byte address 0x4 - core index']
  #allocation1 [shape = 'u32[72,128]{1,0:T(1,128)}', space=vmem, size = 0x9000, scoped, tag = 'internal scratch']
  %s0 = inlined_call_operand.vmem [shape: bf16[144,8], index: 0, kind: input, shape index: {}]
  %s1 = inlined_call_operand.vmem [shape: bf16[16,144], index: 1, kind: input, shape index: {}]
  %s2 = inlined_call_operand.vmem [shape: f32[16,1], index: 2, kind: input, shape index: {}]
  %s3 = inlined_call_operand.vmem [shape: f32[16,1], index: 3, kind: input, shape index: {}]
  %s4 = inlined_call_operand.vmem [shape: f32[16,1], index: 4, kind: input, shape index: {}]
  %s5 = inlined_call_operand.vmem [shape: f32[16,8], index: 5, kind: output, shape index: {}]
  %s6 = sld [smem:[#allocation0]]
  $region30: #{simple_conv_forward.22} parent=0
    _
  %s8 = ssub.s32 1, %s6
  %s9 = scalar_select 0, %s8, %s6
  // Predicated region
  $region2: #{simple_conv_forward.22} parent=0 // pred_check
    _
  $region3: #{simple_conv_forward.22} parent=0 // pred_check_branch
    %11 = sbr.rel (0) target = $region5
  $region4: #{simple_conv_forward.22} parent=0 // pred_region
    _
  $region5: #{simple_conv_forward.22} parent=0 // pred_fallthru
    _
  // Predicated region
  $region6: #{simple_conv_forward.22} parent=0 // pred_check
    _
  $region7: #{simple_conv_forward.22} parent=0 // pred_check_branch
    %13 = sbr.rel (0) target = $region9
  $region8: #{simple_conv_forward.22} parent=0 // pred_region
    _
  $region9: #{simple_conv_forward.22} parent=0 // pred_fallthru
    _
  // Predicated region
  $region10: #{simple_conv_forward.22} parent=0 // pred_check
    _
  $region11: #{simple_conv_forward.22} parent=0 // pred_check_branch
    %15 = sbr.rel (0) target = $region13
  $region12: #{simple_conv_forward.22} parent=0 // pred_region
    _
  $region13: #{simple_conv_forward.22} parent=0 // pred_fallthru
    _
  // Predicated region
  $region14: #{simple_conv_forward.22} parent=0 // pred_check
    _
  $region15: #{simple_conv_forward.22} parent=0 // pred_check_branch
    %17 = sbr.rel (0) target = $region17
  $region16: #{simple_conv_forward.22} parent=0 // pred_region
    _
  $region17: #{simple_conv_forward.22} parent=0 // pred_fallthru
    _
  // Predicated region
  $region18: #{simple_conv_forward.22} parent=0 // pred_check
    _
  $region19: #{simple_conv_forward.22} parent=0 // pred_check_branch
    %19 = sbr.rel (0) target = $region21
  $region20: #{simple_conv_forward.22} parent=0 // pred_region
    _
  $region21: #{simple_conv_forward.22} parent=0 // pred_fallthru
    _
  %v21 = vld [vmem:[%s1] sm:$0xff]
  %v22 = vld [vmem:[%s1 + $0x8] sm:$0xff]
  %v23 = vld [vmem:[%s0] sm:$0xf]
  %v24 = vld [vmem:[%s0 + $0x4] sm:$0xf]
  %v25 = vld [vmem:[%s0 + $0x8] sm:$0xf]
  %v26 = vld [vmem:[%s0 + $0xc] sm:$0xf]
  %v27 = vld [vmem:[%s0 + $0x10] sm:$0xf]
  %v28 = vld [vmem:[%s0 + $0x14] sm:$0xf]
  %v29 = vld [vmem:[%s0 + $0x18] sm:$0xf]
  %v30 = vld [vmem:[%s0 + $0x1c] sm:$0xf]
  %v31 = vld [vmem:[%s0 + $0x20] sm:$0xf]
  %v32 = vld [vmem:[%s0 + $0x24] sm:$0xf]
  %v33 = vld [vmem:[%s0 + $0x28] sm:$0xf]
  %v34 = vld [vmem:[%s0 + $0x2c] sm:$0xf]
  %v35 = vld [vmem:[%s0 + $0x30] sm:$0xf]
  %v36 = vld [vmem:[%s0 + $0x34] sm:$0xf]
  %v37 = vld [vmem:[%s0 + $0x38] sm:$0xf]
  %v38 = vld [vmem:[%s0 + $0x3c] sm:$0xf]
  %v39 = vld [vmem:[%s0 + $0x40] sm:$0xf]
  %v40 = vld [vmem:[%s0 + $0x44] sm:$0xf]
  %v41 = vld [vmem:[%s2] sm:$0xff]
  %v42 = vld [vmem:[%s2 + $0x8] sm:$0xff]
  %44 = vset.pattern.permute.xlu0 0
  %45 = vperm.xlu0 %44, %v41
  %v46 = vpop.permute.xlu0 %45
  %49 = vset.pattern.permute.xlu0 0
  %50 = vperm.xlu0 %49, %v42
  %v51 = vpop.permute.xlu0 %50
  %v55 = vunpack.c.l.b16 %v21
  %v56 = vunpack.c.h.b16 %v21
  %v57 = vunpack.c.l.b16 %v22
  %v58 = vunpack.c.h.b16 %v22
  %v59 = vpack.c.b16 %v57, %v55
  %v60 = vpack.c.b16 %v58, %v56
  %v80 = vunpack.c.l.b16 %v23
  %v81 = vunpack.c.l.b16 %v24
  %v82 = vunpack.c.l.b16 %v25
  %v83 = vunpack.c.l.b16 %v26
  %v84 = vunpack.c.l.b16 %v27
  %v85 = vunpack.c.l.b16 %v28
  %v86 = vunpack.c.l.b16 %v29
  %v87 = vunpack.c.l.b16 %v30
  %v88 = vunpack.c.l.b16 %v31
  %v89 = vunpack.c.l.b16 %v32
  %v90 = vunpack.c.l.b16 %v33
  %v91 = vunpack.c.l.b16 %v34
  %v92 = vunpack.c.l.b16 %v35
  %v93 = vunpack.c.l.b16 %v36
  %v94 = vunpack.c.l.b16 %v37
  %v95 = vunpack.c.l.b16 %v38
  %v96 = vunpack.c.l.b16 %v39
  %v97 = vunpack.c.l.b16 %v40
  %v98 = vpack.c.b16 %v81, %v80
  %v99 = vpack.c.b16 %v83, %v82
  %v100 = vpack.c.b16 %v85, %v84
  %v101 = vpack.c.b16 %v87, %v86
  %v102 = vpack.c.b16 %v89, %v88
  %v103 = vpack.c.b16 %v91, %v90
  %v104 = vpack.c.b16 %v93, %v92
  %v105 = vpack.c.b16 %v95, %v94
  %v106 = vpack.c.b16 %v97, %v96
  %vm116 = vcmask 130048
  %v118 = vsel %vm116, %v60, 0
  %120 = vmatpush.bf16.msra.mxu0 %v105
  %121 = vmatpush.bf16.msra.mxu0 %v104
  %122 = vmatpush.bf16.msra.mxu0 %v103
  %123 = vmatpush.bf16.msra.mxu0 %v102
  %124 = vmatpush.bf16.msra.mxu0 %v101
  %125 = vmatpush.bf16.msra.mxu0 %v100
  %126 = vmatpush.bf16.msra.mxu0 %v99
  %127 = vmatpush.bf16.msra.mxu0 %v98
  %128 = vmatmul.bf16.gmra.mxu0 %v59
  %v129 = vpop.f32.mrf.mxu0
  %v130 = vadd.f32 %v46, %v129
  %v131 = vpop.f32.mrf.mxu0
  %v132 = vadd.f32 %v51, %v131
  %133 = vdwg.mxu0
  %134 = vmatpush.bf16.msra.mxu0 0
  %135 = vmatpush.bf16.msra.mxu0 0
  %136 = vmatpush.bf16.msra.mxu0 0
  %137 = vmatpush.bf16.msra.mxu0 0
  %138 = vmatpush.bf16.msra.mxu0 0
  %139 = vmatpush.bf16.msra.mxu0 0
  %140 = vmatpush.bf16.msra.mxu0 0
  %141 = vmatpush.bf16.msra.mxu0 %v106
  %142 = vmatmul.bf16.gmra.mxu0 %v118
  %v143 = vpop.f32.mrf.mxu0
  %v144 = vadd.f32 %v130, %v143
  %v145 = vpop.f32.mrf.mxu0
  %v146 = vadd.f32 %v132, %v145
  %147 = vdwg.mxu0
  %vm148 = vcmask 64512
  %v149 = vsel %vm148, %v144, 0.0
  %150 = vadd.xlane.f32.xlu0 %v149
  %v151 = vpop.xlane.xlu0 %150
  %v152 = vsel %vm148, %v146, 0.0
  %153 = vadd.xlane.f32.xlu0 %v152
  %v154 = vpop.xlane.xlu0 %153
  %v155 = vrcp.pop 8.0
  %v156 = vmul.f32 8.0, %v155
  %v157 = vsub.f32 1.0, %v156
  %v158 = vmul.f32 %v155, %v157
  %v159 = vadd.f32 %v155, %v158
  %vm160 = vweird.f32 %v155
  %v161 = vsel %vm160, %v155, %v159
  %v162 = vmul.f32 %v151, %v161
  %v163 = vmul.f32 %v154, %v161
  %v164 = vsub.f32 %v144, %v162
  %v165 = vsub.f32 %v146, %v163
  %v166 = vmul.f32 %v164, %v164
  %v167 = vmul.f32 %v165, %v165
  %v168 = vsel %vm148, %v166, 0.0
  %169 = vadd.xlane.f32.xlu0 %v168
  %v170 = vpop.xlane.xlu0 %169
  %v171 = vsel %vm148, %v167, 0.0
  %172 = vadd.xlane.f32.xlu0 %v171
  %v173 = vpop.xlane.xlu0 %172
  %v174 = vmul.f32 %v170, %v161
  %v175 = vmul.f32 %v173, %v161
  %v176 = vld [vmem:[%s3] sm:$0xff]
  %v177 = vld [vmem:[%s3 + $0x8] sm:$0xff]
  %v178 = vadd.f32 %v174, 1e-05
  %v179 = vadd.f32 %v175, 1e-05
  %v180 = vrsqrt.pop %v178
  %v181 = vmul.f32 %v180, %v178
  %v182 = vmul.f32 %v181, %v180
  %v183 = vmul.f32 0.5, %v182
  %v184 = vsub.f32 1.5, %v183
  %v185 = vmul.f32 %v180, %v184
  %vm186 = vweird.f32 %v178
  %vm187 = vweird.f32 %v180
  %vm188 = vmor %vm186, %vm187
  %v189 = vsel %vm188, %v180, %v185
  %v190 = vrsqrt.pop %v179
  %v191 = vmul.f32 %v190, %v179
  %v192 = vmul.f32 %v191, %v190
  %v193 = vmul.f32 0.5, %v192
  %v194 = vsub.f32 1.5, %v193
  %v195 = vmul.f32 %v190, %v194
  %vm196 = vweird.f32 %v179
  %vm197 = vweird.f32 %v190
  %vm198 = vmor %vm196, %vm197
  %v199 = vsel %vm198, %v190, %v195
  %v200 = vmul.f32 %v176, %v189
  %v201 = vmul.f32 %v177, %v199
  %v202 = vld [vmem:[%s4] sm:$0xff]
  %v203 = vld [vmem:[%s4 + $0x8] sm:$0xff]
  %v204 = vmul.f32 %v162, %v200
  %v205 = vmul.f32 %v163, %v201
  %v206 = vsub.f32 %v202, %v204
  %v207 = vsub.f32 %v203, %v205
  %209 = vset.pattern.permute.xlu0 0
  %210 = vperm.xlu0 %209, %v200
  %v211 = vpop.permute.xlu0 %210
  %214 = vset.pattern.permute.xlu0 0
  %215 = vperm.xlu0 %214, %v201
  %v216 = vpop.permute.xlu0 %215
  %v218 = vmul.f32 %v144, %v211
  %v219 = vmul.f32 %v146, %v216
  %221 = vset.pattern.permute.xlu0 0
  %222 = vperm.xlu0 %221, %v206
  %v223 = vpop.permute.xlu0 %222
  %226 = vset.pattern.permute.xlu0 0
  %227 = vperm.xlu0 %226, %v207
  %v228 = vpop.permute.xlu0 %227
  %v230 = vadd.f32 %v218, %v223
  %v231 = vadd.f32 %v219, %v228
  %v232 = vmax.f32 %v230, 0.0
  %v233 = vmax.f32 %v231, 0.0
  %234 = vst.msk [vmem:[%s5] sm:$0xff] %vm148, %v232
  %235 = vst.msk [vmem:[%s5 + $0x8] sm:$0xff] %vm148, %v233
  // Predicated region
  $region22: #{simple_conv_forward.22} parent=0 // pred_check
    _
  $region23: #{simple_conv_forward.22} parent=0 // pred_check_branch
    %237 = sbr.rel (0) target = $region25
  $region24: #{simple_conv_forward.22} parent=0 // pred_region
    _
  $region25: #{simple_conv_forward.22} parent=0 // pred_fallthru
    _
  // Predicated region
  $region26: #{simple_conv_forward.22} parent=0 // pred_check
    _
  $region27: #{simple_conv_forward.22} parent=0 // pred_check_branch
    %239 = sbr.rel (0) target = $region29
  $region28: #{simple_conv_forward.22} parent=0 // pred_region
    _
  $region29: #{simple_conv_forward.22} parent=0 // pred_fallthru
    _

// kernel: tile.14
$region0: #{tile.14}
  #allocation0 [shape = 's32[1]{0}', space=sflag, size = 0x4, scoped, tag = 'scoped memory for tile.14']
  %s0 = inlined_call_operand.vmem [shape: f32[16], index: 0, kind: input, shape index: {}]
  %s1 = inlined_call_operand.vmem [shape: f32[4,1,1,16], index: 1, kind: output, shape index: {}]
  // Predicated region
  $region2: #{tile.14} parent=0 // pred_check
    _
  $region3: #{tile.14} parent=0 // pred_check_branch
    %3 = sbr.rel (0) target = $region5
  $region4: #{tile.14} parent=0 // pred_region
    _
  $region5: #{tile.14} parent=0 // pred_fallthru
    _
  %v4 = vld [vmem:[%s0] ss:$0 sm:$0xff]
  %5 = vst [vmem:[%s1] sm:$0xf] %v4

// kernel: tile.0
$region0: #{tile.0}
  %s0 = inlined_call_operand.vmem [shape: f32[4,1,1,16], index: 0, kind: input, shape index: {}]
  %s1 = inlined_call_operand.vmem [shape: f32[64,1], index: 1, kind: output, shape index: {}]
  $region1: #{tile.0} parent=0
    #allocation0 [shape = 'u8[4096]{0}', space=vmem, size = 0x1000, scoped, tag = 'scoped mem for input reshape']
    %s3 = ssub.s32 16, 1
    %v4 = vld [vmem:[%s0] sm:%s3]
    %5 = vst [vmem:[#allocation0] sm:%s3] %v4
    %v6 = vld [vmem:[#allocation0] sm:$0xf]
    %vm7 = vcmask 7168
    %8 = vst.msk [vmem:[%s1] ss:$16 sm:$0x3] %vm7, %v6
    %9 = vst.msk [vmem:[%s1] ss:$16 sm:$0xc] %vm7, %v6
    %v10 = vld [vmem:[#allocation0] sm:$0xf]
    %11 = vrot.lane.b32.xlu0 %v10, 127
    %v12 = vpop.permute.xlu0 %11
    %vm13 = vcmask 7168
    %s14 = scalar_lea.vmem %s1, 1
    %15 = vst.msk [vmem:[%s14] ss:$16 sm:$0x3] %vm13, %v12
    %s16 = scalar_lea.vmem %s1, 1
    %17 = vst.msk [vmem:[%s16] ss:$16 sm:$0xc] %vm13, %v12
    %v18 = vld [vmem:[#allocation0] sm:$0xf]
    %19 = vrot.lane.b32.xlu0 %v18, 126
    %v20 = vpop.permute.xlu0 %19
    %vm21 = vcmask 7168
    %s22 = scalar_lea.vmem %s1, 2
    %23 = vst.msk [vmem:[%s22] ss:$16 sm:$0x3] %vm21, %v20
    %s24 = scalar_lea.vmem %s1, 2
    %25 = vst.msk [vmem:[%s24] ss:$16 sm:$0xc] %vm21, %v20
    %v26 = vld [vmem:[#allocation0] sm:$0xf]
    %27 = vrot.lane.b32.xlu0 %v26, 125
    %v28 = vpop.permute.xlu0 %27
    %vm29 = vcmask 7168
    %s30 = scalar_lea.vmem %s1, 3
    %31 = vst.msk [vmem:[%s30] ss:$16 sm:$0x3] %vm29, %v28
    %s32 = scalar_lea.vmem %s1, 3
    %33 = vst.msk [vmem:[%s32] ss:$16 sm:$0xc] %vm29, %v28
    %v34 = vld [vmem:[#allocation0] sm:$0xf]
    %35 = vrot.lane.b32.xlu0 %v34, 124
    %v36 = vpop.permute.xlu0 %35
    %vm37 = vcmask 7168
    %s38 = scalar_lea.vmem %s1, 4
    %39 = vst.msk [vmem:[%s38] ss:$16 sm:$0x3] %vm37, %v36
    %s40 = scalar_lea.vmem %s1, 4
    %41 = vst.msk [vmem:[%s40] ss:$16 sm:$0xc] %vm37, %v36
    %v42 = vld [vmem:[#allocation0] sm:$0xf]
    %43 = vrot.lane.b32.xlu0 %v42, 123
    %v44 = vpop.permute.xlu0 %43
    %vm45 = vcmask 7168
    %s46 = scalar_lea.vmem %s1, 5
    %47 = vst.msk [vmem:[%s46] ss:$16 sm:$0x3] %vm45, %v44
    %s48 = scalar_lea.vmem %s1, 5
    %49 = vst.msk [vmem:[%s48] ss:$16 sm:$0xc] %vm45, %v44
    %v50 = vld [vmem:[#allocation0] sm:$0xf]
    %51 = vrot.lane.b32.xlu0 %v50, 122
    %v52 = vpop.permute.xlu0 %51
    %vm53 = vcmask 7168
    %s54 = scalar_lea.vmem %s1, 6
    %55 = vst.msk [vmem:[%s54] ss:$16 sm:$0x3] %vm53, %v52
    %s56 = scalar_lea.vmem %s1, 6
    %57 = vst.msk [vmem:[%s56] ss:$16 sm:$0xc] %vm53, %v52
    %v58 = vld [vmem:[#allocation0] sm:$0xf]
    %59 = vrot.lane.b32.xlu0 %v58, 121
    %v60 = vpop.permute.xlu0 %59
    %vm61 = vcmask 7168
    %s62 = scalar_lea.vmem %s1, 7
    %63 = vst.msk [vmem:[%s62] ss:$16 sm:$0x3] %vm61, %v60
    %s64 = scalar_lea.vmem %s1, 7
    %65 = vst.msk [vmem:[%s64] ss:$16 sm:$0xc] %vm61, %v60
    %v66 = vld [vmem:[#allocation0] sm:$0xf]
    %67 = vrot.lane.b32.xlu0 %v66, 120
    %v68 = vpop.permute.xlu0 %67
    %vm69 = vcmask 7168
    %s70 = scalar_lea.vmem %s1, 8
    %71 = vst.msk [vmem:[%s70] ss:$16 sm:$0x3] %vm69, %v68
    %s72 = scalar_lea.vmem %s1, 8
    %73 = vst.msk [vmem:[%s72] ss:$16 sm:$0xc] %vm69, %v68
    %v74 = vld [vmem:[#allocation0] sm:$0xf]
    %75 = vrot.lane.b32.xlu0 %v74, 119
    %v76 = vpop.permute.xlu0 %75
    %vm77 = vcmask 7168
    %s78 = scalar_lea.vmem %s1, 9
    %79 = vst.msk [vmem:[%s78] ss:$16 sm:$0x3] %vm77, %v76
    %s80 = scalar_lea.vmem %s1, 9
    %81 = vst.msk [vmem:[%s80] ss:$16 sm:$0xc] %vm77, %v76
    %v82 = vld [vmem:[#allocation0] sm:$0xf]
    %83 = vrot.lane.b32.xlu0 %v82, 118
    %v84 = vpop.permute.xlu0 %83
    %vm85 = vcmask 7168
    %s86 = scalar_lea.vmem %s1, 10
    %87 = vst.msk [vmem:[%s86] ss:$16 sm:$0x3] %vm85, %v84
    %s88 = scalar_lea.vmem %s1, 10
    %89 = vst.msk [vmem:[%s88] ss:$16 sm:$0xc] %vm85, %v84
    %v90 = vld [vmem:[#allocation0] sm:$0xf]
    %91 = vrot.lane.b32.xlu0 %v90, 117
    %v92 = vpop.permute.xlu0 %91
    %vm93 = vcmask 7168
    %s94 = scalar_lea.vmem %s1, 11
    %95 = vst.msk [vmem:[%s94] ss:$16 sm:$0x3] %vm93, %v92
    %s96 = scalar_lea.vmem %s1, 11
    %97 = vst.msk [vmem:[%s96] ss:$16 sm:$0xc] %vm93, %v92
    %v98 = vld [vmem:[#allocation0] sm:$0xf]
    %99 = vrot.lane.b32.xlu0 %v98, 116
    %v100 = vpop.permute.xlu0 %99
    %vm101 = vcmask 7168
    %s102 = scalar_lea.vmem %s1, 12
    %103 = vst.msk [vmem:[%s102] ss:$16 sm:$0x3] %vm101, %v100
    %s104 = scalar_lea.vmem %s1, 12
    %105 = vst.msk [vmem:[%s104] ss:$16 sm:$0xc] %vm101, %v100
    %v106 = vld [vmem:[#allocation0] sm:$0xf]
    %107 = vrot.lane.b32.xlu0 %v106, 115
    %v108 = vpop.permute.xlu0 %107
    %vm109 = vcmask 7168
    %s110 = scalar_lea.vmem %s1, 13
    %111 = vst.msk [vmem:[%s110] ss:$16 sm:$0x3] %vm109, %v108
    %s112 = scalar_lea.vmem %s1, 13
    %113 = vst.msk [vmem:[%s112] ss:$16 sm:$0xc] %vm109, %v108
    %v114 = vld [vmem:[#allocation0] sm:$0xf]
    %115 = vrot.lane.b32.xlu0 %v114, 114
    %v116 = vpop.permute.xlu0 %115
    %vm117 = vcmask 7168
    %s118 = scalar_lea.vmem %s1, 14
    %119 = vst.msk [vmem:[%s118] ss:$16 sm:$0x3] %vm117, %v116
    %s120 = scalar_lea.vmem %s1, 14
    %121 = vst.msk [vmem:[%s120] ss:$16 sm:$0xc] %vm117, %v116
    %v122 = vld [vmem:[#allocation0] sm:$0xf]
    %123 = vrot.lane.b32.xlu0 %v122, 113
    %v124 = vpop.permute.xlu0 %123
    %vm125 = vcmask 7168
    %s126 = scalar_lea.vmem %s1, 15
    %127 = vst.msk [vmem:[%s126] ss:$16 sm:$0x3] %vm125, %v124
    %s128 = scalar_lea.vmem %s1, 15
    %129 = vst.msk [vmem:[%s128] ss:$16 sm:$0xc] %vm125, %v124

// kernel: simple_conv_forward.23
$region0: #{simple_conv_forward.23}
  #allocation0 [shape = 'u32[]', space=smem, size = 0x4, offset = 0x4, fixed_abs, tag = 'smem constant byte address 0x4 - core index']
  #allocation1 [shape = 'u32[72,128]{1,0:T(1,128)}', space=vmem, size = 0x9000, scoped, tag = 'internal scratch']
  %s0 = inlined_call_operand.vmem [shape: bf16[64,8], index: 0, kind: input, shape index: {}]
  %s1 = inlined_call_operand.vmem [shape: bf16[64,64], index: 1, kind: input, shape index: {}]
  %s2 = inlined_call_operand.vmem [shape: f32[64,1], index: 2, kind: input, shape index: {}]
  %s3 = inlined_call_operand.vmem [shape: f32[64,8], index: 3, kind: output, shape index: {}]
  %s4 = sld [smem:[#allocation0]]
  $region22: #{simple_conv_forward.23} parent=0
    _
  %s6 = ssub.s32 1, %s4
  %s7 = scalar_select 0, %s6, %s4
  // Predicated region
  $region2: #{simple_conv_forward.23} parent=0 // pred_check
    _
  $region3: #{simple_conv_forward.23} parent=0 // pred_check_branch
    %9 = sbr.rel (0) target = $region5
  $region4: #{simple_conv_forward.23} parent=0 // pred_region
    _
  $region5: #{simple_conv_forward.23} parent=0 // pred_fallthru
    _
  // Predicated region
  $region6: #{simple_conv_forward.23} parent=0 // pred_check
    _
  $region7: #{simple_conv_forward.23} parent=0 // pred_check_branch
    %11 = sbr.rel (0) target = $region9
  $region8: #{simple_conv_forward.23} parent=0 // pred_region
    _
  $region9: #{simple_conv_forward.23} parent=0 // pred_fallthru
    _
  // Predicated region
  $region10: #{simple_conv_forward.23} parent=0 // pred_check
    _
  $region11: #{simple_conv_forward.23} parent=0 // pred_check_branch
    %13 = sbr.rel (0) target = $region13
  $region12: #{simple_conv_forward.23} parent=0 // pred_region
    _
  $region13: #{simple_conv_forward.23} parent=0 // pred_fallthru
    _
  %v15 = vld [vmem:[%s1] sm:$0xf]
  %v16 = vld [vmem:[%s1 + $0x4] sm:$0xf]
  %v17 = vld [vmem:[%s1 + $0x8] sm:$0xf]
  %v18 = vld [vmem:[%s1 + $0xc] sm:$0xf]
  %v19 = vld [vmem:[%s1 + $0x10] sm:$0xf]
  %v20 = vld [vmem:[%s1 + $0x14] sm:$0xf]
  %v21 = vld [vmem:[%s1 + $0x18] sm:$0xf]
  %v22 = vld [vmem:[%s1 + $0x1c] sm:$0xf]
  %v23 = vld [vmem:[%s0] sm:$0xf]
  %v24 = vld [vmem:[%s0 + $0x4] sm:$0xf]
  %v25 = vld [vmem:[%s0 + $0x8] sm:$0xf]
  %v26 = vld [vmem:[%s0 + $0xc] sm:$0xf]
  %v27 = vld [vmem:[%s0 + $0x10] sm:$0xf]
  %v28 = vld [vmem:[%s0 + $0x14] sm:$0xf]
  %v29 = vld [vmem:[%s0 + $0x18] sm:$0xf]
  %v30 = vld [vmem:[%s0 + $0x1c] sm:$0xf]
  %v31 = vld [vmem:[%s2] sm:$0xff]
  %v32 = vld [vmem:[%s2 + $0x8] sm:$0xff]
  %v33 = vld [vmem:[%s2 + $0x10] sm:$0xff]
  %v34 = vld [vmem:[%s2 + $0x18] sm:$0xff]
  %v35 = vld [vmem:[%s2 + $0x20] sm:$0xff]
  %v36 = vld [vmem:[%s2 + $0x28] sm:$0xff]
  %v37 = vld [vmem:[%s2 + $0x30] sm:$0xff]
  %v38 = vld [vmem:[%s2 + $0x38] sm:$0xff]
  %40 = vset.pattern.permute.xlu0 0
  %41 = vperm.xlu0 %40, %v31
  %v42 = vpop.permute.xlu0 %41
  %45 = vset.pattern.permute.xlu0 0
  %46 = vperm.xlu0 %45, %v32
  %v47 = vpop.permute.xlu0 %46
  %50 = vset.pattern.permute.xlu0 0
  %51 = vperm.xlu0 %50, %v33
  %v52 = vpop.permute.xlu0 %51
  %55 = vset.pattern.permute.xlu0 0
  %56 = vperm.xlu0 %55, %v34
  %v57 = vpop.permute.xlu0 %56
  %60 = vset.pattern.permute.xlu0 0
  %61 = vperm.xlu0 %60, %v35
  %v62 = vpop.permute.xlu0 %61
  %65 = vset.pattern.permute.xlu0 0
  %66 = vperm.xlu0 %65, %v36
  %v67 = vpop.permute.xlu0 %66
  %70 = vset.pattern.permute.xlu0 0
  %71 = vperm.xlu0 %70, %v37
  %v72 = vpop.permute.xlu0 %71
  %75 = vset.pattern.permute.xlu0 0
  %76 = vperm.xlu0 %75, %v38
  %v77 = vpop.permute.xlu0 %76
  %v87 = vunpack.c.l.b16 %v15
  %v88 = vunpack.c.l.b16 %v16
  %v89 = vunpack.c.l.b16 %v17
  %v90 = vunpack.c.l.b16 %v18
  %v91 = vunpack.c.l.b16 %v19
  %v92 = vunpack.c.l.b16 %v20
  %v93 = vunpack.c.l.b16 %v21
  %v94 = vunpack.c.l.b16 %v22
  %v95 = vpack.c.b16 %v88, %v87
  %v96 = vpack.c.b16 %v90, %v89
  %v97 = vpack.c.b16 %v92, %v91
  %v98 = vpack.c.b16 %v94, %v93
  %v107 = vunpack.c.l.b16 %v23
  %v108 = vunpack.c.l.b16 %v24
  %v109 = vunpack.c.l.b16 %v25
  %v110 = vunpack.c.l.b16 %v26
  %v111 = vunpack.c.l.b16 %v27
  %v112 = vunpack.c.l.b16 %v28
  %v113 = vunpack.c.l.b16 %v29
  %v114 = vunpack.c.l.b16 %v30
  %v115 = vpack.c.b16 %v108, %v107
  %v116 = vpack.c.b16 %v110, %v109
  %v117 = vpack.c.b16 %v112, %v111
  %v118 = vpack.c.b16 %v114, %v113
  %vm123 = vcmask 523264
  %v125 = vsel %vm123, %v95, 0
  %v128 = vsel %vm123, %v96, 0
  %v131 = vsel %vm123, %v97, 0
  %v134 = vsel %vm123, %v98, 0
  %136 = vmatpush.bf16.msra.mxu0 0
  %137 = vmatpush.bf16.msra.mxu0 0
  %138 = vmatpush.bf16.msra.mxu0 0
  %139 = vmatpush.bf16.msra.mxu0 0
  %140 = vmatpush.bf16.msra.mxu0 %v118
  %141 = vmatpush.bf16.msra.mxu0 %v117
  %142 = vmatpush.bf16.msra.mxu0 %v116
  %143 = vmatpush.bf16.msra.mxu0 %v115
  %144 = vmatmul.bf16.gmra.mxu0 %v125
  %v145 = vpop.f32.mrf.mxu0
  %v146 = vadd.f32 %v42, %v145
  %v147 = vpop.f32.mrf.mxu0
  %v148 = vadd.f32 %v47, %v147
  %149 = vmatmul.bf16.gmra.mxu0 %v128
  %v150 = vpop.f32.mrf.mxu0
  %v151 = vadd.f32 %v52, %v150
  %v152 = vpop.f32.mrf.mxu0
  %v153 = vadd.f32 %v57, %v152
  %154 = vmatmul.bf16.gmra.mxu0 %v131
  %v155 = vpop.f32.mrf.mxu0
  %v156 = vadd.f32 %v62, %v155
  %v157 = vpop.f32.mrf.mxu0
  %v158 = vadd.f32 %v67, %v157
  %159 = vmatmul.bf16.gmra.mxu0 %v134
  %v160 = vpop.f32.mrf.mxu0
  %v161 = vadd.f32 %v72, %v160
  %v162 = vpop.f32.mrf.mxu0
  %v163 = vadd.f32 %v77, %v162
  %164 = vdwg.mxu0
  %vm165 = vcmask 64512
  %166 = vst.msk [vmem:[%s3] sm:$0xff] %vm165, %v146
  %167 = vst.msk [vmem:[%s3 + $0x8] sm:$0xff] %vm165, %v148
  %168 = vst.msk [vmem:[%s3 + $0x10] sm:$0xff] %vm165, %v151
  %169 = vst.msk [vmem:[%s3 + $0x18] sm:$0xff] %vm165, %v153
  %170 = vst.msk [vmem:[%s3 + $0x20] sm:$0xff] %vm165, %v156
  %171 = vst.msk [vmem:[%s3 + $0x28] sm:$0xff] %vm165, %v158
  %172 = vst.msk [vmem:[%s3 + $0x30] sm:$0xff] %vm165, %v161
  %173 = vst.msk [vmem:[%s3 + $0x38] sm:$0xff] %vm165, %v163
  // Predicated region
  $region14: #{simple_conv_forward.23} parent=0 // pred_check
    _
  $region15: #{simple_conv_forward.23} parent=0 // pred_check_branch
    %175 = sbr.rel (0) target = $region17
  $region16: #{simple_conv_forward.23} parent=0 // pred_region
    _
  $region17: #{simple_conv_forward.23} parent=0 // pred_fallthru
    _
  // Predicated region
  $region18: #{simple_conv_forward.23} parent=0 // pred_check
    _
  $region19: #{simple_conv_forward.23} parent=0 // pred_check_branch
    %177 = sbr.rel (0) target = $region21
  $region20: #{simple_conv_forward.23} parent=0 // pred_region
    _
  $region21: #{simple_conv_forward.23} parent=0 // pred_fallthru
    _

// kernel: simple_conv_forward.24
$region0: #{simple_conv_forward.24}
  #allocation0 [shape = 'u32[]', space=smem, size = 0x4, offset = 0x4, fixed_abs, tag = 'smem constant byte address 0x4 - core index']
  #allocation1 [shape = 'u32[72,128]{1,0:T(1,128)}', space=vmem, size = 0x9000, scoped, tag = 'internal scratch']
  %s0 = inlined_call_operand.vmem [shape: bf16[288,32], index: 0, kind: input, shape index: {}]
  %s1 = inlined_call_operand.vmem [shape: bf16[8,288], index: 1, kind: input, shape index: {}]
  %s2 = inlined_call_operand.vmem [shape: f32[8,1], index: 2, kind: input, shape index: {}]
  %s3 = inlined_call_operand.vmem [shape: f32[8,1], index: 3, kind: input, shape index: {}]
  %s4 = inlined_call_operand.vmem [shape: f32[8,1], index: 4, kind: input, shape index: {}]
  %s5 = inlined_call_operand.vmem [shape: f32[8,32], index: 5, kind: output, shape index: {}]
  %s6 = sld [smem:[#allocation0]]
  $region30: #{simple_conv_forward.24} parent=0
    _
  %s8 = ssub.s32 1, %s6
  %s9 = scalar_select 0, %s8, %s6
  // Predicated region
  $region2: #{simple_conv_forward.24} parent=0 // pred_check
    _
  $region3: #{simple_conv_forward.24} parent=0 // pred_check_branch
    %11 = sbr.rel (0) target = $region5
  $region4: #{simple_conv_forward.24} parent=0 // pred_region
    _
  $region5: #{simple_conv_forward.24} parent=0 // pred_fallthru
    _
  // Predicated region
  $region6: #{simple_conv_forward.24} parent=0 // pred_check
    _
  $region7: #{simple_conv_forward.24} parent=0 // pred_check_branch
    %13 = sbr.rel (0) target = $region9
  $region8: #{simple_conv_forward.24} parent=0 // pred_region
    _
  $region9: #{simple_conv_forward.24} parent=0 // pred_fallthru
    _
  // Predicated region
  $region10: #{simple_conv_forward.24} parent=0 // pred_check
    _
  $region11: #{simple_conv_forward.24} parent=0 // pred_check_branch
    %15 = sbr.rel (0) target = $region13
  $region12: #{simple_conv_forward.24} parent=0 // pred_region
    _
  $region13: #{simple_conv_forward.24} parent=0 // pred_fallthru
    _
  // Predicated region
  $region14: #{simple_conv_forward.24} parent=0 // pred_check
    _
  $region15: #{simple_conv_forward.24} parent=0 // pred_check_branch
    %17 = sbr.rel (0) target = $region17
  $region16: #{simple_conv_forward.24} parent=0 // pred_region
    _
  $region17: #{simple_conv_forward.24} parent=0 // pred_fallthru
    _
  // Predicated region
  $region18: #{simple_conv_forward.24} parent=0 // pred_check
    _
  $region19: #{simple_conv_forward.24} parent=0 // pred_check_branch
    %19 = sbr.rel (0) target = $region21
  $region20: #{simple_conv_forward.24} parent=0 // pred_region
    _
  $region21: #{simple_conv_forward.24} parent=0 // pred_fallthru
    _
  %v21 = vld [vmem:[%s1] sm:$0xff]
  %v22 = vld [vmem:[%s1 + $0x8] sm:$0xf]
  %v23 = vld [vmem:[%s0] sm:$0xf]
  %v24 = vld [vmem:[%s0 + $0x4] sm:$0xf]
  %v25 = vld [vmem:[%s0 + $0x8] sm:$0xf]
  %v26 = vld [vmem:[%s0 + $0xc] sm:$0xf]
  %v27 = vld [vmem:[%s0 + $0x10] sm:$0xf]
  %v28 = vld [vmem:[%s0 + $0x14] sm:$0xf]
  %v29 = vld [vmem:[%s0 + $0x18] sm:$0xf]
  %v30 = vld [vmem:[%s0 + $0x1c] sm:$0xf]
  %v31 = vld [vmem:[%s0 + $0x20] sm:$0xf]
  %v32 = vld [vmem:[%s0 + $0x24] sm:$0xf]
  %v33 = vld [vmem:[%s0 + $0x28] sm:$0xf]
  %v34 = vld [vmem:[%s0 + $0x2c] sm:$0xf]
  %v35 = vld [vmem:[%s0 + $0x30] sm:$0xf]
  %v36 = vld [vmem:[%s0 + $0x34] sm:$0xf]
  %v37 = vld [vmem:[%s0 + $0x38] sm:$0xf]
  %v38 = vld [vmem:[%s0 + $0x3c] sm:$0xf]
  %v39 = vld [vmem:[%s0 + $0x40] sm:$0xf]
  %v40 = vld [vmem:[%s0 + $0x44] sm:$0xf]
  %v41 = vld [vmem:[%s0 + $0x48] sm:$0xf]
  %v42 = vld [vmem:[%s0 + $0x4c] sm:$0xf]
  %v43 = vld [vmem:[%s0 + $0x50] sm:$0xf]
  %v44 = vld [vmem:[%s0 + $0x54] sm:$0xf]
  %v45 = vld [vmem:[%s0 + $0x58] sm:$0xf]
  %v46 = vld [vmem:[%s0 + $0x5c] sm:$0xf]
  %v47 = vld [vmem:[%s0 + $0x60] sm:$0xf]
  %v48 = vld [vmem:[%s0 + $0x64] sm:$0xf]
  %v49 = vld [vmem:[%s0 + $0x68] sm:$0xf]
  %v50 = vld [vmem:[%s0 + $0x6c] sm:$0xf]
  %v51 = vld [vmem:[%s0 + $0x70] sm:$0xf]
  %v52 = vld [vmem:[%s0 + $0x74] sm:$0xf]
  %v53 = vld [vmem:[%s0 + $0x78] sm:$0xf]
  %v54 = vld [vmem:[%s0 + $0x7c] sm:$0xf]
  %v55 = vld [vmem:[%s0 + $0x80] sm:$0xf]
  %v56 = vld [vmem:[%s0 + $0x84] sm:$0xf]
  %v57 = vld [vmem:[%s0 + $0x88] sm:$0xf]
  %v58 = vld [vmem:[%s0 + $0x8c] sm:$0xf]
  %v59 = vld [vmem:[%s2] sm:$0xff]
  %61 = vset.pattern.permute.xlu0 0
  %62 = vperm.xlu0 %61, %v59
  %v63 = vpop.permute.xlu0 %62
  %v67 = vunpack.c.l.b16 %v21
  %v68 = vunpack.c.h.b16 %v21
  %v69 = vunpack.c.l.b16 %v22
  %v70 = vpack.c.b16 %v67, %v67
  %v71 = vpack.c.b16 %v68, %v68
  %v72 = vpack.c.b16 %v69, %v69
  %v111 = vunpack.c.l.b16 %v23
  %v112 = vunpack.c.l.b16 %v24
  %v113 = vunpack.c.l.b16 %v25
  %v114 = vunpack.c.l.b16 %v26
  %v115 = vunpack.c.l.b16 %v27
  %v116 = vunpack.c.l.b16 %v28
  %v117 = vunpack.c.l.b16 %v29
  %v118 = vunpack.c.l.b16 %v30
  %v119 = vunpack.c.l.b16 %v31
  %v120 = vunpack.c.l.b16 %v32
  %v121 = vunpack.c.l.b16 %v33
  %v122 = vunpack.c.l.b16 %v34
  %v123 = vunpack.c.l.b16 %v35
  %v124 = vunpack.c.l.b16 %v36
  %v125 = vunpack.c.l.b16 %v37
  %v126 = vunpack.c.l.b16 %v38
  %v127 = vunpack.c.l.b16 %v39
  %v128 = vunpack.c.l.b16 %v40
  %v129 = vunpack.c.l.b16 %v41
  %v130 = vunpack.c.l.b16 %v42
  %v131 = vunpack.c.l.b16 %v43
  %v132 = vunpack.c.l.b16 %v44
  %v133 = vunpack.c.l.b16 %v45
  %v134 = vunpack.c.l.b16 %v46
  %v135 = vunpack.c.l.b16 %v47
  %v136 = vunpack.c.l.b16 %v48
  %v137 = vunpack.c.l.b16 %v49
  %v138 = vunpack.c.l.b16 %v50
  %v139 = vunpack.c.l.b16 %v51
  %v140 = vunpack.c.l.b16 %v52
  %v141 = vunpack.c.l.b16 %v53
  %v142 = vunpack.c.l.b16 %v54
  %v143 = vunpack.c.l.b16 %v55
  %v144 = vunpack.c.l.b16 %v56
  %v145 = vunpack.c.l.b16 %v57
  %v146 = vunpack.c.l.b16 %v58
  %v147 = vpack.c.b16 %v112, %v111
  %v148 = vpack.c.b16 %v114, %v113
  %v149 = vpack.c.b16 %v116, %v115
  %v150 = vpack.c.b16 %v118, %v117
  %v151 = vpack.c.b16 %v120, %v119
  %v152 = vpack.c.b16 %v122, %v121
  %v153 = vpack.c.b16 %v124, %v123
  %v154 = vpack.c.b16 %v126, %v125
  %v155 = vpack.c.b16 %v128, %v127
  %v156 = vpack.c.b16 %v130, %v129
  %v157 = vpack.c.b16 %v132, %v131
  %v158 = vpack.c.b16 %v134, %v133
  %v159 = vpack.c.b16 %v136, %v135
  %v160 = vpack.c.b16 %v138, %v137
  %v161 = vpack.c.b16 %v140, %v139
  %v162 = vpack.c.b16 %v142, %v141
  %v163 = vpack.c.b16 %v144, %v143
  %v164 = vpack.c.b16 %v146, %v145
  %vm183 = vcmask 261120
  %v185 = vsel %vm183, %v72, 0
  %187 = vmatpush.bf16.msra.mxu0 %v154
  %188 = vmatpush.bf16.msra.mxu0 %v153
  %189 = vmatpush.bf16.msra.mxu0 %v152
  %190 = vmatpush.bf16.msra.mxu0 %v151
  %191 = vmatpush.bf16.msra.mxu0 %v150
  %192 = vmatpush.bf16.msra.mxu0 %v149
  %193 = vmatpush.bf16.msra.mxu0 %v148
  %194 = vmatpush.bf16.msra.mxu0 %v147
  %195 = vmatmul.bf16.gmra.mxu0 %v70
  %v196 = vpop.f32.mrf.mxu0
  %v197 = vadd.f32 %v63, %v196
  %v198 = vpop.f32.mrf.mxu0
  %199 = vdwg.mxu0
  %200 = vmatpush.bf16.msra.mxu0 %v162
  %201 = vmatpush.bf16.msra.mxu0 %v161
  %202 = vmatpush.bf16.msra.mxu0 %v160
  %203 = vmatpush.bf16.msra.mxu0 %v159
  %204 = vmatpush.bf16.msra.mxu0 %v158
  %205 = vmatpush.bf16.msra.mxu0 %v157
  %206 = vmatpush.bf16.msra.mxu0 %v156
  %207 = vmatpush.bf16.msra.mxu0 %v155
  %208 = vmatmul.bf16.gmra.mxu0 %v71
  %v209 = vpop.f32.mrf.mxu0
  %v210 = vadd.f32 %v197, %v209
  %v211 = vpop.f32.mrf.mxu0
  %212 = vdwg.mxu0
  %213 = vmatpush.bf16.msra.mxu0 0
  %214 = vmatpush.bf16.msra.mxu0 0
  %215 = vmatpush.bf16.msra.mxu0 0
  %216 = vmatpush.bf16.msra.mxu0 0
  %217 = vmatpush.bf16.msra.mxu0 0
  %218 = vmatpush.bf16.msra.mxu0 0
  %219 = vmatpush.bf16.msra.mxu0 %v164
  %220 = vmatpush.bf16.msra.mxu0 %v163
  %221 = vmatmul.bf16.gmra.mxu0 %v185
  %v222 = vpop.f32.mrf.mxu0
  %v223 = vadd.f32 %v210, %v222
  %v224 = vpop.f32.mrf.mxu0
  %225 = vdwg.mxu0
  %v226 = vsel %vm183, %v223, 0.0
  %227 = vadd.xlane.f32.xlu0 %v226
  %v228 = vpop.xlane.xlu0 %227
  %v229 = vrcp.pop 32.0
  %v230 = vmul.f32 32.0, %v229
  %v231 = vsub.f32 1.0, %v230
  %v232 = vmul.f32 %v229, %v231
  %v233 = vadd.f32 %v229, %v232
  %vm234 = vweird.f32 %v229
  %v235 = vsel %vm234, %v229, %v233
  %v236 = vmul.f32 %v228, %v235
  %v237 = vsub.f32 %v223, %v236
  %v238 = vmul.f32 %v237, %v237
  %v239 = vsel %vm183, %v238, 0.0
  %240 = vadd.xlane.f32.xlu0 %v239
  %v241 = vpop.xlane.xlu0 %240
  %v242 = vmul.f32 %v241, %v235
  %v243 = vld [vmem:[%s3] sm:$0xff]
  %v244 = vadd.f32 %v242, 1e-05
  %v245 = vrsqrt.pop %v244
  %v246 = vmul.f32 %v245, %v244
  %v247 = vmul.f32 %v246, %v245
  %v248 = vmul.f32 0.5, %v247
  %v249 = vsub.f32 1.5, %v248
  %v250 = vmul.f32 %v245, %v249
  %vm251 = vweird.f32 %v244
  %vm252 = vweird.f32 %v245
  %vm253 = vmor %vm251, %vm252
  %v254 = vsel %vm253, %v245, %v250
  %v255 = vmul.f32 %v243, %v254
  %v256 = vld [vmem:[%s4] sm:$0xff]
  %v257 = vmul.f32 %v236, %v255
  %v258 = vsub.f32 %v256, %v257
  %260 = vset.pattern.permute.xlu0 0
  %261 = vperm.xlu0 %260, %v255
  %v262 = vpop.permute.xlu0 %261
  %v264 = vmul.f32 %v223, %v262
  %266 = vset.pattern.permute.xlu0 0
  %267 = vperm.xlu0 %266, %v258
  %v268 = vpop.permute.xlu0 %267
  %v270 = vadd.f32 %v264, %v268
  %v271 = vmax.f32 %v270, 0.0
  %272 = vst.msk [vmem:[%s5] sm:$0xff] %vm183, %v271
  // Predicated region
  $region22: #{simple_conv_forward.24} parent=0 // pred_check
    _
  $region23: #{simple_conv_forward.24} parent=0 // pred_check_branch
    %274 = sbr.rel (0) target = $region25
  $region24: #{simple_conv_forward.24} parent=0 // pred_region
    _
  $region25: #{simple_conv_forward.24} parent=0 // pred_fallthru
    _
  // Predicated region
  $region26: #{simple_conv_forward.24} parent=0 // pred_check
    _
  $region27: #{simple_conv_forward.24} parent=0 // pred_check_branch
    %276 = sbr.rel (0) target = $region29
  $region28: #{simple_conv_forward.24} parent=0 // pred_region
    _
  $region29: #{simple_conv_forward.24} parent=0 // pred_fallthru
    _

// kernel: simple_conv_forward.25
$region0: #{simple_conv_forward.25}
  #allocation0 [shape = 'u32[]', space=smem, size = 0x4, offset = 0x4, fixed_abs, tag = 'smem constant byte address 0x4 - core index']
  #allocation1 [shape = 'u32[72,128]{1,0:T(1,128)}', space=vmem, size = 0x9000, scoped, tag = 'internal scratch']
  %s0 = inlined_call_operand.vmem [shape: bf16[72,32], index: 0, kind: input, shape index: {}]
  %s1 = inlined_call_operand.vmem [shape: bf16[8,72], index: 1, kind: input, shape index: {}]
  %s2 = inlined_call_operand.vmem [shape: f32[8,1], index: 2, kind: input, shape index: {}]
  %s3 = inlined_call_operand.vmem [shape: f32[8,1], index: 3, kind: input, shape index: {}]
  %s4 = inlined_call_operand.vmem [shape: f32[8,1], index: 4, kind: input, shape index: {}]
  %s5 = inlined_call_operand.vmem [shape: f32[8,32], index: 5, kind: output, shape index: {}]
  %s6 = sld [smem:[#allocation0]]
  $region30: #{simple_conv_forward.25} parent=0
    _
  %s8 = ssub.s32 1, %s6
  %s9 = scalar_select 0, %s8, %s6
  // Predicated region
  $region2: #{simple_conv_forward.25} parent=0 // pred_check
    _
  $region3: #{simple_conv_forward.25} parent=0 // pred_check_branch
    %11 = sbr.rel (0) target = $region5
  $region4: #{simple_conv_forward.25} parent=0 // pred_region
    _
  $region5: #{simple_conv_forward.25} parent=0 // pred_fallthru
    _
  // Predicated region
  $region6: #{simple_conv_forward.25} parent=0 // pred_check
    _
  $region7: #{simple_conv_forward.25} parent=0 // pred_check_branch
    %13 = sbr.rel (0) target = $region9
  $region8: #{simple_conv_forward.25} parent=0 // pred_region
    _
  $region9: #{simple_conv_forward.25} parent=0 // pred_fallthru
    _
  // Predicated region
  $region10: #{simple_conv_forward.25} parent=0 // pred_check
    _
  $region11: #{simple_conv_forward.25} parent=0 // pred_check_branch
    %15 = sbr.rel (0) target = $region13
  $region12: #{simple_conv_forward.25} parent=0 // pred_region
    _
  $region13: #{simple_conv_forward.25} parent=0 // pred_fallthru
    _
  // Predicated region
  $region14: #{simple_conv_forward.25} parent=0 // pred_check
    _
  $region15: #{simple_conv_forward.25} parent=0 // pred_check_branch
    %17 = sbr.rel (0) target = $region17
  $region16: #{simple_conv_forward.25} parent=0 // pred_region
    _
  $region17: #{simple_conv_forward.25} parent=0 // pred_fallthru
    _
  // Predicated region
  $region18: #{simple_conv_forward.25} parent=0 // pred_check
    _
  $region19: #{simple_conv_forward.25} parent=0 // pred_check_branch
    %19 = sbr.rel (0) target = $region21
  $region20: #{simple_conv_forward.25} parent=0 // pred_region
    _
  $region21: #{simple_conv_forward.25} parent=0 // pred_fallthru
    _
  %v21 = vld [vmem:[%s1] sm:$0xf]
  %v22 = vld [vmem:[%s0] sm:$0xf]
  %v23 = vld [vmem:[%s0 + $0x4] sm:$0xf]
  %v24 = vld [vmem:[%s0 + $0x8] sm:$0xf]
  %v25 = vld [vmem:[%s0 + $0xc] sm:$0xf]
  %v26 = vld [vmem:[%s0 + $0x10] sm:$0xf]
  %v27 = vld [vmem:[%s0 + $0x14] sm:$0xf]
  %v28 = vld [vmem:[%s0 + $0x18] sm:$0xf]
  %v29 = vld [vmem:[%s0 + $0x1c] sm:$0xf]
  %v30 = vld [vmem:[%s0 + $0x20] sm:$0xf]
  %v31 = vld [vmem:[%s2] sm:$0xff]
  %33 = vset.pattern.permute.xlu0 0
  %34 = vperm.xlu0 %33, %v31
  %v35 = vpop.permute.xlu0 %34
  %v46 = vunpack.c.l.b16 %v22
  %v47 = vunpack.c.l.b16 %v23
  %v48 = vunpack.c.l.b16 %v24
  %v49 = vunpack.c.l.b16 %v25
  %v50 = vunpack.c.l.b16 %v26
  %v51 = vunpack.c.l.b16 %v27
  %v52 = vunpack.c.l.b16 %v28
  %v53 = vunpack.c.l.b16 %v29
  %v54 = vunpack.c.l.b16 %v30
  %v55 = vpack.c.b16 %v47, %v46
  %v56 = vpack.c.b16 %v49, %v48
  %v57 = vpack.c.b16 %v51, %v50
  %v58 = vpack.c.b16 %v53, %v52
  %v59 = vpack.c.b16 %v54, %v54
  %vm64 = vcmask 588800
  %v66 = vsel %vm64, %v21, 0
  %vm68 = vcmask 1043456
  %v70 = vsel %vm68, %v59, 0
  %72 = vmatpush.bf16.msra.mxu0 0
  %73 = vmatpush.bf16.msra.mxu0 0
  %74 = vmatpush.bf16.msra.mxu0 0
  %75 = vmatpush.bf16.msra.mxu0 %v70
  %76 = vmatpush.bf16.msra.mxu0 %v58
  %77 = vmatpush.bf16.msra.mxu0 %v57
  %78 = vmatpush.bf16.msra.mxu0 %v56
  %79 = vmatpush.bf16.msra.mxu0 %v55
  %80 = vmatmul.bf16.gmra.mxu0 %v66
  %v81 = vpop.f32.mrf.mxu0
  %v82 = vadd.f32 %v35, %v81
  %v83 = vpop.f32.mrf.mxu0
  %84 = vdwg.mxu0
  %vm85 = vcmask 261120
  %v86 = vsel %vm85, %v82, 0.0
  %87 = vadd.xlane.f32.xlu0 %v86
  %v88 = vpop.xlane.xlu0 %87
  %v89 = vrcp.pop 32.0
  %v90 = vmul.f32 32.0, %v89
  %v91 = vsub.f32 1.0, %v90
  %v92 = vmul.f32 %v89, %v91
  %v93 = vadd.f32 %v89, %v92
  %vm94 = vweird.f32 %v89
  %v95 = vsel %vm94, %v89, %v93
  %v96 = vmul.f32 %v88, %v95
  %v97 = vsub.f32 %v82, %v96
  %v98 = vmul.f32 %v97, %v97
  %v99 = vsel %vm85, %v98, 0.0
  %100 = vadd.xlane.f32.xlu0 %v99
  %v101 = vpop.xlane.xlu0 %100
  %v102 = vmul.f32 %v101, %v95
  %v103 = vld [vmem:[%s3] sm:$0xff]
  %v104 = vadd.f32 %v102, 1e-05
  %v105 = vrsqrt.pop %v104
  %v106 = vmul.f32 %v105, %v104
  %v107 = vmul.f32 %v106, %v105
  %v108 = vmul.f32 0.5, %v107
  %v109 = vsub.f32 1.5, %v108
  %v110 = vmul.f32 %v105, %v109
  %vm111 = vweird.f32 %v104
  %vm112 = vweird.f32 %v105
  %vm113 = vmor %vm111, %vm112
  %v114 = vsel %vm113, %v105, %v110
  %v115 = vmul.f32 %v103, %v114
  %v116 = vld [vmem:[%s4] sm:$0xff]
  %v117 = vmul.f32 %v96, %v115
  %v118 = vsub.f32 %v116, %v117
  %120 = vset.pattern.permute.xlu0 0
  %121 = vperm.xlu0 %120, %v115
  %v122 = vpop.permute.xlu0 %121
  %v124 = vmul.f32 %v82, %v122
  %126 = vset.pattern.permute.xlu0 0
  %127 = vperm.xlu0 %126, %v118
  %v128 = vpop.permute.xlu0 %127
  %v130 = vadd.f32 %v124, %v128
  %v131 = vmax.f32 %v130, 0.0
  %132 = vst.msk [vmem:[%s5] sm:$0xff] %vm85, %v131
  // Predicated region
  $region22: #{simple_conv_forward.25} parent=0 // pred_check
    _
  $region23: #{simple_conv_forward.25} parent=0 // pred_check_branch
    %134 = sbr.rel (0) target = $region25
  $region24: #{simple_conv_forward.25} parent=0 // pred_region
    _
  $region25: #{simple_conv_forward.25} parent=0 // pred_fallthru
    _
  // Predicated region
  $region26: #{simple_conv_forward.25} parent=0 // pred_check
    _
  $region27: #{simple_conv_forward.25} parent=0 // pred_check_branch
    %136 = sbr.rel (0) target = $region29
  $region28: #{simple_conv_forward.25} parent=0 // pred_region
    _
  $region29: #{simple_conv_forward.25} parent=0 // pred_fallthru
    _

// kernel: tile.18
$region0: #{tile.18}
  #allocation0 [shape = 's32[1]{0}', space=sflag, size = 0x4, scoped, tag = 'scoped memory for tile.18']
  %s0 = inlined_call_operand.vmem [shape: f32[8], index: 0, kind: input, shape index: {}]
  %s1 = inlined_call_operand.vmem [shape: f32[4,1,1,8], index: 1, kind: output, shape index: {}]
  // Predicated region
  $region2: #{tile.18} parent=0 // pred_check
    _
  $region3: #{tile.18} parent=0 // pred_check_branch
    %3 = sbr.rel (0) target = $region5
  $region4: #{tile.18} parent=0 // pred_region
    _
  $region5: #{tile.18} parent=0 // pred_fallthru
    _
  %v4 = vld [vmem:[%s0] ss:$0 sm:$0xff]
  %5 = vst [vmem:[%s1] sm:$0xf] %v4

// kernel: tile.1
$region0: #{tile.1}
  %s0 = inlined_call_operand.vmem [shape: f32[4,1,1,8], index: 0, kind: input, shape index: {}]
  %s1 = inlined_call_operand.vmem [shape: f32[32,1], index: 1, kind: output, shape index: {}]
  $region1: #{tile.1} parent=0
    #allocation0 [shape = 'u8[4096]{0}', space=vmem, size = 0x1000, scoped, tag = 'scoped mem for input reshape']
    %s3 = ssub.s32 16, 1
    %v4 = vld [vmem:[%s0] sm:%s3]
    %5 = vst [vmem:[#allocation0] sm:%s3] %v4
    %v6 = vld [vmem:[#allocation0] sm:$0xf]
    %vm7 = vcmask 7168
    %8 = vst.msk [vmem:[%s1] ss:$8 sm:$0xf] %vm7, %v6
    %v9 = vld [vmem:[#allocation0] sm:$0xf]
    %10 = vrot.lane.b32.xlu0 %v9, 127
    %v11 = vpop.permute.xlu0 %10
    %vm12 = vcmask 7168
    %s13 = scalar_lea.vmem %s1, 1
    %14 = vst.msk [vmem:[%s13] ss:$8 sm:$0xf] %vm12, %v11
    %v15 = vld [vmem:[#allocation0] sm:$0xf]
    %16 = vrot.lane.b32.xlu0 %v15, 126
    %v17 = vpop.permute.xlu0 %16
    %vm18 = vcmask 7168
    %s19 = scalar_lea.vmem %s1, 2
    %20 = vst.msk [vmem:[%s19] ss:$8 sm:$0xf] %vm18, %v17
    %v21 = vld [vmem:[#allocation0] sm:$0xf]
    %22 = vrot.lane.b32.xlu0 %v21, 125
    %v23 = vpop.permute.xlu0 %22
    %vm24 = vcmask 7168
    %s25 = scalar_lea.vmem %s1, 3
    %26 = vst.msk [vmem:[%s25] ss:$8 sm:$0xf] %vm24, %v23
    %v27 = vld [vmem:[#allocation0] sm:$0xf]
    %28 = vrot.lane.b32.xlu0 %v27, 124
    %v29 = vpop.permute.xlu0 %28
    %vm30 = vcmask 7168
    %s31 = scalar_lea.vmem %s1, 4
    %32 = vst.msk [vmem:[%s31] ss:$8 sm:$0xf] %vm30, %v29
    %v33 = vld [vmem:[#allocation0] sm:$0xf]
    %34 = vrot.lane.b32.xlu0 %v33, 123
    %v35 = vpop.permute.xlu0 %34
    %vm36 = vcmask 7168
    %s37 = scalar_lea.vmem %s1, 5
    %38 = vst.msk [vmem:[%s37] ss:$8 sm:$0xf] %vm36, %v35
    %v39 = vld [vmem:[#allocation0] sm:$0xf]
    %40 = vrot.lane.b32.xlu0 %v39, 122
    %v41 = vpop.permute.xlu0 %40
    %vm42 = vcmask 7168
    %s43 = scalar_lea.vmem %s1, 6
    %44 = vst.msk [vmem:[%s43] ss:$8 sm:$0xf] %vm42, %v41
    %v45 = vld [vmem:[#allocation0] sm:$0xf]
    %46 = vrot.lane.b32.xlu0 %v45, 121
    %v47 = vpop.permute.xlu0 %46
    %vm48 = vcmask 7168
    %s49 = scalar_lea.vmem %s1, 7
    %50 = vst.msk [vmem:[%s49] ss:$8 sm:$0xf] %vm48, %v47

// kernel: simple_conv_forward.26
$region0: #{simple_conv_forward.26}
  #allocation0 [shape = 'u32[]', space=smem, size = 0x4, offset = 0x4, fixed_abs, tag = 'smem constant byte address 0x4 - core index']
  #allocation1 [shape = 'u32[72,128]{1,0:T(1,128)}', space=vmem, size = 0x9000, scoped, tag = 'internal scratch']
  %s0 = inlined_call_operand.vmem [shape: bf16[32,32], index: 0, kind: input, shape index: {}]
  %s1 = inlined_call_operand.vmem [shape: bf16[32,32], index: 1, kind: input, shape index: {}]
  %s2 = inlined_call_operand.vmem [shape: f32[32,1], index: 2, kind: input, shape index: {}]
  %s3 = inlined_call_operand.vmem [shape: f32[32,32], index: 3, kind: output, shape index: {}]
  %s4 = sld [smem:[#allocation0]]
  $region22: #{simple_conv_forward.26} parent=0
    _
  %s6 = ssub.s32 1, %s4
  %s7 = scalar_select 0, %s6, %s4
  // Predicated region
  $region2: #{simple_conv_forward.26} parent=0 // pred_check
    _
  $region3: #{simple_conv_forward.26} parent=0 // pred_check_branch
    %9 = sbr.rel (0) target = $region5
  $region4: #{simple_conv_forward.26} parent=0 // pred_region
    _
  $region5: #{simple_conv_forward.26} parent=0 // pred_fallthru
    _
  // Predicated region
  $region6: #{simple_conv_forward.26} parent=0 // pred_check
    _
  $region7: #{simple_conv_forward.26} parent=0 // pred_check_branch
    %11 = sbr.rel (0) target = $region9
  $region8: #{simple_conv_forward.26} parent=0 // pred_region
    _
  $region9: #{simple_conv_forward.26} parent=0 // pred_fallthru
    _
  // Predicated region
  $region10: #{simple_conv_forward.26} parent=0 // pred_check
    _
  $region11: #{simple_conv_forward.26} parent=0 // pred_check_branch
    %13 = sbr.rel (0) target = $region13
  $region12: #{simple_conv_forward.26} parent=0 // pred_region
    _
  $region13: #{simple_conv_forward.26} parent=0 // pred_fallthru
    _
  %v15 = vld [vmem:[%s1] sm:$0xf]
  %v16 = vld [vmem:[%s1 + $0x4] sm:$0xf]
  %v17 = vld [vmem:[%s1 + $0x8] sm:$0xf]
  %v18 = vld [vmem:[%s1 + $0xc] sm:$0xf]
  %v19 = vld [vmem:[%s0] sm:$0xf]
  %v20 = vld [vmem:[%s0 + $0x4] sm:$0xf]
  %v21 = vld [vmem:[%s0 + $0x8] sm:$0xf]
  %v22 = vld [vmem:[%s0 + $0xc] sm:$0xf]
  %v23 = vld [vmem:[%s2] sm:$0xff]
  %v24 = vld [vmem:[%s2 + $0x8] sm:$0xff]
  %v25 = vld [vmem:[%s2 + $0x10] sm:$0xff]
  %v26 = vld [vmem:[%s2 + $0x18] sm:$0xff]
  %28 = vset.pattern.permute.xlu0 0
  %29 = vperm.xlu0 %28, %v23
  %v30 = vpop.permute.xlu0 %29
  %33 = vset.pattern.permute.xlu0 0
  %34 = vperm.xlu0 %33, %v24
  %v35 = vpop.permute.xlu0 %34
  %38 = vset.pattern.permute.xlu0 0
  %39 = vperm.xlu0 %38, %v25
  %v40 = vpop.permute.xlu0 %39
  %43 = vset.pattern.permute.xlu0 0
  %44 = vperm.xlu0 %43, %v26
  %v45 = vpop.permute.xlu0 %44
  %v51 = vunpack.c.l.b16 %v15
  %v52 = vunpack.c.l.b16 %v16
  %v53 = vunpack.c.l.b16 %v17
  %v54 = vunpack.c.l.b16 %v18
  %v55 = vpack.c.b16 %v52, %v51
  %v56 = vpack.c.b16 %v54, %v53
  %v61 = vunpack.c.l.b16 %v19
  %v62 = vunpack.c.l.b16 %v20
  %v63 = vunpack.c.l.b16 %v21
  %v64 = vunpack.c.l.b16 %v22
  %v65 = vpack.c.b16 %v62, %v61
  %v66 = vpack.c.b16 %v64, %v63
  %vm69 = vcmask 261120
  %v71 = vsel %vm69, %v55, 0
  %v74 = vsel %vm69, %v56, 0
  %76 = vmatpush.bf16.msra.mxu0 0
  %77 = vmatpush.bf16.msra.mxu0 0
  %78 = vmatpush.bf16.msra.mxu0 0
  %79 = vmatpush.bf16.msra.mxu0 0
  %80 = vmatpush.bf16.msra.mxu0 0
  %81 = vmatpush.bf16.msra.mxu0 0
  %82 = vmatpush.bf16.msra.mxu0 %v66
  %83 = vmatpush.bf16.msra.mxu0 %v65
  %84 = vmatmul.bf16.gmra.mxu0 %v71
  %v85 = vpop.f32.mrf.mxu0
  %v86 = vadd.f32 %v30, %v85
  %v87 = vpop.f32.mrf.mxu0
  %v88 = vadd.f32 %v35, %v87
  %89 = vmatmul.bf16.gmra.mxu0 %v74
  %v90 = vpop.f32.mrf.mxu0
  %v91 = vadd.f32 %v40, %v90
  %v92 = vpop.f32.mrf.mxu0
  %v93 = vadd.f32 %v45, %v92
  %94 = vdwg.mxu0
  %95 = vst.msk [vmem:[%s3] sm:$0xff] %vm69, %v86
  %96 = vst.msk [vmem:[%s3 + $0x8] sm:$0xff] %vm69, %v88
  %97 = vst.msk [vmem:[%s3 + $0x10] sm:$0xff] %vm69, %v91
  %98 = vst.msk [vmem:[%s3 + $0x18] sm:$0xff] %vm69, %v93
  // Predicated region
  $region14: #{simple_conv_forward.26} parent=0 // pred_check
    _
  $region15: #{simple_conv_forward.26} parent=0 // pred_check_branch
    %100 = sbr.rel (0) target = $region17
  $region16: #{simple_conv_forward.26} parent=0 // pred_region
    _
  $region17: #{simple_conv_forward.26} parent=0 // pred_fallthru
    _
  // Predicated region
  $region18: #{simple_conv_forward.26} parent=0 // pred_check
    _
  $region19: #{simple_conv_forward.26} parent=0 // pred_check_branch
    %102 = sbr.rel (0) target = $region21
  $region20: #{simple_conv_forward.26} parent=0 // pred_region
    _
  $region21: #{simple_conv_forward.26} parent=0 // pred_fallthru
    _

// kernel: simple_conv_forward.27
$region0: #{simple_conv_forward.27}
  #allocation0 [shape = 'u32[]', space=smem, size = 0x4, offset = 0x4, fixed_abs, tag = 'smem constant byte address 0x4 - core index']
  #allocation1 [shape = 'u32[72,128]{1,0:T(1,128)}', space=vmem, size = 0x9000, scoped, tag = 'internal scratch']
  %s0 = inlined_call_operand.vmem [shape: bf16[144,128], index: 0, kind: input, shape index: {}]
  %s1 = inlined_call_operand.vmem [shape: bf16[3,144], index: 1, kind: input, shape index: {}]
  %s2 = inlined_call_operand.vmem [shape: f32[3,1], index: 2, kind: input, shape index: {}]
  %s3 = inlined_call_operand.vmem [shape: f32[3,1], index: 3, kind: input, shape index: {}]
  %s4 = inlined_call_operand.vmem [shape: f32[3,1], index: 4, kind: input, shape index: {}]
  %s5 = inlined_call_operand.vmem [shape: f32[3,128], index: 5, kind: output, shape index: {}]
  %s6 = sld [smem:[#allocation0]]
  $region30: #{simple_conv_forward.27} parent=0
    _
  %s8 = ssub.s32 1, %s6
  %s9 = scalar_select 0, %s8, %s6
  // Predicated region
  $region2: #{simple_conv_forward.27} parent=0 // pred_check
    _
  $region3: #{simple_conv_forward.27} parent=0 // pred_check_branch
    %11 = sbr.rel (0) target = $region5
  $region4: #{simple_conv_forward.27} parent=0 // pred_region
    _
  $region5: #{simple_conv_forward.27} parent=0 // pred_fallthru
    _
  // Predicated region
  $region6: #{simple_conv_forward.27} parent=0 // pred_check
    _
  $region7: #{simple_conv_forward.27} parent=0 // pred_check_branch
    %13 = sbr.rel (0) target = $region9
  $region8: #{simple_conv_forward.27} parent=0 // pred_region
    _
  $region9: #{simple_conv_forward.27} parent=0 // pred_fallthru
    _
  // Predicated region
  $region10: #{simple_conv_forward.27} parent=0 // pred_check
    _
  $region11: #{simple_conv_forward.27} parent=0 // pred_check_branch
    %15 = sbr.rel (0) target = $region13
  $region12: #{simple_conv_forward.27} parent=0 // pred_region
    _
  $region13: #{simple_conv_forward.27} parent=0 // pred_fallthru
    _
  // Predicated region
  $region14: #{simple_conv_forward.27} parent=0 // pred_check
    _
  $region15: #{simple_conv_forward.27} parent=0 // pred_check_branch
    %17 = sbr.rel (0) target = $region17
  $region16: #{simple_conv_forward.27} parent=0 // pred_region
    _
  $region17: #{simple_conv_forward.27} parent=0 // pred_fallthru
    _
  // Predicated region
  $region18: #{simple_conv_forward.27} parent=0 // pred_check
    _
  $region19: #{simple_conv_forward.27} parent=0 // pred_check_branch
    %19 = sbr.rel (0) target = $region21
  $region20: #{simple_conv_forward.27} parent=0 // pred_region
    _
  $region21: #{simple_conv_forward.27} parent=0 // pred_fallthru
    _
  %v21 = vld [vmem:[%s1] sm:$0xf]
  %v22 = vld [vmem:[%s0] sm:$0xf]
  %v23 = vld [vmem:[%s0 + $0x4] sm:$0xf]
  %v24 = vld [vmem:[%s0 + $0x8] sm:$0xf]
  %v25 = vld [vmem:[%s0 + $0xc] sm:$0xf]
  %v26 = vld [vmem:[%s0 + $0x10] sm:$0xf]
  %v27 = vld [vmem:[%s0 + $0x14] sm:$0xf]
  %v28 = vld [vmem:[%s0 + $0x18] sm:$0xf]
  %v29 = vld [vmem:[%s0 + $0x1c] sm:$0xf]
  %v30 = vld [vmem:[%s0 + $0x20] sm:$0xf]
  %v31 = vld [vmem:[%s0 + $0x24] sm:$0xf]
  %v32 = vld [vmem:[%s0 + $0x28] sm:$0xf]
  %v33 = vld [vmem:[%s0 + $0x2c] sm:$0xf]
  %v34 = vld [vmem:[%s0 + $0x30] sm:$0xf]
  %v35 = vld [vmem:[%s0 + $0x34] sm:$0xf]
  %v36 = vld [vmem:[%s0 + $0x38] sm:$0xf]
  %v37 = vld [vmem:[%s0 + $0x3c] sm:$0xf]
  %v38 = vld [vmem:[%s0 + $0x40] sm:$0xf]
  %v39 = vld [vmem:[%s0 + $0x44] sm:$0xf]
  %v40 = vld [vmem:[%s2] sm:$0x7]
  %42 = vset.pattern.permute.xlu0 0
  %43 = vperm.xlu0 %42, %v40
  %v44 = vpop.permute.xlu0 %43
  %47 = vst [vmem:[#allocation1] ss:$4 sm:$0xff] %v21
  %v48 = vld.sshfl [vmem:[#allocation1] sm:$0xff pattern:$0x73625140]
  %v49 = vld.sshfl [vmem:[#allocation1 + $0x8] sm:$0xff pattern:$0x73625140]
  %v69 = vunpack.c.l.b16 %v22
  %v70 = vunpack.c.l.b16 %v23
  %v71 = vunpack.c.l.b16 %v24
  %v72 = vunpack.c.l.b16 %v25
  %v73 = vunpack.c.l.b16 %v26
  %v74 = vunpack.c.l.b16 %v27
  %v75 = vunpack.c.l.b16 %v28
  %v76 = vunpack.c.l.b16 %v29
  %v77 = vunpack.c.l.b16 %v30
  %v78 = vunpack.c.l.b16 %v31
  %v79 = vunpack.c.l.b16 %v32
  %v80 = vunpack.c.l.b16 %v33
  %v81 = vunpack.c.l.b16 %v34
  %v82 = vunpack.c.l.b16 %v35
  %v83 = vunpack.c.l.b16 %v36
  %v84 = vunpack.c.l.b16 %v37
  %v85 = vunpack.c.l.b16 %v38
  %v86 = vunpack.c.l.b16 %v39
  %v87 = vpack.c.b16 %v70, %v69
  %v88 = vpack.c.b16 %v72, %v71
  %v89 = vpack.c.b16 %v74, %v73
  %v90 = vpack.c.b16 %v76, %v75
  %v91 = vpack.c.b16 %v78, %v77
  %v92 = vpack.c.b16 %v80, %v79
  %v93 = vpack.c.b16 %v82, %v81
  %v94 = vpack.c.b16 %v84, %v83
  %v95 = vpack.c.b16 %v86, %v85
  %vm105 = vcmask 130048
  %v106 = vsel %vm105, %v49, 0
  %108 = vmatpush.bf16.msra.mxu0 %v94
  %109 = vmatpush.bf16.msra.mxu0 %v93
  %110 = vmatpush.bf16.msra.mxu0 %v92
  %111 = vmatpush.bf16.msra.mxu0 %v91
  %112 = vmatpush.bf16.msra.mxu0 %v90
  %113 = vmatpush.bf16.msra.mxu0 %v89
  %114 = vmatpush.bf16.msra.mxu0 %v88
  %115 = vmatpush.bf16.msra.mxu0 %v87
  %116 = vmatmul.bf16.gmra.mxu0 %v48
  %v117 = vpop.f32.mrf.mxu0
  %v118 = vadd.f32 %v44, %v117
  %v119 = vpop.f32.mrf.mxu0
  %120 = vdwg.mxu0
  %121 = vmatpush.bf16.msra.mxu0 0
  %122 = vmatpush.bf16.msra.mxu0 0
  %123 = vmatpush.bf16.msra.mxu0 0
  %124 = vmatpush.bf16.msra.mxu0 0
  %125 = vmatpush.bf16.msra.mxu0 0
  %126 = vmatpush.bf16.msra.mxu0 0
  %127 = vmatpush.bf16.msra.mxu0 0
  %128 = vmatpush.bf16.msra.mxu0 %v95
  %129 = vmatmul.bf16.gmra.mxu0 %v106
  %v130 = vpop.f32.mrf.mxu0
  %v131 = vadd.f32 %v118, %v130
  %v132 = vpop.f32.mrf.mxu0
  %133 = vdwg.mxu0
  %vm134 = vcmask 1042432
  %v135 = vsel %vm134, %v131, 0.0
  %136 = vadd.xlane.f32.xlu0 %v135
  %v137 = vpop.xlane.xlu0 %136
  %v138 = vrcp.pop 128.0
  %v139 = vmul.f32 128.0, %v138
  %v140 = vsub.f32 1.0, %v139
  %v141 = vmul.f32 %v138, %v140
  %v142 = vadd.f32 %v138, %v141
  %vm143 = vweird.f32 %v138
  %v144 = vsel %vm143, %v138, %v142
  %v145 = vmul.f32 %v137, %v144
  %v146 = vsub.f32 %v131, %v145
  %v147 = vmul.f32 %v146, %v146
  %v148 = vsel %vm134, %v147, 0.0
  %149 = vadd.xlane.f32.xlu0 %v148
  %v150 = vpop.xlane.xlu0 %149
  %v151 = vmul.f32 %v150, %v144
  %v152 = vld [vmem:[%s3] sm:$0x7]
  %v153 = vadd.f32 %v151, 1e-05
  %v154 = vrsqrt.pop %v153
  %v155 = vmul.f32 %v154, %v153
  %v156 = vmul.f32 %v155, %v154
  %v157 = vmul.f32 0.5, %v156
  %v158 = vsub.f32 1.5, %v157
  %v159 = vmul.f32 %v154, %v158
  %vm160 = vweird.f32 %v153
  %vm161 = vweird.f32 %v154
  %vm162 = vmor %vm160, %vm161
  %v163 = vsel %vm162, %v154, %v159
  %v164 = vmul.f32 %v152, %v163
  %v165 = vld [vmem:[%s4] sm:$0x7]
  %v166 = vmul.f32 %v145, %v164
  %v167 = vsub.f32 %v165, %v166
  %169 = vset.pattern.permute.xlu0 0
  %170 = vperm.xlu0 %169, %v164
  %v171 = vpop.permute.xlu0 %170
  %v173 = vmul.f32 %v131, %v171
  %175 = vset.pattern.permute.xlu0 0
  %176 = vperm.xlu0 %175, %v167
  %v177 = vpop.permute.xlu0 %176
  %v179 = vadd.f32 %v173, %v177
  %v180 = vmax.f32 %v179, 0.0
  %181 = vst [vmem:[%s5] sm:$0x7] %v180
  // Predicated region
  $region22: #{simple_conv_forward.27} parent=0 // pred_check
    _
  $region23: #{simple_conv_forward.27} parent=0 // pred_check_branch
    %183 = sbr.rel (0) target = $region25
  $region24: #{simple_conv_forward.27} parent=0 // pred_region
    _
  $region25: #{simple_conv_forward.27} parent=0 // pred_fallthru
    _
  // Predicated region
  $region26: #{simple_conv_forward.27} parent=0 // pred_check
    _
  $region27: #{simple_conv_forward.27} parent=0 // pred_check_branch
    %185 = sbr.rel (0) target = $region29
  $region28: #{simple_conv_forward.27} parent=0 // pred_region
    _
  $region29: #{simple_conv_forward.27} parent=0 // pred_fallthru
    _

// kernel: simple_conv_forward.28
$region0: #{simple_conv_forward.28}
  #allocation0 [shape = 'u32[]', space=smem, size = 0x4, offset = 0x4, fixed_abs, tag = 'smem constant byte address 0x4 - core index']
  #allocation1 [shape = 'u32[72,128]{1,0:T(1,128)}', space=vmem, size = 0x9000, scoped, tag = 'internal scratch']
  %s0 = inlined_call_operand.vmem [shape: bf16[27,128], index: 0, kind: input, shape index: {}]
  %s1 = inlined_call_operand.vmem [shape: bf16[3,27], index: 1, kind: input, shape index: {}]
  %s2 = inlined_call_operand.vmem [shape: f32[3,1], index: 2, kind: input, shape index: {}]
  %s3 = inlined_call_operand.vmem [shape: f32[3,1], index: 3, kind: input, shape index: {}]
  %s4 = inlined_call_operand.vmem [shape: f32[3,1], index: 4, kind: input, shape index: {}]
  %s5 = inlined_call_operand.vmem [shape: f32[3,128], index: 5, kind: output, shape index: {}]
  %s6 = sld [smem:[#allocation0]]
  $region30: #{simple_conv_forward.28} parent=0
    _
  %s8 = ssub.s32 1, %s6
  %s9 = scalar_select 0, %s8, %s6
  // Predicated region
  $region2: #{simple_conv_forward.28} parent=0 // pred_check
    _
  $region3: #{simple_conv_forward.28} parent=0 // pred_check_branch
    %11 = sbr.rel (0) target = $region5
  $region4: #{simple_conv_forward.28} parent=0 // pred_region
    _
  $region5: #{simple_conv_forward.28} parent=0 // pred_fallthru
    _
  // Predicated region
  $region6: #{simple_conv_forward.28} parent=0 // pred_check
    _
  $region7: #{simple_conv_forward.28} parent=0 // pred_check_branch
    %13 = sbr.rel (0) target = $region9
  $region8: #{simple_conv_forward.28} parent=0 // pred_region
    _
  $region9: #{simple_conv_forward.28} parent=0 // pred_fallthru
    _
  // Predicated region
  $region10: #{simple_conv_forward.28} parent=0 // pred_check
    _
  $region11: #{simple_conv_forward.28} parent=0 // pred_check_branch
    %15 = sbr.rel (0) target = $region13
  $region12: #{simple_conv_forward.28} parent=0 // pred_region
    _
  $region13: #{simple_conv_forward.28} parent=0 // pred_fallthru
    _
  // Predicated region
  $region14: #{simple_conv_forward.28} parent=0 // pred_check
    _
  $region15: #{simple_conv_forward.28} parent=0 // pred_check_branch
    %17 = sbr.rel (0) target = $region17
  $region16: #{simple_conv_forward.28} parent=0 // pred_region
    _
  $region17: #{simple_conv_forward.28} parent=0 // pred_fallthru
    _
  // Predicated region
  $region18: #{simple_conv_forward.28} parent=0 // pred_check
    _
  $region19: #{simple_conv_forward.28} parent=0 // pred_check_branch
    %19 = sbr.rel (0) target = $region21
  $region20: #{simple_conv_forward.28} parent=0 // pred_region
    _
  $region21: #{simple_conv_forward.28} parent=0 // pred_fallthru
    _
  %v21 = vld [vmem:[%s1] sm:$0x3]
  %v22 = vld [vmem:[%s0] sm:$0xf]
  %v23 = vld [vmem:[%s0 + $0x4] sm:$0xf]
  %v24 = vld [vmem:[%s0 + $0x8] sm:$0xf]
  %v25 = vld [vmem:[%s0 + $0xc] sm:$0x3]
  %v26 = vld [vmem:[%s2] sm:$0x7]
  %28 = vset.pattern.permute.xlu0 0
  %29 = vperm.xlu0 %28, %v26
  %v30 = vpop.permute.xlu0 %29
  %v36 = vunpack.c.l.b16 %v22
  %v37 = vunpack.c.l.b16 %v23
  %v38 = vunpack.c.l.b16 %v24
  %v39 = vunpack.c.l.b16 %v25
  %v40 = vpack.c.b16 %v37, %v36
  %v41 = vpack.c.b16 %v39, %v38
  %vm43 = vcmask 220160
  %v45 = vsel %vm43, %v21, 0
  %vm47 = vcmask 1044480
  %vm48 = vcmask 1045504
  %v49 = vsel %vm47, 4294967295, 65535
  %v50 = vsel %vm48, %v49, 0
  %v52 = vand.u32 %v41, %v50
  %54 = vmatpush.bf16.msra.mxu0 0
  %55 = vmatpush.bf16.msra.mxu0 0
  %56 = vmatpush.bf16.msra.mxu0 0
  %57 = vmatpush.bf16.msra.mxu0 0
  %58 = vmatpush.bf16.msra.mxu0 0
  %59 = vmatpush.bf16.msra.mxu0 0
  %60 = vmatpush.bf16.msra.mxu0 %v52
  %61 = vmatpush.bf16.msra.mxu0 %v40
  %62 = vmatmul.bf16.gmra.mxu0 %v45
  %v63 = vpop.f32.mrf.mxu0
  %v64 = vadd.f32 %v30, %v63
  %v65 = vpop.f32.mrf.mxu0
  %66 = vdwg.mxu0
  %vm67 = vcmask 1042432
  %v68 = vsel %vm67, %v64, 0.0
  %69 = vadd.xlane.f32.xlu0 %v68
  %v70 = vpop.xlane.xlu0 %69
  %v71 = vrcp.pop 128.0
  %v72 = vmul.f32 128.0, %v71
  %v73 = vsub.f32 1.0, %v72
  %v74 = vmul.f32 %v71, %v73
  %v75 = vadd.f32 %v71, %v74
  %vm76 = vweird.f32 %v71
  %v77 = vsel %vm76, %v71, %v75
  %v78 = vmul.f32 %v70, %v77
  %v79 = vsub.f32 %v64, %v78
  %v80 = vmul.f32 %v79, %v79
  %v81 = vsel %vm67, %v80, 0.0
  %82 = vadd.xlane.f32.xlu0 %v81
  %v83 = vpop.xlane.xlu0 %82
  %v84 = vmul.f32 %v83, %v77
  %v85 = vld [vmem:[%s3] sm:$0x7]
  %v86 = vadd.f32 %v84, 1e-05
  %v87 = vrsqrt.pop %v86
  %v88 = vmul.f32 %v87, %v86
  %v89 = vmul.f32 %v88, %v87
  %v90 = vmul.f32 0.5, %v89
  %v91 = vsub.f32 1.5, %v90
  %v92 = vmul.f32 %v87, %v91
  %vm93 = vweird.f32 %v86
  %vm94 = vweird.f32 %v87
  %vm95 = vmor %vm93, %vm94
  %v96 = vsel %vm95, %v87, %v92
  %v97 = vmul.f32 %v85, %v96
  %v98 = vld [vmem:[%s4] sm:$0x7]
  %v99 = vmul.f32 %v78, %v97
  %v100 = vsub.f32 %v98, %v99
  %102 = vset.pattern.permute.xlu0 0
  %103 = vperm.xlu0 %102, %v97
  %v104 = vpop.permute.xlu0 %103
  %v106 = vmul.f32 %v64, %v104
  %108 = vset.pattern.permute.xlu0 0
  %109 = vperm.xlu0 %108, %v100
  %v110 = vpop.permute.xlu0 %109
  %v112 = vadd.f32 %v106, %v110
  %v113 = vmax.f32 %v112, 0.0
  %114 = vst [vmem:[%s5] sm:$0x7] %v113
  // Predicated region
  $region22: #{simple_conv_forward.28} parent=0 // pred_check
    _
  $region23: #{simple_conv_forward.28} parent=0 // pred_check_branch
    %116 = sbr.rel (0) target = $region25
  $region24: #{simple_conv_forward.28} parent=0 // pred_region
    _
  $region25: #{simple_conv_forward.28} parent=0 // pred_fallthru
    _
  // Predicated region
  $region26: #{simple_conv_forward.28} parent=0 // pred_check
    _
  $region27: #{simple_conv_forward.28} parent=0 // pred_check_branch
    %118 = sbr.rel (0) target = $region29
  $region28: #{simple_conv_forward.28} parent=0 // pred_region
    _
  $region29: #{simple_conv_forward.28} parent=0 // pred_fallthru
    _

// kernel: tile.22
$region0: #{tile.22}
  #allocation0 [shape = 's32[1]{0}', space=sflag, size = 0x4, scoped, tag = 'scoped memory for tile.22']
  %s0 = inlined_call_operand.vmem [shape: f32[3], index: 0, kind: input, shape index: {}]
  %s1 = inlined_call_operand.vmem [shape: f32[4,1,1,3], index: 1, kind: output, shape index: {}]
  // Predicated region
  $region2: #{tile.22} parent=0 // pred_check
    _
  $region3: #{tile.22} parent=0 // pred_check_branch
    %3 = sbr.rel (0) target = $region5
  $region4: #{tile.22} parent=0 // pred_region
    _
  $region5: #{tile.22} parent=0 // pred_fallthru
    _
  %v4 = vld [vmem:[%s0] ss:$0 sm:$0xff]
  %5 = vst [vmem:[%s1] sm:$0xf] %v4

// kernel: tile.2
$region0: #{tile.2}
  %s0 = inlined_call_operand.vmem [shape: f32[4,1,1,3], index: 0, kind: input, shape index: {}]
  %s1 = inlined_call_operand.vmem [shape: f32[12,1], index: 1, kind: output, shape index: {}]
  $region1: #{tile.2} parent=0
    #allocation0 [shape = 'u8[4096]{0}', space=vmem, size = 0x1000, scoped, tag = 'scoped mem for input reshape']
    %s3 = ssub.s32 16, 1
    %v4 = vld [vmem:[%s0] sm:%s3]
    %5 = vst [vmem:[#allocation0] sm:%s3] %v4
    %v6 = vld [vmem:[#allocation0] sm:$0xf]
    %vm7 = vcmask 7168
    %8 = vst.msk [vmem:[%s1] ss:$3 sm:$0xf] %vm7, %v6
    %v9 = vld [vmem:[#allocation0] sm:$0xf]
    %10 = vrot.lane.b32.xlu0 %v9, 127
    %v11 = vpop.permute.xlu0 %10
    %vm12 = vcmask 7168
    %s13 = scalar_lea.vmem %s1, 1
    %14 = vst.msk [vmem:[%s13] ss:$3 sm:$0xf] %vm12, %v11
    %v15 = vld [vmem:[#allocation0] sm:$0xf]
    %16 = vrot.lane.b32.xlu0 %v15, 126
    %v17 = vpop.permute.xlu0 %16
    %vm18 = vcmask 7168
    %s19 = scalar_lea.vmem %s1, 2
    %20 = vst.msk [vmem:[%s19] ss:$3 sm:$0xf] %vm18, %v17

// kernel: simple_conv_forward.29
$region0: #{simple_conv_forward.29}
  #allocation0 [shape = 'u32[]', space=smem, size = 0x4, offset = 0x4, fixed_abs, tag = 'smem constant byte address 0x4 - core index']
  #allocation1 [shape = 'u32[72,128]{1,0:T(1,128)}', space=vmem, size = 0x9000, scoped, tag = 'internal scratch']
  %s0 = inlined_call_operand.vmem [shape: bf16[12,128], index: 0, kind: input, shape index: {}]
  %s1 = inlined_call_operand.vmem [shape: bf16[12,12], index: 1, kind: input, shape index: {}]
  %s2 = inlined_call_operand.vmem [shape: f32[12,1], index: 2, kind: input, shape index: {}]
  %s3 = inlined_call_operand.vmem [shape: f32[12,128], index: 3, kind: output, shape index: {}]
  %s4 = sld [smem:[#allocation0]]
  $region22: #{simple_conv_forward.29} parent=0
    _
  %s6 = ssub.s32 1, %s4
  %s7 = scalar_select 0, %s6, %s4
  // Predicated region
  $region2: #{simple_conv_forward.29} parent=0 // pred_check
    _
  $region3: #{simple_conv_forward.29} parent=0 // pred_check_branch
    %9 = sbr.rel (0) target = $region5
  $region4: #{simple_conv_forward.29} parent=0 // pred_region
    _
  $region5: #{simple_conv_forward.29} parent=0 // pred_fallthru
    _
  // Predicated region
  $region6: #{simple_conv_forward.29} parent=0 // pred_check
    _
  $region7: #{simple_conv_forward.29} parent=0 // pred_check_branch
    %11 = sbr.rel (0) target = $region9
  $region8: #{simple_conv_forward.29} parent=0 // pred_region
    _
  $region9: #{simple_conv_forward.29} parent=0 // pred_fallthru
    _
  // Predicated region
  $region10: #{simple_conv_forward.29} parent=0 // pred_check
    _
  $region11: #{simple_conv_forward.29} parent=0 // pred_check_branch
    %13 = sbr.rel (0) target = $region13
  $region12: #{simple_conv_forward.29} parent=0 // pred_region
    _
  $region13: #{simple_conv_forward.29} parent=0 // pred_fallthru
    _
  %v15 = vld [vmem:[%s1] sm:$0xf]
  %v16 = vld [vmem:[%s1 + $0x4] sm:$0x3]
  %v17 = vld [vmem:[%s0] sm:$0xf]
  %v18 = vld [vmem:[%s0 + $0x4] sm:$0x3]
  %v19 = vld [vmem:[%s2] sm:$0xff]
  %v20 = vld [vmem:[%s2 + $0x8] sm:$0xf]
  %22 = vset.pattern.permute.xlu0 0
  %23 = vperm.xlu0 %22, %v19
  %v24 = vpop.permute.xlu0 %23
  %27 = vset.pattern.permute.xlu0 0
  %28 = vperm.xlu0 %27, %v20
  %v29 = vpop.permute.xlu0 %28
  %v33 = vunpack.c.l.b16 %v15
  %v34 = vunpack.c.l.b16 %v16
  %v35 = vpack.c.b16 %v34, %v33
  %v38 = vunpack.c.l.b16 %v17
  %v39 = vunpack.c.l.b16 %v18
  %v40 = vpack.c.b16 %v39, %v38
  %vm41 = vcmask 97280
  %v43 = vsel %vm41, %v35, 0
  %vm45 = vcmask 1045504
  %v47 = vsel %vm45, %v40, 0
  %49 = vmatpush.bf16.msra.mxu0 0
  %50 = vmatpush.bf16.msra.mxu0 0
  %51 = vmatpush.bf16.msra.mxu0 0
  %52 = vmatpush.bf16.msra.mxu0 0
  %53 = vmatpush.bf16.msra.mxu0 0
  %54 = vmatpush.bf16.msra.mxu0 0
  %55 = vmatpush.bf16.msra.mxu0 0
  %56 = vmatpush.bf16.msra.mxu0 %v47
  %57 = vmatmul.bf16.gmra.mxu0 %v43
  %v58 = vpop.f32.mrf.mxu0
  %v59 = vadd.f32 %v24, %v58
  %v60 = vpop.f32.mrf.mxu0
  %v61 = vadd.f32 %v29, %v60
  %62 = vdwg.mxu0
  %63 = vst [vmem:[%s3] sm:$0xff] %v59
  %64 = vst [vmem:[%s3 + $0x8] sm:$0xf] %v61
  // Predicated region
  $region14: #{simple_conv_forward.29} parent=0 // pred_check
    _
  $region15: #{simple_conv_forward.29} parent=0 // pred_check_branch
    %66 = sbr.rel (0) target = $region17
  $region16: #{simple_conv_forward.29} parent=0 // pred_region
    _
  $region17: #{simple_conv_forward.29} parent=0 // pred_fallthru
    _
  // Predicated region
  $region18: #{simple_conv_forward.29} parent=0 // pred_check
    _
  $region19: #{simple_conv_forward.29} parent=0 // pred_check_branch
    %68 = sbr.rel (0) target = $region21
  $region20: #{simple_conv_forward.29} parent=0 // pred_region
    _
  $region21: #{simple_conv_forward.29} parent=0 // pred_fallthru
    _

</llo_original>
